<compile_context>
chip_gen: v7x
topology: tpu7x:2x2x1
jax: 0.10.0
libtpu: 0.0.40
codegen_flags: <defaults>
</compile_context>

<pallas_src>
import jax
import jax.numpy as jnp
from jax import lax
from jax.experimental import pallas as pl
from jax.experimental.pallas import tpu as pltpu


OCP = 128          # lane-dense padded width for all conv/fc outputs (128 also fits v5e MXU)
KSZ = 5            # conv kernel size
C_IN, C1, C2 = 3, 6, 16
FC1, FC2, FC3 = 120, 84, 10


def _round_up(x, m):
    return (x + m - 1) // m * m


# ---------------------------------------------------------------------------
# Pallas kernels
# ---------------------------------------------------------------------------

def _conv_relu_pool_kernel(p_ref, w_ref, b_ref, o_ref):
    """Fused conv(matmul) + bias + ReLU + 2x2 maxpool.

    p_ref: (4, tm, Kp)  im2col rows for the 4 pool-window positions
    w_ref: (Kp, OCP)    flattened conv weights (zero padded)
    b_ref: (1, OCP)     bias (zero padded)
    o_ref: (tm, OCP)    pooled activation
    """
    w = w_ref[...]
    b = b_ref[...]

    def branch(q):
        y = jnp.dot(p_ref[q], w, preferred_element_type=jnp.float32) + b
        return jnp.maximum(y, 0.0)

    o = jnp.maximum(jnp.maximum(branch(0), branch(1)),
                    jnp.maximum(branch(2), branch(3)))
    o_ref[...] = o.astype(o_ref.dtype)


def _fc_tail_kernel(x_ref, w1_ref, b1_ref, w2_ref, b2_ref, w3_ref, b3_ref, o_ref):
    """Fused fc1 -> relu -> fc2 -> relu -> fc3; all weights VMEM resident."""
    h = jnp.dot(x_ref[...], w1_ref[...], preferred_element_type=jnp.float32) + b1_ref[...]
    h = jnp.maximum(h, 0.0)
    h = jnp.dot(h, w2_ref[...], preferred_element_type=jnp.float32) + b2_ref[...]
    h = jnp.maximum(h, 0.0)
    o = jnp.dot(h, w3_ref[...], preferred_element_type=jnp.float32) + b3_ref[...]
    o_ref[...] = o.astype(o_ref.dtype)


# ---------------------------------------------------------------------------
# Wrappers
# ---------------------------------------------------------------------------

def conv_relu_pool(x_nhwc, w_mat, b_row, k):
    """x_nhwc: (B, H, W, C) f32 -> pooled activation (B, PH, PW, OCP) f32."""
    B, H, W, C = x_nhwc.shape
    OH, OW = H - k + 1, W - k + 1
    PH, PW = OH // 2, OW // 2
    Kd = C * k * k
    Kp, OCp = w_mat.shape

    # im2col, feature order (c, kh, kw) c-major to match torch weight flatten.
    cols = jnp.stack(
        [x_nhwc[:, i:i + OH, j:j + OW, :] for i in range(k) for j in range(k)],
        axis=3)                                            # (B, OH, OW, k*k, C)
    cols = cols.transpose(0, 1, 2, 4, 3).reshape(B, OH, OW, Kd)
    cols = jnp.pad(cols, ((0, 0), (0, 0), (0, 0), (0, Kp - Kd)))

    # 4 pool-window planes: q = 2*di + dj picks output pixel (2*ph+di, 2*pw+dj).
    planes = jnp.stack(
        [cols[:, di::2, dj::2, :] for di in (0, 1) for dj in (0, 1)], axis=0)
    M = B * PH * PW
    planes = planes.reshape(4, M, Kp)

    tm = min(512, _round_up(M, 8))
    Mp = _round_up(M, tm)
    planes = jnp.pad(planes, ((0, 0), (0, Mp - M), (0, 0)))

    out = pl.pallas_call(
        _conv_relu_pool_kernel,
        out_shape=jax.ShapeDtypeStruct((Mp, OCp), jnp.float32),
        grid=(Mp // tm,),
        in_specs=[
            pl.BlockSpec((4, tm, Kp), lambda i: (0, i, 0)),
            pl.BlockSpec((Kp, OCp), lambda i: (0, 0)),
            pl.BlockSpec((1, OCp), lambda i: (0, 0)),
        ],
        out_specs=pl.BlockSpec((tm, OCp), lambda i: (i, 0)),
        compiler_params=pltpu.CompilerParams(dimension_semantics=("parallel",)),
        cost_estimate=pl.CostEstimate(
            flops=2 * 4 * Mp * Kp * OCp,
            transcendentals=0,
            bytes_accessed=(4 * Mp * Kp + Kp * OCp + OCp + Mp * OCp) * 4),
    )(planes, w_mat, b_row)

    return out[:M].reshape(B, PH, PW, OCp)


def fc_tail(x_flat, w1, b1, w2, b2, w3, b3):
    """x_flat: (B, 25*OCP) -> (B, OCP) logits (valid cols = first 10)."""
    B, Kf = x_flat.shape
    tm = min(256, _round_up(B, 8))
    Bp = _round_up(B, tm)
    xp = jnp.pad(x_flat, ((0, Bp - B), (0, 0)))

    out = pl.pallas_call(
        _fc_tail_kernel,
        out_shape=jax.ShapeDtypeStruct((Bp, OCP), jnp.float32),
        grid=(Bp // tm,),
        in_specs=[
            pl.BlockSpec((tm, Kf), lambda i: (i, 0)),
            pl.BlockSpec(w1.shape, lambda i: (0, 0)),
            pl.BlockSpec(b1.shape, lambda i: (0, 0)),
            pl.BlockSpec(w2.shape, lambda i: (0, 0)),
            pl.BlockSpec(b2.shape, lambda i: (0, 0)),
            pl.BlockSpec(w3.shape, lambda i: (0, 0)),
            pl.BlockSpec(b3.shape, lambda i: (0, 0)),
        ],
        out_specs=pl.BlockSpec((tm, OCP), lambda i: (i, 0)),
        compiler_params=pltpu.CompilerParams(dimension_semantics=("parallel",)),
        cost_estimate=pl.CostEstimate(
            flops=2 * Bp * (Kf * OCP + OCP * OCP + OCP * OCP),
            transcendentals=0,
            bytes_accessed=(Bp * Kf + Kf * OCP + 2 * OCP * OCP + 3 * OCP + Bp * OCP) * 4),
    )(xp, w1, b1, w2, b2, w3, b3)

    return out[:B]


# ---------------------------------------------------------------------------
# Parameters (PyTorch shapes + deterministic PyTorch-style init)
# ---------------------------------------------------------------------------

def _uniform(key, shape, fan_in):
    bound = 1.0 / (fan_in ** 0.5)
    return jax.random.uniform(key, shape, jnp.float32, -bound, bound)


def init_params(key):
    ks = jax.random.split(key, 10)
    p = {}
    p["conv1_w"] = _uniform(ks[0], (C1, C_IN, KSZ, KSZ), C_IN * KSZ * KSZ)
    p["conv1_b"] = _uniform(ks[1], (C1,), C_IN * KSZ * KSZ)
    p["conv2_w"] = _uniform(ks[2], (C2, C1, KSZ, KSZ), C1 * KSZ * KSZ)
    p["conv2_b"] = _uniform(ks[3], (C2,), C1 * KSZ * KSZ)
    p["fc1_w"] = _uniform(ks[4], (FC1, C2 * 5 * 5), C2 * 5 * 5)
    p["fc1_b"] = _uniform(ks[5], (FC1,), C2 * 5 * 5)
    p["fc2_w"] = _uniform(ks[6], (FC2, FC1), FC1)
    p["fc2_b"] = _uniform(ks[7], (FC2,), FC1)
    p["fc3_w"] = _uniform(ks[8], (FC3, FC2), FC2)
    p["fc3_b"] = _uniform(ks[9], (FC3,), FC2)
    return p


def _prep_conv(w, b):
    """(OC, C, K, K) -> (Kp, OCP) flattened weight (c,kh,kw ordering) + (1, OCP) bias."""
    oc, c, k, _ = w.shape
    kd = c * k * k
    kp = _round_up(kd, 128)
    wm = w.transpose(1, 2, 3, 0).reshape(kd, oc)
    wm = jnp.pad(wm, ((0, kp - kd), (0, OCP - oc)))
    bm = jnp.pad(b, (0, OCP - oc)).reshape(1, OCP)
    return wm, bm


def prepare_params(p):
    """One-time (outside jit) repack: transpose/pad/permute weights to kernel layout."""
    kp = {}
    kp["c1_w"], kp["c1_b"] = _prep_conv(p["conv1_w"], p["conv1_b"])
    kp["c2_w"], kp["c2_b"] = _prep_conv(p["conv2_w"], p["conv2_b"])

    # fc1: permute input features from torch (c, h, w) order to the kernel's
    # flattened NHWC-padded order ((h*5+w)*128 + c), pad to (25*128, 128).
    w1 = p["fc1_w"].reshape(FC1, C2, 5, 5).transpose(2, 3, 1, 0)      # (h, w, c, n)
    w1 = jnp.pad(w1, ((0, 0), (0, 0), (0, OCP - C2), (0, OCP - FC1)))
    kp["fc1_w"] = w1.reshape(25 * OCP, OCP)
    kp["fc1_b"] = jnp.pad(p["fc1_b"], (0, OCP - FC1)).reshape(1, OCP)

    kp["fc2_w"] = jnp.pad(p["fc2_w"].T, ((0, OCP - FC1), (0, OCP - FC2)))
    kp["fc2_b"] = jnp.pad(p["fc2_b"], (0, OCP - FC2)).reshape(1, OCP)
    kp["fc3_w"] = jnp.pad(p["fc3_w"].T, ((0, OCP - FC2), (0, OCP - FC3)))
    kp["fc3_b"] = jnp.pad(p["fc3_b"], (0, OCP - FC3)).reshape(1, OCP)
    return kp


# ---------------------------------------------------------------------------
# Forward pass
# ---------------------------------------------------------------------------

@jax.jit
def net_forward(kp, x):
    """x: (B, 3, 32, 32) NCHW -> (B, 10) logits."""
    B = x.shape[0]
    xh = jnp.transpose(x, (0, 2, 3, 1))                              # NHWC
    h1 = conv_relu_pool(xh, kp["c1_w"], kp["c1_b"], KSZ)             # (B, 14, 14, 128)
    h1 = h1[..., :C1]                                                # valid 6 channels
    h2 = conv_relu_pool(h1, kp["c2_w"], kp["c2_b"], KSZ)             # (B, 5, 5, 128)
    xf = h2.reshape(B, 25 * OCP)                                     # flatten (h, w, c_pad)
    out = fc_tail(xf, kp["fc1_w"], kp["fc1_b"], kp["fc2_w"], kp["fc2_b"],
                  kp["fc3_w"], kp["fc3_b"])                          # (B, 128)
    return out[:, :FC3]                                              # (B, 10)


# ---------------------------------------------------------------------------
# Pure-JAX reference (verification only)
# ---------------------------------------------------------------------------

def net_reference(params, x):
    hp = lax.Precision.HIGHEST

    def conv(x, w, b):
        y = lax.conv_general_dilated(
            x, w, window_strides=(1, 1), padding="VALID",
            dimension_numbers=("NCHW", "OIHW", "NCHW"), precision=hp)
        return jnp.maximum(y + b[None, :, None, None], 0.0)

    def pool(x):
        return lax.reduce_window(x, -jnp.inf, lax.max,
                                 (1, 1, 2, 2), (1, 1, 2, 2), "VALID")

    y = pool(conv(x, params["conv1_w"], params["conv1_b"]))
    y = pool(conv(y, params["conv2_w"], params["conv2_b"]))
    y = y.reshape(y.shape[0], -1)
    y = jnp.maximum(jnp.dot(y, params["fc1_w"].T, precision=hp) + params["fc1_b"], 0.0)
    y = jnp.maximum(jnp.dot(y, params["fc2_w"].T, precision=hp) + params["fc2_b"], 0.0)
    return jnp.dot(y, params["fc3_w"].T, precision=hp) + params["fc3_b"]


# ---------------------------------------------------------------------------

if __name__ == "__main__":
    key = jax.random.PRNGKey(0)
    pkey, xkey = jax.random.split(key)
    params = init_params(pkey)
    kparams = prepare_params(params)

    x = jax.random.normal(xkey, (2, 3, 32, 32), jnp.float32)   # CIFAR-sized, batch=2

    out = jax.block_until_ready(net_forward(kparams, x))
    assert out.shape == (2, 10), out.shape

    ref = jax.block_until_ready(net_reference(params, x))
    assert jnp.allclose(out, ref, atol=1e-4, rtol=1e-4), (
        "mismatch vs reference", float(jnp.max(jnp.abs(out - ref))))

    print("KERNEL_OK")
</pallas_src>

<mosaic_0001>
module attributes {stable_mosaic.version = 11 : i64} {
  func.func @_conv_relu_pool_kernel(%arg0: i32, %arg1: memref<4x392x128xf32, #tpu.memory_space<vmem>>, %arg2: memref<128x128xf32, #tpu.memory_space<vmem>>, %arg3: memref<1x128xf32, #tpu.memory_space<vmem>>, %arg4: memref<392x128xf32, #tpu.memory_space<vmem>>) attributes {dimension_semantics = [#tpu.dimension_semantics<parallel>], iteration_bounds = array<i64: 1>, scalar_prefetch = 0 : i64, scratch_operands = 0 : i64, tpu.core_type = #tpu.core_type<tc>, window_params = [{transform_indices = @transform_0, window_bounds = array<i64: 4, 392, 128>}, {pipeline_mode = #tpu.pipeline_mode<synchronous>, transform_indices = @transform_1, window_bounds = array<i64: 128, 128>}, {pipeline_mode = #tpu.pipeline_mode<synchronous>, transform_indices = @transform_2, window_bounds = array<i64: 1, 128>}, {transform_indices = @transform_3, window_bounds = array<i64: 392, 128>}]} {
    %c0 = arith.constant 0 : index
    %c0_0 = arith.constant 0 : index
    %0 = vector.load %arg2[%c0, %c0_0] : memref<128x128xf32, #tpu.memory_space<vmem>>, vector<128x128xf32>
    %c0_1 = arith.constant 0 : index
    %c0_2 = arith.constant 0 : index
    %1 = vector.load %arg3[%c0_1, %c0_2] : memref<1x128xf32, #tpu.memory_space<vmem>>, vector<1x128xf32>
    %c0_3 = arith.constant 0 : index
    %c0_4 = arith.constant 0 : index
    %c0_5 = arith.constant 0 : index
    %2 = vector.load %arg1[%c0_3, %c0_4, %c0_5] : memref<4x392x128xf32, #tpu.memory_space<vmem>>, vector<1x392x128xf32>
    %3 = vector.shape_cast %2 : vector<1x392x128xf32> to vector<392x128xf32>
    %cst = arith.constant dense<0.000000e+00> : vector<392x128xf32>
    %4 = tpu.matmul %3, %0, %cst {dimension_numbers = #tpu.dot_dimension_numbers<[1], [0], [0], [1], [0, 0, 1, 1], [], []>} : vector<392x128xf32>, vector<128x128xf32>, vector<392x128xf32> -> vector<392x128xf32>
    %5 = vector.broadcast %1 : vector<1x128xf32> to vector<392x128xf32>
    %6 = arith.addf %4, %5 : vector<392x128xf32>
    %cst_6 = arith.constant 0.000000e+00 : f32
    %7 = vector.broadcast %cst_6 : f32 to vector<392x128xf32>
    %8 = arith.maximumf %6, %7 : vector<392x128xf32>
    %c1 = arith.constant 1 : index
    %c0_7 = arith.constant 0 : index
    %c0_8 = arith.constant 0 : index
    %9 = vector.load %arg1[%c1, %c0_7, %c0_8] : memref<4x392x128xf32, #tpu.memory_space<vmem>>, vector<1x392x128xf32>
    %10 = vector.shape_cast %9 : vector<1x392x128xf32> to vector<392x128xf32>
    %cst_9 = arith.constant dense<0.000000e+00> : vector<392x128xf32>
    %11 = tpu.matmul %10, %0, %cst_9 {dimension_numbers = #tpu.dot_dimension_numbers<[1], [0], [0], [1], [0, 0, 1, 1], [], []>} : vector<392x128xf32>, vector<128x128xf32>, vector<392x128xf32> -> vector<392x128xf32>
    %12 = vector.broadcast %1 : vector<1x128xf32> to vector<392x128xf32>
    %13 = arith.addf %11, %12 : vector<392x128xf32>
    %cst_10 = arith.constant 0.000000e+00 : f32
    %14 = vector.broadcast %cst_10 : f32 to vector<392x128xf32>
    %15 = arith.maximumf %13, %14 : vector<392x128xf32>
    %16 = arith.maximumf %8, %15 : vector<392x128xf32>
    %c2 = arith.constant 2 : index
    %c0_11 = arith.constant 0 : index
    %c0_12 = arith.constant 0 : index
    %17 = vector.load %arg1[%c2, %c0_11, %c0_12] : memref<4x392x128xf32, #tpu.memory_space<vmem>>, vector<1x392x128xf32>
    %18 = vector.shape_cast %17 : vector<1x392x128xf32> to vector<392x128xf32>
    %cst_13 = arith.constant dense<0.000000e+00> : vector<392x128xf32>
    %19 = tpu.matmul %18, %0, %cst_13 {dimension_numbers = #tpu.dot_dimension_numbers<[1], [0], [0], [1], [0, 0, 1, 1], [], []>} : vector<392x128xf32>, vector<128x128xf32>, vector<392x128xf32> -> vector<392x128xf32>
    %20 = vector.broadcast %1 : vector<1x128xf32> to vector<392x128xf32>
    %21 = arith.addf %19, %20 : vector<392x128xf32>
    %cst_14 = arith.constant 0.000000e+00 : f32
    %22 = vector.broadcast %cst_14 : f32 to vector<392x128xf32>
    %23 = arith.maximumf %21, %22 : vector<392x128xf32>
    %c3 = arith.constant 3 : index
    %c0_15 = arith.constant 0 : index
    %c0_16 = arith.constant 0 : index
    %24 = vector.load %arg1[%c3, %c0_15, %c0_16] : memref<4x392x128xf32, #tpu.memory_space<vmem>>, vector<1x392x128xf32>
    %25 = vector.shape_cast %24 : vector<1x392x128xf32> to vector<392x128xf32>
    %cst_17 = arith.constant dense<0.000000e+00> : vector<392x128xf32>
    %26 = tpu.matmul %25, %0, %cst_17 {dimension_numbers = #tpu.dot_dimension_numbers<[1], [0], [0], [1], [0, 0, 1, 1], [], []>} : vector<392x128xf32>, vector<128x128xf32>, vector<392x128xf32> -> vector<392x128xf32>
    %27 = vector.broadcast %1 : vector<1x128xf32> to vector<392x128xf32>
    %28 = arith.addf %26, %27 : vector<392x128xf32>
    %cst_18 = arith.constant 0.000000e+00 : f32
    %29 = vector.broadcast %cst_18 : f32 to vector<392x128xf32>
    %30 = arith.maximumf %28, %29 : vector<392x128xf32>
    %31 = arith.maximumf %23, %30 : vector<392x128xf32>
    %32 = arith.maximumf %16, %31 : vector<392x128xf32>
    %c0_19 = arith.constant 0 : index
    %c0_20 = arith.constant 0 : index
    %33 = vector.load %arg4[%c0_19, %c0_20] : memref<392x128xf32, #tpu.memory_space<vmem>>, vector<392x128xf32>
    tpu.vector_store %arg4[%c0_19, %c0_20], %32 {strides = array<i32>} : memref<392x128xf32, #tpu.memory_space<vmem>>, vector<392x128xf32>,
    return
  }
  func.func @transform_0(%arg0: i32) -> (i32, i32, i32) {
    %c0_i32 = arith.constant 0 : i32
    %c0_i32_0 = arith.constant 0 : i32
    %c0_i32_1 = arith.constant 0 : i32
    return %c0_i32, %arg0, %c0_i32_0 : i32, i32, i32
  }
  func.func @transform_1(%arg0: i32) -> (i32, i32) {
    %c0_i32 = arith.constant 0 : i32
    %c0_i32_0 = arith.constant 0 : i32
    %c0_i32_1 = arith.constant 0 : i32
    return %c0_i32, %c0_i32_0 : i32, i32
  }
  func.func @transform_2(%arg0: i32) -> (i32, i32) {
    %c0_i32 = arith.constant 0 : i32
    %c0_i32_0 = arith.constant 0 : i32
    %c0_i32_1 = arith.constant 0 : i32
    return %c0_i32, %c0_i32_0 : i32, i32
  }
  func.func @transform_3(%arg0: i32) -> (i32, i32) {
    %c0_i32 = arith.constant 0 : i32
    %c0_i32_0 = arith.constant 0 : i32
    return %arg0, %c0_i32 : i32, i32
  }
}

module attributes {stable_mosaic.version = 11 : i64} {
  func.func @_conv_relu_pool_kernel(%arg0: i32, %arg1: memref<4x56x256xf32, #tpu.memory_space<vmem>>, %arg2: memref<256x128xf32, #tpu.memory_space<vmem>>, %arg3: memref<1x128xf32, #tpu.memory_space<vmem>>, %arg4: memref<56x128xf32, #tpu.memory_space<vmem>>) attributes {dimension_semantics = [#tpu.dimension_semantics<parallel>], iteration_bounds = array<i64: 1>, scalar_prefetch = 0 : i64, scratch_operands = 0 : i64, tpu.core_type = #tpu.core_type<tc>, window_params = [{transform_indices = @transform_0, window_bounds = array<i64: 4, 56, 256>}, {pipeline_mode = #tpu.pipeline_mode<synchronous>, transform_indices = @transform_1, window_bounds = array<i64: 256, 128>}, {pipeline_mode = #tpu.pipeline_mode<synchronous>, transform_indices = @transform_2, window_bounds = array<i64: 1, 128>}, {transform_indices = @transform_3, window_bounds = array<i64: 56, 128>}]} {
    %c0 = arith.constant 0 : index
    %c0_0 = arith.constant 0 : index
    %0 = vector.load %arg2[%c0, %c0_0] : memref<256x128xf32, #tpu.memory_space<vmem>>, vector<256x128xf32>
    %c0_1 = arith.constant 0 : index
    %c0_2 = arith.constant 0 : index
    %1 = vector.load %arg3[%c0_1, %c0_2] : memref<1x128xf32, #tpu.memory_space<vmem>>, vector<1x128xf32>
    %c0_3 = arith.constant 0 : index
    %c0_4 = arith.constant 0 : index
    %c0_5 = arith.constant 0 : index
    %2 = vector.load %arg1[%c0_3, %c0_4, %c0_5] : memref<4x56x256xf32, #tpu.memory_space<vmem>>, vector<1x56x256xf32>
    %3 = vector.shape_cast %2 : vector<1x56x256xf32> to vector<56x256xf32>
    %cst = arith.constant dense<0.000000e+00> : vector<56x128xf32>
    %4 = tpu.matmul %3, %0, %cst {dimension_numbers = #tpu.dot_dimension_numbers<[1], [0], [0], [1], [0, 0, 1, 1], [], []>} : vector<56x256xf32>, vector<256x128xf32>, vector<56x128xf32> -> vector<56x128xf32>
    %5 = vector.broadcast %1 : vector<1x128xf32> to vector<56x128xf32>
    %6 = arith.addf %4, %5 : vector<56x128xf32>
    %cst_6 = arith.constant 0.000000e+00 : f32
    %7 = vector.broadcast %cst_6 : f32 to vector<56x128xf32>
    %8 = arith.maximumf %6, %7 : vector<56x128xf32>
    %c1 = arith.constant 1 : index
    %c0_7 = arith.constant 0 : index
    %c0_8 = arith.constant 0 : index
    %9 = vector.load %arg1[%c1, %c0_7, %c0_8] : memref<4x56x256xf32, #tpu.memory_space<vmem>>, vector<1x56x256xf32>
    %10 = vector.shape_cast %9 : vector<1x56x256xf32> to vector<56x256xf32>
    %cst_9 = arith.constant dense<0.000000e+00> : vector<56x128xf32>
    %11 = tpu.matmul %10, %0, %cst_9 {dimension_numbers = #tpu.dot_dimension_numbers<[1], [0], [0], [1], [0, 0, 1, 1], [], []>} : vector<56x256xf32>, vector<256x128xf32>, vector<56x128xf32> -> vector<56x128xf32>
    %12 = vector.broadcast %1 : vector<1x128xf32> to vector<56x128xf32>
    %13 = arith.addf %11, %12 : vector<56x128xf32>
    %cst_10 = arith.constant 0.000000e+00 : f32
    %14 = vector.broadcast %cst_10 : f32 to vector<56x128xf32>
    %15 = arith.maximumf %13, %14 : vector<56x128xf32>
    %16 = arith.maximumf %8, %15 : vector<56x128xf32>
    %c2 = arith.constant 2 : index
    %c0_11 = arith.constant 0 : index
    %c0_12 = arith.constant 0 : index
    %17 = vector.load %arg1[%c2, %c0_11, %c0_12] : memref<4x56x256xf32, #tpu.memory_space<vmem>>, vector<1x56x256xf32>
    %18 = vector.shape_cast %17 : vector<1x56x256xf32> to vector<56x256xf32>
    %cst_13 = arith.constant dense<0.000000e+00> : vector<56x128xf32>
    %19 = tpu.matmul %18, %0, %cst_13 {dimension_numbers = #tpu.dot_dimension_numbers<[1], [0], [0], [1], [0, 0, 1, 1], [], []>} : vector<56x256xf32>, vector<256x128xf32>, vector<56x128xf32> -> vector<56x128xf32>
    %20 = vector.broadcast %1 : vector<1x128xf32> to vector<56x128xf32>
    %21 = arith.addf %19, %20 : vector<56x128xf32>
    %cst_14 = arith.constant 0.000000e+00 : f32
    %22 = vector.broadcast %cst_14 : f32 to vector<56x128xf32>
    %23 = arith.maximumf %21, %22 : vector<56x128xf32>
    %c3 = arith.constant 3 : index
    %c0_15 = arith.constant 0 : index
    %c0_16 = arith.constant 0 : index
    %24 = vector.load %arg1[%c3, %c0_15, %c0_16] : memref<4x56x256xf32, #tpu.memory_space<vmem>>, vector<1x56x256xf32>
    %25 = vector.shape_cast %24 : vector<1x56x256xf32> to vector<56x256xf32>
    %cst_17 = arith.constant dense<0.000000e+00> : vector<56x128xf32>
    %26 = tpu.matmul %25, %0, %cst_17 {dimension_numbers = #tpu.dot_dimension_numbers<[1], [0], [0], [1], [0, 0, 1, 1], [], []>} : vector<56x256xf32>, vector<256x128xf32>, vector<56x128xf32> -> vector<56x128xf32>
    %27 = vector.broadcast %1 : vector<1x128xf32> to vector<56x128xf32>
    %28 = arith.addf %26, %27 : vector<56x128xf32>
    %cst_18 = arith.constant 0.000000e+00 : f32
    %29 = vector.broadcast %cst_18 : f32 to vector<56x128xf32>
    %30 = arith.maximumf %28, %29 : vector<56x128xf32>
    %31 = arith.maximumf %23, %30 : vector<56x128xf32>
    %32 = arith.maximumf %16, %31 : vector<56x128xf32>
    %c0_19 = arith.constant 0 : index
    %c0_20 = arith.constant 0 : index
    %33 = vector.load %arg4[%c0_19, %c0_20] : memref<56x128xf32, #tpu.memory_space<vmem>>, vector<56x128xf32>
    tpu.vector_store %arg4[%c0_19, %c0_20], %32 {strides = array<i32>} : memref<56x128xf32, #tpu.memory_space<vmem>>, vector<56x128xf32>,
    return
  }
  func.func @transform_0(%arg0: i32) -> (i32, i32, i32) {
    %c0_i32 = arith.constant 0 : i32
    %c0_i32_0 = arith.constant 0 : i32
    %c0_i32_1 = arith.constant 0 : i32
    return %c0_i32, %arg0, %c0_i32_0 : i32, i32, i32
  }
  func.func @transform_1(%arg0: i32) -> (i32, i32) {
    %c0_i32 = arith.constant 0 : i32
    %c0_i32_0 = arith.constant 0 : i32
    %c0_i32_1 = arith.constant 0 : i32
    return %c0_i32, %c0_i32_0 : i32, i32
  }
  func.func @transform_2(%arg0: i32) -> (i32, i32) {
    %c0_i32 = arith.constant 0 : i32
    %c0_i32_0 = arith.constant 0 : i32
    %c0_i32_1 = arith.constant 0 : i32
    return %c0_i32, %c0_i32_0 : i32, i32
  }
  func.func @transform_3(%arg0: i32) -> (i32, i32) {
    %c0_i32 = arith.constant 0 : i32
    %c0_i32_0 = arith.constant 0 : i32
    return %arg0, %c0_i32 : i32, i32
  }
}

module attributes {stable_mosaic.version = 11 : i64} {
  func.func @_fc_tail_kernel(%arg0: i32, %arg1: memref<8x3200xf32, #tpu.memory_space<vmem>>, %arg2: memref<3200x128xf32, #tpu.memory_space<vmem>>, %arg3: memref<1x128xf32, #tpu.memory_space<vmem>>, %arg4: memref<128x128xf32, #tpu.memory_space<vmem>>, %arg5: memref<1x128xf32, #tpu.memory_space<vmem>>, %arg6: memref<128x128xf32, #tpu.memory_space<vmem>>, %arg7: memref<1x128xf32, #tpu.memory_space<vmem>>, %arg8: memref<8x128xf32, #tpu.memory_space<vmem>>) attributes {dimension_semantics = [#tpu.dimension_semantics<parallel>], iteration_bounds = array<i64: 1>, scalar_prefetch = 0 : i64, scratch_operands = 0 : i64, tpu.core_type = #tpu.core_type<tc>, window_params = [{transform_indices = @transform_0, window_bounds = array<i64: 8, 3200>}, {pipeline_mode = #tpu.pipeline_mode<synchronous>, transform_indices = @transform_1, window_bounds = array<i64: 3200, 128>}, {pipeline_mode = #tpu.pipeline_mode<synchronous>, transform_indices = @transform_2, window_bounds = array<i64: 1, 128>}, {pipeline_mode = #tpu.pipeline_mode<synchronous>, transform_indices = @transform_3, window_bounds = array<i64: 128, 128>}, {pipeline_mode = #tpu.pipeline_mode<synchronous>, transform_indices = @transform_4, window_bounds = array<i64: 1, 128>}, {pipeline_mode = #tpu.pipeline_mode<synchronous>, transform_indices = @transform_5, window_bounds = array<i64: 128, 128>}, {pipeline_mode = #tpu.pipeline_mode<synchronous>, transform_indices = @transform_6, window_bounds = array<i64: 1, 128>}, {transform_indices = @transform_7, window_bounds = array<i64: 8, 128>}]} {
    %c0 = arith.constant 0 : index
    %c0_0 = arith.constant 0 : index
    %0 = vector.load %arg1[%c0, %c0_0] : memref<8x3200xf32, #tpu.memory_space<vmem>>, vector<8x3200xf32>
    %c0_1 = arith.constant 0 : index
    %c0_2 = arith.constant 0 : index
    %1 = vector.load %arg2[%c0_1, %c0_2] : memref<3200x128xf32, #tpu.memory_space<vmem>>, vector<3200x128xf32>
    %cst = arith.constant dense<0.000000e+00> : vector<8x128xf32>
    %2 = tpu.matmul %0, %1, %cst {dimension_numbers = #tpu.dot_dimension_numbers<[1], [0], [0], [1], [0, 0, 1, 1], [], []>} : vector<8x3200xf32>, vector<3200x128xf32>, vector<8x128xf32> -> vector<8x128xf32>
    %c0_3 = arith.constant 0 : index
    %c0_4 = arith.constant 0 : index
    %3 = vector.load %arg3[%c0_3, %c0_4] : memref<1x128xf32, #tpu.memory_space<vmem>>, vector<1x128xf32>
    %4 = vector.broadcast %3 : vector<1x128xf32> to vector<8x128xf32>
    %5 = arith.addf %2, %4 : vector<8x128xf32>
    %cst_5 = arith.constant 0.000000e+00 : f32
    %6 = vector.broadcast %cst_5 : f32 to vector<8x128xf32>
    %7 = arith.maximumf %5, %6 : vector<8x128xf32>
    %c0_6 = arith.constant 0 : index
    %c0_7 = arith.constant 0 : index
    %8 = vector.load %arg4[%c0_6, %c0_7] : memref<128x128xf32, #tpu.memory_space<vmem>>, vector<128x128xf32>
    %cst_8 = arith.constant dense<0.000000e+00> : vector<8x128xf32>
    %9 = tpu.matmul %7, %8, %cst_8 {dimension_numbers = #tpu.dot_dimension_numbers<[1], [0], [0], [1], [0, 0, 1, 1], [], []>} : vector<8x128xf32>, vector<128x128xf32>, vector<8x128xf32> -> vector<8x128xf32>
    %c0_9 = arith.constant 0 : index
    %c0_10 = arith.constant 0 : index
    %10 = vector.load %arg5[%c0_9, %c0_10] : memref<1x128xf32, #tpu.memory_space<vmem>>, vector<1x128xf32>
    %11 = vector.broadcast %10 : vector<1x128xf32> to vector<8x128xf32>
    %12 = arith.addf %9, %11 : vector<8x128xf32>
    %cst_11 = arith.constant 0.000000e+00 : f32
    %13 = vector.broadcast %cst_11 : f32 to vector<8x128xf32>
    %14 = arith.maximumf %12, %13 : vector<8x128xf32>
    %c0_12 = arith.constant 0 : index
    %c0_13 = arith.constant 0 : index
    %15 = vector.load %arg6[%c0_12, %c0_13] : memref<128x128xf32, #tpu.memory_space<vmem>>, vector<128x128xf32>
    %cst_14 = arith.constant dense<0.000000e+00> : vector<8x128xf32>
    %16 = tpu.matmul %14, %15, %cst_14 {dimension_numbers = #tpu.dot_dimension_numbers<[1], [0], [0], [1], [0, 0, 1, 1], [], []>} : vector<8x128xf32>, vector<128x128xf32>, vector<8x128xf32> -> vector<8x128xf32>
    %c0_15 = arith.constant 0 : index
    %c0_16 = arith.constant 0 : index
    %17 = vector.load %arg7[%c0_15, %c0_16] : memref<1x128xf32, #tpu.memory_space<vmem>>, vector<1x128xf32>
    %18 = vector.broadcast %17 : vector<1x128xf32> to vector<8x128xf32>
    %19 = arith.addf %16, %18 : vector<8x128xf32>
    %c0_17 = arith.constant 0 : index
    %c0_18 = arith.constant 0 : index
    %20 = vector.load %arg8[%c0_17, %c0_18] : memref<8x128xf32, #tpu.memory_space<vmem>>, vector<8x128xf32>
    tpu.vector_store %arg8[%c0_17, %c0_18], %19 {strides = array<i32>} : memref<8x128xf32, #tpu.memory_space<vmem>>, vector<8x128xf32>,
    return
  }
  func.func @transform_0(%arg0: i32) -> (i32, i32) {
    %c0_i32 = arith.constant 0 : i32
    %c0_i32_0 = arith.constant 0 : i32
    return %arg0, %c0_i32 : i32, i32
  }
  func.func @transform_1(%arg0: i32) -> (i32, i32) {
    %c0_i32 = arith.constant 0 : i32
    %c0_i32_0 = arith.constant 0 : i32
    %c0_i32_1 = arith.constant 0 : i32
    return %c0_i32, %c0_i32_0 : i32, i32
  }
  func.func @transform_2(%arg0: i32) -> (i32, i32) {
    %c0_i32 = arith.constant 0 : i32
    %c0_i32_0 = arith.constant 0 : i32
    %c0_i32_1 = arith.constant 0 : i32
    return %c0_i32, %c0_i32_0 : i32, i32
  }
  func.func @transform_3(%arg0: i32) -> (i32, i32) {
    %c0_i32 = arith.constant 0 : i32
    %c0_i32_0 = arith.constant 0 : i32
    %c0_i32_1 = arith.constant 0 : i32
    return %c0_i32, %c0_i32_0 : i32, i32
  }
  func.func @transform_4(%arg0: i32) -> (i32, i32) {
    %c0_i32 = arith.constant 0 : i32
    %c0_i32_0 = arith.constant 0 : i32
    %c0_i32_1 = arith.constant 0 : i32
    return %c0_i32, %c0_i32_0 : i32, i32
  }
  func.func @transform_5(%arg0: i32) -> (i32, i32) {
    %c0_i32 = arith.constant 0 : i32
    %c0_i32_0 = arith.constant 0 : i32
    %c0_i32_1 = arith.constant 0 : i32
    return %c0_i32, %c0_i32_0 : i32, i32
  }
  func.func @transform_6(%arg0: i32) -> (i32, i32) {
    %c0_i32 = arith.constant 0 : i32
    %c0_i32_0 = arith.constant 0 : i32
    %c0_i32_1 = arith.constant 0 : i32
    return %c0_i32, %c0_i32_0 : i32, i32
  }
  func.func @transform_7(%arg0: i32) -> (i32, i32) {
    %c0_i32 = arith.constant 0 : i32
    %c0_i32_0 = arith.constant 0 : i32
    return %arg0, %c0_i32 : i32, i32
  }
}

</mosaic_0001>

<llo_original>
// kernel: net_forward.3
$region0: #{net_forward.3}
  #allocation0 [shape = 'u32[]', space=smem, size = 0x4, offset = 0x4, fixed_abs, tag = 'smem constant byte address 0x4 - core index']
  #allocation1 [shape = 'u32[144,128]{1,0:T(1,128)}', space=vmem, size = 0x12000, scoped, tag = 'internal scratch']
  %s0 = inlined_call_operand.vmem [shape: f32[4,392,128], index: 0, kind: input, shape index: {}]
  %s1 = inlined_call_operand.vmem [shape: f32[128,128], index: 1, kind: input, shape index: {}]
  %s2 = inlined_call_operand.vmem [shape: f32[1,128], index: 2, kind: input, shape index: {}]
  %s3 = inlined_call_operand.vmem [shape: f32[392,128], index: 3, kind: output, shape index: {}]
  %s4 = sld [smem:[#allocation0]]
  $region22: #{net_forward.3} parent=0
    _
  %s6 = ssub.s32 1, %s4
  %s7 = scalar_select 0, %s6, %s4
  // Predicated region
  $region2: #{net_forward.3} parent=0 // pred_check
    _
  $region3: #{net_forward.3} parent=0 // pred_check_branch
    %9 = sbr.rel (0) target = $region5
  $region4: #{net_forward.3} parent=0 // pred_region
    _
  $region5: #{net_forward.3} parent=0 // pred_fallthru
    _
  // Predicated region
  $region6: #{net_forward.3} parent=0 // pred_check
    _
  $region7: #{net_forward.3} parent=0 // pred_check_branch
    %11 = sbr.rel (0) target = $region9
  $region8: #{net_forward.3} parent=0 // pred_region
    _
  $region9: #{net_forward.3} parent=0 // pred_fallthru
    _
  // Predicated region
  $region10: #{net_forward.3} parent=0 // pred_check
    _
  $region11: #{net_forward.3} parent=0 // pred_check_branch
    %13 = sbr.rel (0) target = $region13
  $region12: #{net_forward.3} parent=0 // pred_region
    _
  $region13: #{net_forward.3} parent=0 // pred_fallthru
    _
  %v14 = vld [vmem:[%s1] sm:$0xff]
  %v15 = vld [vmem:[%s1 + $0x8] sm:$0xff]
  %v16 = vld [vmem:[%s1 + $0x10] sm:$0xff]
  %v17 = vld [vmem:[%s1 + $0x18] sm:$0xff]
  %v18 = vld [vmem:[%s1 + $0x20] sm:$0xff]
  %v19 = vld [vmem:[%s1 + $0x28] sm:$0xff]
  %v20 = vld [vmem:[%s1 + $0x30] sm:$0xff]
  %v21 = vld [vmem:[%s1 + $0x38] sm:$0xff]
  %v22 = vld [vmem:[%s1 + $0x40] sm:$0xff]
  %v23 = vld [vmem:[%s1 + $0x48] sm:$0xff]
  %v24 = vld [vmem:[%s1 + $0x50] sm:$0xff]
  %v25 = vld [vmem:[%s1 + $0x58] sm:$0xff]
  %v26 = vld [vmem:[%s1 + $0x60] sm:$0xff]
  %v27 = vld [vmem:[%s1 + $0x68] sm:$0xff]
  %v28 = vld [vmem:[%s1 + $0x70] sm:$0xff]
  %v29 = vld [vmem:[%s1 + $0x78] sm:$0xff]
  %v30 = vld [vmem:[%s2] sm:$0x1]
  %v31 = vld [vmem:[%s0] sm:$0xff]
  %v32 = vld [vmem:[%s0 + $0x8] sm:$0xff]
  %v33 = vld [vmem:[%s0 + $0x10] sm:$0xff]
  %v34 = vld [vmem:[%s0 + $0x18] sm:$0xff]
  %v35 = vld [vmem:[%s0 + $0x20] sm:$0xff]
  %v36 = vld [vmem:[%s0 + $0x28] sm:$0xff]
  %v37 = vld [vmem:[%s0 + $0x30] sm:$0xff]
  %v38 = vld [vmem:[%s0 + $0x38] sm:$0xff]
  %v39 = vld [vmem:[%s0 + $0x40] sm:$0xff]
  %v40 = vld [vmem:[%s0 + $0x48] sm:$0xff]
  %v41 = vld [vmem:[%s0 + $0x50] sm:$0xff]
  %v42 = vld [vmem:[%s0 + $0x58] sm:$0xff]
  %v43 = vld [vmem:[%s0 + $0x60] sm:$0xff]
  %v44 = vld [vmem:[%s0 + $0x68] sm:$0xff]
  %v45 = vld [vmem:[%s0 + $0x70] sm:$0xff]
  %v46 = vld [vmem:[%s0 + $0x78] sm:$0xff]
  %v47 = vld [vmem:[%s0 + $0x80] sm:$0xff]
  %v48 = vld [vmem:[%s0 + $0x88] sm:$0xff]
  %v49 = vld [vmem:[%s0 + $0x90] sm:$0xff]
  %v50 = vld [vmem:[%s0 + $0x98] sm:$0xff]
  %v51 = vld [vmem:[%s0 + $0xa0] sm:$0xff]
  %v52 = vld [vmem:[%s0 + $0xa8] sm:$0xff]
  %v53 = vld [vmem:[%s0 + $0xb0] sm:$0xff]
  %v54 = vld [vmem:[%s0 + $0xb8] sm:$0xff]
  %v55 = vld [vmem:[%s0 + $0xc0] sm:$0xff]
  %v56 = vld [vmem:[%s0 + $0xc8] sm:$0xff]
  %v57 = vld [vmem:[%s0 + $0xd0] sm:$0xff]
  %v58 = vld [vmem:[%s0 + $0xd8] sm:$0xff]
  %v59 = vld [vmem:[%s0 + $0xe0] sm:$0xff]
  %v60 = vld [vmem:[%s0 + $0xe8] sm:$0xff]
  %v61 = vld [vmem:[%s0 + $0xf0] sm:$0xff]
  %v62 = vld [vmem:[%s0 + $0xf8] sm:$0xff]
  %v63 = vld [vmem:[%s0 + $0x100] sm:$0xff]
  %v64 = vld [vmem:[%s0 + $0x108] sm:$0xff]
  %v65 = vld [vmem:[%s0 + $0x110] sm:$0xff]
  %v66 = vld [vmem:[%s0 + $0x118] sm:$0xff]
  %v67 = vld [vmem:[%s0 + $0x120] sm:$0xff]
  %v68 = vld [vmem:[%s0 + $0x128] sm:$0xff]
  %v69 = vld [vmem:[%s0 + $0x130] sm:$0xff]
  %v70 = vld [vmem:[%s0 + $0x138] sm:$0xff]
  %v71 = vld [vmem:[%s0 + $0x140] sm:$0xff]
  %v72 = vld [vmem:[%s0 + $0x148] sm:$0xff]
  %v73 = vld [vmem:[%s0 + $0x150] sm:$0xff]
  %v74 = vld [vmem:[%s0 + $0x158] sm:$0xff]
  %v75 = vld [vmem:[%s0 + $0x160] sm:$0xff]
  %v76 = vld [vmem:[%s0 + $0x168] sm:$0xff]
  %v77 = vld [vmem:[%s0 + $0x170] sm:$0xff]
  %v78 = vld [vmem:[%s0 + $0x178] sm:$0xff]
  %v79 = vld [vmem:[%s0 + $0x180] sm:$0xff]
  %v81 = vlaneseq
  %v82 = vshrl.u32 %v81, 7
  %v83 = vsub.s32 0, %v82
  %v84 = vrot.slane %v30, %v83
  %86 = vmatprep.subr.mxu0 0.0
  %87 = vmatpush1.msra.mxu0 %v14
  %88 = vmatprep.subr.mxu0 0.0
  %89 = vmatpush1.msra.mxu0 %v15
  %90 = vmatprep.subr.mxu0 0.0
  %91 = vmatpush1.msra.mxu0 %v16
  %92 = vmatprep.subr.mxu0 0.0
  %93 = vmatpush1.msra.mxu0 %v17
  %94 = vmatprep.subr.mxu0 0.0
  %95 = vmatpush1.msra.mxu0 %v18
  %96 = vmatprep.subr.mxu0 0.0
  %97 = vmatpush1.msra.mxu0 %v19
  %98 = vmatprep.subr.mxu0 0.0
  %99 = vmatpush1.msra.mxu0 %v20
  %100 = vmatprep.subr.mxu0 0.0
  %101 = vmatpush1.msra.mxu0 %v21
  %102 = vmatprep.subr.mxu0 0.0
  %103 = vmatpush1.msra.mxu0 %v22
  %104 = vmatprep.subr.mxu0 0.0
  %105 = vmatpush1.msra.mxu0 %v23
  %106 = vmatprep.subr.mxu0 0.0
  %107 = vmatpush1.msra.mxu0 %v24
  %108 = vmatprep.subr.mxu0 0.0
  %109 = vmatpush1.msra.mxu0 %v25
  %110 = vmatprep.subr.mxu0 0.0
  %111 = vmatpush1.msra.mxu0 %v26
  %112 = vmatprep.subr.mxu0 0.0
  %113 = vmatpush1.msra.mxu0 %v27
  %114 = vmatprep.subr.mxu0 0.0
  %115 = vmatpush1.msra.mxu0 %v28
  %116 = vmatprep.subr.mxu0 0.0
  %117 = vmatpush1.msra.mxu0 %v29
  %118 = vmatprep.subr.mxu0 0.0
  %119 = vmatpush1.msra.mxu0 0.0
  %120 = vmatprep.subr.mxu0 0.0
  %121 = vmatpush1.msra.mxu0 0.0
  %122 = vmatprep.subr.mxu0 0.0
  %123 = vmatpush1.msra.mxu0 0.0
  %124 = vmatprep.subr.mxu0 0.0
  %125 = vmatpush1.msra.mxu0 0.0
  %126 = vmatprep.subr.mxu0 0.0
  %127 = vmatpush1.msra.mxu0 0.0
  %128 = vmatprep.subr.mxu0 0.0
  %129 = vmatpush1.msra.mxu0 0.0
  %130 = vmatprep.subr.mxu0 0.0
  %131 = vmatpush1.msra.mxu0 0.0
  %132 = vmatprep.subr.mxu0 0.0
  %133 = vmatpush1.msra.mxu0 0.0
  %134 = vmatprep.subr.mxu0 0.0
  %135 = vmatpush1.msra.mxu0 0.0
  %136 = vmatprep.subr.mxu0 0.0
  %137 = vmatpush1.msra.mxu0 0.0
  %138 = vmatprep.subr.mxu0 0.0
  %139 = vmatpush1.msra.mxu0 0.0
  %140 = vmatprep.subr.mxu0 0.0
  %141 = vmatpush1.msra.mxu0 0.0
  %142 = vmatprep.subr.mxu0 0.0
  %143 = vmatpush1.msra.mxu0 0.0
  %144 = vmatprep.subr.mxu0 0.0
  %145 = vmatpush1.msra.mxu0 0.0
  %146 = vmatprep.subr.mxu0 0.0
  %147 = vmatpush1.msra.mxu0 0.0
  %148 = vmatprep.subr.mxu0 0.0
  %149 = vmatpush1.msra.mxu0 0.0
  %150 = vmatprep.mubr.f32.mxu0 0.0
  %151 = vmatmul.mubr.f32.gmra.mrb[0].mxu0 %v31
  %v152 = vpop.f32.mrb[0].mxu0
  %v153 = vadd.f32 %v84, %v152
  %v154 = vpop.f32.mrb[0].mxu0
  %155 = vmatprep.mubr.f32.mxu0 0.0
  %156 = vmatmul.mubr.f32.gmra.mrb[0].mxu0 %v32
  %v157 = vpop.f32.mrb[0].mxu0
  %v158 = vadd.f32 %v84, %v157
  %v159 = vpop.f32.mrb[0].mxu0
  %160 = vmatprep.mubr.f32.mxu0 0.0
  %161 = vmatmul.mubr.f32.gmra.mrb[0].mxu0 %v33
  %v162 = vpop.f32.mrb[0].mxu0
  %v163 = vadd.f32 %v84, %v162
  %v164 = vpop.f32.mrb[0].mxu0
  %165 = vmatprep.mubr.f32.mxu0 0.0
  %166 = vmatmul.mubr.f32.gmra.mrb[0].mxu0 %v34
  %v167 = vpop.f32.mrb[0].mxu0
  %v168 = vadd.f32 %v84, %v167
  %v169 = vpop.f32.mrb[0].mxu0
  %170 = vmatprep.mubr.f32.mxu0 0.0
  %171 = vmatmul.mubr.f32.gmra.mrb[0].mxu0 %v35
  %v172 = vpop.f32.mrb[0].mxu0
  %v173 = vadd.f32 %v84, %v172
  %v174 = vpop.f32.mrb[0].mxu0
  %175 = vmatprep.mubr.f32.mxu0 0.0
  %176 = vmatmul.mubr.f32.gmra.mrb[0].mxu0 %v36
  %v177 = vpop.f32.mrb[0].mxu0
  %v178 = vadd.f32 %v84, %v177
  %v179 = vpop.f32.mrb[0].mxu0
  %180 = vmatprep.mubr.f32.mxu0 0.0
  %181 = vmatmul.mubr.f32.gmra.mrb[0].mxu0 %v37
  %v182 = vpop.f32.mrb[0].mxu0
  %v183 = vadd.f32 %v84, %v182
  %v184 = vpop.f32.mrb[0].mxu0
  %185 = vmatprep.mubr.f32.mxu0 0.0
  %186 = vmatmul.mubr.f32.gmra.mrb[0].mxu0 %v38
  %v187 = vpop.f32.mrb[0].mxu0
  %v188 = vadd.f32 %v84, %v187
  %v189 = vpop.f32.mrb[0].mxu0
  %190 = vmatprep.mubr.f32.mxu0 0.0
  %191 = vmatmul.mubr.f32.gmra.mrb[0].mxu0 %v39
  %v192 = vpop.f32.mrb[0].mxu0
  %v193 = vadd.f32 %v84, %v192
  %v194 = vpop.f32.mrb[0].mxu0
  %195 = vmatprep.mubr.f32.mxu0 0.0
  %196 = vmatmul.mubr.f32.gmra.mrb[0].mxu0 %v40
  %v197 = vpop.f32.mrb[0].mxu0
  %v198 = vadd.f32 %v84, %v197
  %v199 = vpop.f32.mrb[0].mxu0
  %200 = vmatprep.mubr.f32.mxu0 0.0
  %201 = vmatmul.mubr.f32.gmra.mrb[0].mxu0 %v41
  %v202 = vpop.f32.mrb[0].mxu0
  %v203 = vadd.f32 %v84, %v202
  %v204 = vpop.f32.mrb[0].mxu0
  %205 = vmatprep.mubr.f32.mxu0 0.0
  %206 = vmatmul.mubr.f32.gmra.mrb[0].mxu0 %v42
  %v207 = vpop.f32.mrb[0].mxu0
  %v208 = vadd.f32 %v84, %v207
  %v209 = vpop.f32.mrb[0].mxu0
  %210 = vmatprep.mubr.f32.mxu0 0.0
  %211 = vmatmul.mubr.f32.gmra.mrb[0].mxu0 %v43
  %v212 = vpop.f32.mrb[0].mxu0
  %v213 = vadd.f32 %v84, %v212
  %v214 = vpop.f32.mrb[0].mxu0
  %215 = vmatprep.mubr.f32.mxu0 0.0
  %216 = vmatmul.mubr.f32.gmra.mrb[0].mxu0 %v44
  %v217 = vpop.f32.mrb[0].mxu0
  %v218 = vadd.f32 %v84, %v217
  %v219 = vpop.f32.mrb[0].mxu0
  %220 = vmatprep.mubr.f32.mxu0 0.0
  %221 = vmatmul.mubr.f32.gmra.mrb[0].mxu0 %v45
  %v222 = vpop.f32.mrb[0].mxu0
  %v223 = vadd.f32 %v84, %v222
  %v224 = vpop.f32.mrb[0].mxu0
  %225 = vmatprep.mubr.f32.mxu0 0.0
  %226 = vmatmul.mubr.f32.gmra.mrb[0].mxu0 %v46
  %v227 = vpop.f32.mrb[0].mxu0
  %v228 = vadd.f32 %v84, %v227
  %v229 = vpop.f32.mrb[0].mxu0
  %230 = vmatprep.mubr.f32.mxu0 0.0
  %231 = vmatmul.mubr.f32.gmra.mrb[0].mxu0 %v47
  %v232 = vpop.f32.mrb[0].mxu0
  %v233 = vadd.f32 %v84, %v232
  %v234 = vpop.f32.mrb[0].mxu0
  %235 = vmatprep.mubr.f32.mxu0 0.0
  %236 = vmatmul.mubr.f32.gmra.mrb[0].mxu0 %v48
  %v237 = vpop.f32.mrb[0].mxu0
  %v238 = vadd.f32 %v84, %v237
  %v239 = vpop.f32.mrb[0].mxu0
  %240 = vmatprep.mubr.f32.mxu0 0.0
  %241 = vmatmul.mubr.f32.gmra.mrb[0].mxu0 %v49
  %v242 = vpop.f32.mrb[0].mxu0
  %v243 = vadd.f32 %v84, %v242
  %v244 = vpop.f32.mrb[0].mxu0
  %245 = vmatprep.mubr.f32.mxu0 0.0
  %246 = vmatmul.mubr.f32.gmra.mrb[0].mxu0 %v50
  %v247 = vpop.f32.mrb[0].mxu0
  %v248 = vadd.f32 %v84, %v247
  %v249 = vpop.f32.mrb[0].mxu0
  %250 = vmatprep.mubr.f32.mxu0 0.0
  %251 = vmatmul.mubr.f32.gmra.mrb[0].mxu0 %v51
  %v252 = vpop.f32.mrb[0].mxu0
  %v253 = vadd.f32 %v84, %v252
  %v254 = vpop.f32.mrb[0].mxu0
  %255 = vmatprep.mubr.f32.mxu0 0.0
  %256 = vmatmul.mubr.f32.gmra.mrb[0].mxu0 %v52
  %v257 = vpop.f32.mrb[0].mxu0
  %v258 = vadd.f32 %v84, %v257
  %v259 = vpop.f32.mrb[0].mxu0
  %260 = vmatprep.mubr.f32.mxu0 0.0
  %261 = vmatmul.mubr.f32.gmra.mrb[0].mxu0 %v53
  %v262 = vpop.f32.mrb[0].mxu0
  %v263 = vadd.f32 %v84, %v262
  %v264 = vpop.f32.mrb[0].mxu0
  %265 = vmatprep.mubr.f32.mxu0 0.0
  %266 = vmatmul.mubr.f32.gmra.mrb[0].mxu0 %v54
  %v267 = vpop.f32.mrb[0].mxu0
  %v268 = vadd.f32 %v84, %v267
  %v269 = vpop.f32.mrb[0].mxu0
  %270 = vmatprep.mubr.f32.mxu0 0.0
  %271 = vmatmul.mubr.f32.gmra.mrb[0].mxu0 %v55
  %v272 = vpop.f32.mrb[0].mxu0
  %v273 = vadd.f32 %v84, %v272
  %v274 = vpop.f32.mrb[0].mxu0
  %275 = vmatprep.mubr.f32.mxu0 0.0
  %276 = vmatmul.mubr.f32.gmra.mrb[0].mxu0 %v56
  %v277 = vpop.f32.mrb[0].mxu0
  %v278 = vadd.f32 %v84, %v277
  %v279 = vpop.f32.mrb[0].mxu0
  %280 = vmatprep.mubr.f32.mxu0 0.0
  %281 = vmatmul.mubr.f32.gmra.mrb[0].mxu0 %v57
  %v282 = vpop.f32.mrb[0].mxu0
  %v283 = vadd.f32 %v84, %v282
  %v284 = vpop.f32.mrb[0].mxu0
  %285 = vmatprep.mubr.f32.mxu0 0.0
  %286 = vmatmul.mubr.f32.gmra.mrb[0].mxu0 %v58
  %v287 = vpop.f32.mrb[0].mxu0
  %v288 = vadd.f32 %v84, %v287
  %v289 = vpop.f32.mrb[0].mxu0
  %290 = vmatprep.mubr.f32.mxu0 0.0
  %291 = vmatmul.mubr.f32.gmra.mrb[0].mxu0 %v59
  %v292 = vpop.f32.mrb[0].mxu0
  %v293 = vadd.f32 %v84, %v292
  %v294 = vpop.f32.mrb[0].mxu0
  %295 = vmatprep.mubr.f32.mxu0 0.0
  %296 = vmatmul.mubr.f32.gmra.mrb[0].mxu0 %v60
  %v297 = vpop.f32.mrb[0].mxu0
  %v298 = vadd.f32 %v84, %v297
  %v299 = vpop.f32.mrb[0].mxu0
  %300 = vmatprep.mubr.f32.mxu0 0.0
  %301 = vmatmul.mubr.f32.gmra.mrb[0].mxu0 %v61
  %v302 = vpop.f32.mrb[0].mxu0
  %v303 = vadd.f32 %v84, %v302
  %v304 = vpop.f32.mrb[0].mxu0
  %305 = vmatprep.mubr.f32.mxu0 0.0
  %306 = vmatmul.mubr.f32.gmra.mrb[0].mxu0 %v62
  %v307 = vpop.f32.mrb[0].mxu0
  %v308 = vadd.f32 %v84, %v307
  %v309 = vpop.f32.mrb[0].mxu0
  %310 = vmatprep.mubr.f32.mxu0 0.0
  %311 = vmatmul.mubr.f32.gmra.mrb[0].mxu0 %v63
  %v312 = vpop.f32.mrb[0].mxu0
  %v313 = vadd.f32 %v84, %v312
  %v314 = vpop.f32.mrb[0].mxu0
  %315 = vmatprep.mubr.f32.mxu0 0.0
  %316 = vmatmul.mubr.f32.gmra.mrb[0].mxu0 %v64
  %v317 = vpop.f32.mrb[0].mxu0
  %v318 = vadd.f32 %v84, %v317
  %v319 = vpop.f32.mrb[0].mxu0
  %320 = vmatprep.mubr.f32.mxu0 0.0
  %321 = vmatmul.mubr.f32.gmra.mrb[0].mxu0 %v65
  %v322 = vpop.f32.mrb[0].mxu0
  %v323 = vadd.f32 %v84, %v322
  %v324 = vpop.f32.mrb[0].mxu0
  %325 = vmatprep.mubr.f32.mxu0 0.0
  %326 = vmatmul.mubr.f32.gmra.mrb[0].mxu0 %v66
  %v327 = vpop.f32.mrb[0].mxu0
  %v328 = vadd.f32 %v84, %v327
  %v329 = vpop.f32.mrb[0].mxu0
  %330 = vmatprep.mubr.f32.mxu0 0.0
  %331 = vmatmul.mubr.f32.gmra.mrb[0].mxu0 %v67
  %v332 = vpop.f32.mrb[0].mxu0
  %v333 = vadd.f32 %v84, %v332
  %v334 = vpop.f32.mrb[0].mxu0
  %335 = vmatprep.mubr.f32.mxu0 0.0
  %336 = vmatmul.mubr.f32.gmra.mrb[0].mxu0 %v68
  %v337 = vpop.f32.mrb[0].mxu0
  %v338 = vadd.f32 %v84, %v337
  %v339 = vpop.f32.mrb[0].mxu0
  %340 = vmatprep.mubr.f32.mxu0 0.0
  %341 = vmatmul.mubr.f32.gmra.mrb[0].mxu0 %v69
  %v342 = vpop.f32.mrb[0].mxu0
  %v343 = vadd.f32 %v84, %v342
  %v344 = vpop.f32.mrb[0].mxu0
  %345 = vmatprep.mubr.f32.mxu0 0.0
  %346 = vmatmul.mubr.f32.gmra.mrb[0].mxu0 %v70
  %v347 = vpop.f32.mrb[0].mxu0
  %v348 = vadd.f32 %v84, %v347
  %v349 = vpop.f32.mrb[0].mxu0
  %350 = vmatprep.mubr.f32.mxu0 0.0
  %351 = vmatmul.mubr.f32.gmra.mrb[0].mxu0 %v71
  %v352 = vpop.f32.mrb[0].mxu0
  %v353 = vadd.f32 %v84, %v352
  %v354 = vpop.f32.mrb[0].mxu0
  %355 = vmatprep.mubr.f32.mxu0 0.0
  %356 = vmatmul.mubr.f32.gmra.mrb[0].mxu0 %v72
  %v357 = vpop.f32.mrb[0].mxu0
  %v358 = vadd.f32 %v84, %v357
  %v359 = vpop.f32.mrb[0].mxu0
  %360 = vmatprep.mubr.f32.mxu0 0.0
  %361 = vmatmul.mubr.f32.gmra.mrb[0].mxu0 %v73
  %v362 = vpop.f32.mrb[0].mxu0
  %v363 = vadd.f32 %v84, %v362
  %v364 = vpop.f32.mrb[0].mxu0
  %365 = vmatprep.mubr.f32.mxu0 0.0
  %366 = vmatmul.mubr.f32.gmra.mrb[0].mxu0 %v74
  %v367 = vpop.f32.mrb[0].mxu0
  %v368 = vadd.f32 %v84, %v367
  %v369 = vpop.f32.mrb[0].mxu0
  %370 = vmatprep.mubr.f32.mxu0 0.0
  %371 = vmatmul.mubr.f32.gmra.mrb[0].mxu0 %v75
  %v372 = vpop.f32.mrb[0].mxu0
  %v373 = vadd.f32 %v84, %v372
  %v374 = vpop.f32.mrb[0].mxu0
  %375 = vmatprep.mubr.f32.mxu0 0.0
  %376 = vmatmul.mubr.f32.gmra.mrb[0].mxu0 %v76
  %v377 = vpop.f32.mrb[0].mxu0
  %v378 = vadd.f32 %v84, %v377
  %v379 = vpop.f32.mrb[0].mxu0
  %380 = vmatprep.mubr.f32.mxu0 0.0
  %381 = vmatmul.mubr.f32.gmra.mrb[0].mxu0 %v77
  %v382 = vpop.f32.mrb[0].mxu0
  %v383 = vadd.f32 %v84, %v382
  %v384 = vpop.f32.mrb[0].mxu0
  %385 = vmatprep.mubr.f32.mxu0 0.0
  %386 = vmatmul.mubr.f32.gmra.mrb[0].mxu0 %v78
  %v387 = vpop.f32.mrb[0].mxu0
  %v388 = vadd.f32 %v84, %v387
  %v389 = vpop.f32.mrb[0].mxu0
  %390 = vmatprep.mubr.f32.mxu0 0.0
  %391 = vmatmul.mubr.f32.gmra.mrb[0].mxu0 %v79
  %v392 = vpop.f32.mrb[0].mxu0
  %v393 = vadd.f32 %v84, %v392
  %v394 = vpop.f32.mrb[0].mxu0
  %395 = vdwg.mxu0
  %v396 = vmax.f32 %v153, 0.0
  %v397 = vmax.f32 %v158, 0.0
  %v398 = vmax.f32 %v163, 0.0
  %v399 = vmax.f32 %v168, 0.0
  %v400 = vmax.f32 %v173, 0.0
  %v401 = vmax.f32 %v178, 0.0
  %v402 = vmax.f32 %v183, 0.0
  %v403 = vmax.f32 %v188, 0.0
  %v404 = vmax.f32 %v193, 0.0
  %v405 = vmax.f32 %v198, 0.0
  %v406 = vmax.f32 %v203, 0.0
  %v407 = vmax.f32 %v208, 0.0
  %v408 = vmax.f32 %v213, 0.0
  %v409 = vmax.f32 %v218, 0.0
  %v410 = vmax.f32 %v223, 0.0
  %v411 = vmax.f32 %v228, 0.0
  %v412 = vmax.f32 %v233, 0.0
  %v413 = vmax.f32 %v238, 0.0
  %v414 = vmax.f32 %v243, 0.0
  %v415 = vmax.f32 %v248, 0.0
  %v416 = vmax.f32 %v253, 0.0
  %v417 = vmax.f32 %v258, 0.0
  %v418 = vmax.f32 %v263, 0.0
  %v419 = vmax.f32 %v268, 0.0
  %v420 = vmax.f32 %v273, 0.0
  %v421 = vmax.f32 %v278, 0.0
  %v422 = vmax.f32 %v283, 0.0
  %v423 = vmax.f32 %v288, 0.0
  %v424 = vmax.f32 %v293, 0.0
  %v425 = vmax.f32 %v298, 0.0
  %v426 = vmax.f32 %v303, 0.0
  %v427 = vmax.f32 %v308, 0.0
  %v428 = vmax.f32 %v313, 0.0
  %v429 = vmax.f32 %v318, 0.0
  %v430 = vmax.f32 %v323, 0.0
  %v431 = vmax.f32 %v328, 0.0
  %v432 = vmax.f32 %v333, 0.0
  %v433 = vmax.f32 %v338, 0.0
  %v434 = vmax.f32 %v343, 0.0
  %v435 = vmax.f32 %v348, 0.0
  %v436 = vmax.f32 %v353, 0.0
  %v437 = vmax.f32 %v358, 0.0
  %v438 = vmax.f32 %v363, 0.0
  %v439 = vmax.f32 %v368, 0.0
  %v440 = vmax.f32 %v373, 0.0
  %v441 = vmax.f32 %v378, 0.0
  %v442 = vmax.f32 %v383, 0.0
  %v443 = vmax.f32 %v388, 0.0
  %v444 = vmax.f32 %v393, 0.0
  %s445 = scalar_lea.vmem %s0, 392
  %v446 = vld [vmem:[%s445] sm:$0xff]
  %v447 = vld [vmem:[%s445 + $0x8] sm:$0xff]
  %v448 = vld [vmem:[%s445 + $0x10] sm:$0xff]
  %v449 = vld [vmem:[%s445 + $0x18] sm:$0xff]
  %v450 = vld [vmem:[%s445 + $0x20] sm:$0xff]
  %v451 = vld [vmem:[%s445 + $0x28] sm:$0xff]
  %v452 = vld [vmem:[%s445 + $0x30] sm:$0xff]
  %v453 = vld [vmem:[%s445 + $0x38] sm:$0xff]
  %v454 = vld [vmem:[%s445 + $0x40] sm:$0xff]
  %v455 = vld [vmem:[%s445 + $0x48] sm:$0xff]
  %v456 = vld [vmem:[%s445 + $0x50] sm:$0xff]
  %v457 = vld [vmem:[%s445 + $0x58] sm:$0xff]
  %v458 = vld [vmem:[%s445 + $0x60] sm:$0xff]
  %v459 = vld [vmem:[%s445 + $0x68] sm:$0xff]
  %v460 = vld [vmem:[%s445 + $0x70] sm:$0xff]
  %v461 = vld [vmem:[%s445 + $0x78] sm:$0xff]
  %v462 = vld [vmem:[%s445 + $0x80] sm:$0xff]
  %v463 = vld [vmem:[%s445 + $0x88] sm:$0xff]
  %v464 = vld [vmem:[%s445 + $0x90] sm:$0xff]
  %v465 = vld [vmem:[%s445 + $0x98] sm:$0xff]
  %v466 = vld [vmem:[%s445 + $0xa0] sm:$0xff]
  %v467 = vld [vmem:[%s445 + $0xa8] sm:$0xff]
  %v468 = vld [vmem:[%s445 + $0xb0] sm:$0xff]
  %v469 = vld [vmem:[%s445 + $0xb8] sm:$0xff]
  %v470 = vld [vmem:[%s445 + $0xc0] sm:$0xff]
  %v471 = vld [vmem:[%s445 + $0xc8] sm:$0xff]
  %v472 = vld [vmem:[%s445 + $0xd0] sm:$0xff]
  %v473 = vld [vmem:[%s445 + $0xd8] sm:$0xff]
  %v474 = vld [vmem:[%s445 + $0xe0] sm:$0xff]
  %v475 = vld [vmem:[%s445 + $0xe8] sm:$0xff]
  %v476 = vld [vmem:[%s445 + $0xf0] sm:$0xff]
  %v477 = vld [vmem:[%s445 + $0xf8] sm:$0xff]
  %v478 = vld [vmem:[%s445 + $0x100] sm:$0xff]
  %v479 = vld [vmem:[%s445 + $0x108] sm:$0xff]
  %v480 = vld [vmem:[%s445 + $0x110] sm:$0xff]
  %v481 = vld [vmem:[%s445 + $0x118] sm:$0xff]
  %v482 = vld [vmem:[%s445 + $0x120] sm:$0xff]
  %v483 = vld [vmem:[%s445 + $0x128] sm:$0xff]
  %v484 = vld [vmem:[%s445 + $0x130] sm:$0xff]
  %v485 = vld [vmem:[%s445 + $0x138] sm:$0xff]
  %v486 = vld [vmem:[%s445 + $0x140] sm:$0xff]
  %v487 = vld [vmem:[%s445 + $0x148] sm:$0xff]
  %v488 = vld [vmem:[%s445 + $0x150] sm:$0xff]
  %v489 = vld [vmem:[%s445 + $0x158] sm:$0xff]
  %v490 = vld [vmem:[%s445 + $0x160] sm:$0xff]
  %v491 = vld [vmem:[%s445 + $0x168] sm:$0xff]
  %v492 = vld [vmem:[%s445 + $0x170] sm:$0xff]
  %v493 = vld [vmem:[%s445 + $0x178] sm:$0xff]
  %v494 = vld [vmem:[%s445 + $0x180] sm:$0xff]
  %495 = vmatprep.subr.mxu0 0.0
  %496 = vmatpush1.msra.mxu0 %v14
  %497 = vmatprep.subr.mxu0 0.0
  %498 = vmatpush1.msra.mxu0 %v15
  %499 = vmatprep.subr.mxu0 0.0
  %500 = vmatpush1.msra.mxu0 %v16
  %501 = vmatprep.subr.mxu0 0.0
  %502 = vmatpush1.msra.mxu0 %v17
  %503 = vmatprep.subr.mxu0 0.0
  %504 = vmatpush1.msra.mxu0 %v18
  %505 = vmatprep.subr.mxu0 0.0
  %506 = vmatpush1.msra.mxu0 %v19
  %507 = vmatprep.subr.mxu0 0.0
  %508 = vmatpush1.msra.mxu0 %v20
  %509 = vmatprep.subr.mxu0 0.0
  %510 = vmatpush1.msra.mxu0 %v21
  %511 = vmatprep.subr.mxu0 0.0
  %512 = vmatpush1.msra.mxu0 %v22
  %513 = vmatprep.subr.mxu0 0.0
  %514 = vmatpush1.msra.mxu0 %v23
  %515 = vmatprep.subr.mxu0 0.0
  %516 = vmatpush1.msra.mxu0 %v24
  %517 = vmatprep.subr.mxu0 0.0
  %518 = vmatpush1.msra.mxu0 %v25
  %519 = vmatprep.subr.mxu0 0.0
  %520 = vmatpush1.msra.mxu0 %v26
  %521 = vmatprep.subr.mxu0 0.0
  %522 = vmatpush1.msra.mxu0 %v27
  %523 = vmatprep.subr.mxu0 0.0
  %524 = vmatpush1.msra.mxu0 %v28
  %525 = vmatprep.subr.mxu0 0.0
  %526 = vmatpush1.msra.mxu0 %v29
  %527 = vmatprep.subr.mxu0 0.0
  %528 = vmatpush1.msra.mxu0 0.0
  %529 = vmatprep.subr.mxu0 0.0
  %530 = vmatpush1.msra.mxu0 0.0
  %531 = vmatprep.subr.mxu0 0.0
  %532 = vmatpush1.msra.mxu0 0.0
  %533 = vmatprep.subr.mxu0 0.0
  %534 = vmatpush1.msra.mxu0 0.0
  %535 = vmatprep.subr.mxu0 0.0
  %536 = vmatpush1.msra.mxu0 0.0
  %537 = vmatprep.subr.mxu0 0.0
  %538 = vmatpush1.msra.mxu0 0.0
  %539 = vmatprep.subr.mxu0 0.0
  %540 = vmatpush1.msra.mxu0 0.0
  %541 = vmatprep.subr.mxu0 0.0
  %542 = vmatpush1.msra.mxu0 0.0
  %543 = vmatprep.subr.mxu0 0.0
  %544 = vmatpush1.msra.mxu0 0.0
  %545 = vmatprep.subr.mxu0 0.0
  %546 = vmatpush1.msra.mxu0 0.0
  %547 = vmatprep.subr.mxu0 0.0
  %548 = vmatpush1.msra.mxu0 0.0
  %549 = vmatprep.subr.mxu0 0.0
  %550 = vmatpush1.msra.mxu0 0.0
  %551 = vmatprep.subr.mxu0 0.0
  %552 = vmatpush1.msra.mxu0 0.0
  %553 = vmatprep.subr.mxu0 0.0
  %554 = vmatpush1.msra.mxu0 0.0
  %555 = vmatprep.subr.mxu0 0.0
  %556 = vmatpush1.msra.mxu0 0.0
  %557 = vmatprep.subr.mxu0 0.0
  %558 = vmatpush1.msra.mxu0 0.0
  %559 = vmatprep.mubr.f32.mxu0 0.0
  %560 = vmatmul.mubr.f32.gmra.mrb[0].mxu0 %v446
  %v561 = vpop.f32.mrb[0].mxu0
  %v562 = vadd.f32 %v84, %v561
  %v563 = vpop.f32.mrb[0].mxu0
  %564 = vmatprep.mubr.f32.mxu0 0.0
  %565 = vmatmul.mubr.f32.gmra.mrb[0].mxu0 %v447
  %v566 = vpop.f32.mrb[0].mxu0
  %v567 = vadd.f32 %v84, %v566
  %v568 = vpop.f32.mrb[0].mxu0
  %569 = vmatprep.mubr.f32.mxu0 0.0
  %570 = vmatmul.mubr.f32.gmra.mrb[0].mxu0 %v448
  %v571 = vpop.f32.mrb[0].mxu0
  %v572 = vadd.f32 %v84, %v571
  %v573 = vpop.f32.mrb[0].mxu0
  %574 = vmatprep.mubr.f32.mxu0 0.0
  %575 = vmatmul.mubr.f32.gmra.mrb[0].mxu0 %v449
  %v576 = vpop.f32.mrb[0].mxu0
  %v577 = vadd.f32 %v84, %v576
  %v578 = vpop.f32.mrb[0].mxu0
  %579 = vmatprep.mubr.f32.mxu0 0.0
  %580 = vmatmul.mubr.f32.gmra.mrb[0].mxu0 %v450
  %v581 = vpop.f32.mrb[0].mxu0
  %v582 = vadd.f32 %v84, %v581
  %v583 = vpop.f32.mrb[0].mxu0
  %584 = vmatprep.mubr.f32.mxu0 0.0
  %585 = vmatmul.mubr.f32.gmra.mrb[0].mxu0 %v451
  %v586 = vpop.f32.mrb[0].mxu0
  %v587 = vadd.f32 %v84, %v586
  %v588 = vpop.f32.mrb[0].mxu0
  %589 = vmatprep.mubr.f32.mxu0 0.0
  %590 = vmatmul.mubr.f32.gmra.mrb[0].mxu0 %v452
  %v591 = vpop.f32.mrb[0].mxu0
  %v592 = vadd.f32 %v84, %v591
  %v593 = vpop.f32.mrb[0].mxu0
  %594 = vmatprep.mubr.f32.mxu0 0.0
  %595 = vmatmul.mubr.f32.gmra.mrb[0].mxu0 %v453
  %v596 = vpop.f32.mrb[0].mxu0
  %v597 = vadd.f32 %v84, %v596
  %v598 = vpop.f32.mrb[0].mxu0
  %599 = vmatprep.mubr.f32.mxu0 0.0
  %600 = vmatmul.mubr.f32.gmra.mrb[0].mxu0 %v454
  %v601 = vpop.f32.mrb[0].mxu0
  %v602 = vadd.f32 %v84, %v601
  %v603 = vpop.f32.mrb[0].mxu0
  %604 = vmatprep.mubr.f32.mxu0 0.0
  %605 = vmatmul.mubr.f32.gmra.mrb[0].mxu0 %v455
  %v606 = vpop.f32.mrb[0].mxu0
  %v607 = vadd.f32 %v84, %v606
  %v608 = vpop.f32.mrb[0].mxu0
  %609 = vmatprep.mubr.f32.mxu0 0.0
  %610 = vmatmul.mubr.f32.gmra.mrb[0].mxu0 %v456
  %v611 = vpop.f32.mrb[0].mxu0
  %v612 = vadd.f32 %v84, %v611
  %v613 = vpop.f32.mrb[0].mxu0
  %614 = vmatprep.mubr.f32.mxu0 0.0
  %615 = vmatmul.mubr.f32.gmra.mrb[0].mxu0 %v457
  %v616 = vpop.f32.mrb[0].mxu0
  %v617 = vadd.f32 %v84, %v616
  %v618 = vpop.f32.mrb[0].mxu0
  %619 = vmatprep.mubr.f32.mxu0 0.0
  %620 = vmatmul.mubr.f32.gmra.mrb[0].mxu0 %v458
  %v621 = vpop.f32.mrb[0].mxu0
  %v622 = vadd.f32 %v84, %v621
  %v623 = vpop.f32.mrb[0].mxu0
  %624 = vmatprep.mubr.f32.mxu0 0.0
  %625 = vmatmul.mubr.f32.gmra.mrb[0].mxu0 %v459
  %v626 = vpop.f32.mrb[0].mxu0
  %v627 = vadd.f32 %v84, %v626
  %v628 = vpop.f32.mrb[0].mxu0
  %629 = vmatprep.mubr.f32.mxu0 0.0
  %630 = vmatmul.mubr.f32.gmra.mrb[0].mxu0 %v460
  %v631 = vpop.f32.mrb[0].mxu0
  %v632 = vadd.f32 %v84, %v631
  %v633 = vpop.f32.mrb[0].mxu0
  %634 = vmatprep.mubr.f32.mxu0 0.0
  %635 = vmatmul.mubr.f32.gmra.mrb[0].mxu0 %v461
  %v636 = vpop.f32.mrb[0].mxu0
  %v637 = vadd.f32 %v84, %v636
  %v638 = vpop.f32.mrb[0].mxu0
  %639 = vmatprep.mubr.f32.mxu0 0.0
  %640 = vmatmul.mubr.f32.gmra.mrb[0].mxu0 %v462
  %v641 = vpop.f32.mrb[0].mxu0
  %v642 = vadd.f32 %v84, %v641
  %v643 = vpop.f32.mrb[0].mxu0
  %644 = vmatprep.mubr.f32.mxu0 0.0
  %645 = vmatmul.mubr.f32.gmra.mrb[0].mxu0 %v463
  %v646 = vpop.f32.mrb[0].mxu0
  %v647 = vadd.f32 %v84, %v646
  %v648 = vpop.f32.mrb[0].mxu0
  %649 = vmatprep.mubr.f32.mxu0 0.0
  %650 = vmatmul.mubr.f32.gmra.mrb[0].mxu0 %v464
  %v651 = vpop.f32.mrb[0].mxu0
  %v652 = vadd.f32 %v84, %v651
  %v653 = vpop.f32.mrb[0].mxu0
  %654 = vmatprep.mubr.f32.mxu0 0.0
  %655 = vmatmul.mubr.f32.gmra.mrb[0].mxu0 %v465
  %v656 = vpop.f32.mrb[0].mxu0
  %v657 = vadd.f32 %v84, %v656
  %v658 = vpop.f32.mrb[0].mxu0
  %659 = vmatprep.mubr.f32.mxu0 0.0
  %660 = vmatmul.mubr.f32.gmra.mrb[0].mxu0 %v466
  %v661 = vpop.f32.mrb[0].mxu0
  %v662 = vadd.f32 %v84, %v661
  %v663 = vpop.f32.mrb[0].mxu0
  %664 = vmatprep.mubr.f32.mxu0 0.0
  %665 = vmatmul.mubr.f32.gmra.mrb[0].mxu0 %v467
  %v666 = vpop.f32.mrb[0].mxu0
  %v667 = vadd.f32 %v84, %v666
  %v668 = vpop.f32.mrb[0].mxu0
  %669 = vmatprep.mubr.f32.mxu0 0.0
  %670 = vmatmul.mubr.f32.gmra.mrb[0].mxu0 %v468
  %v671 = vpop.f32.mrb[0].mxu0
  %v672 = vadd.f32 %v84, %v671
  %v673 = vpop.f32.mrb[0].mxu0
  %674 = vmatprep.mubr.f32.mxu0 0.0
  %675 = vmatmul.mubr.f32.gmra.mrb[0].mxu0 %v469
  %v676 = vpop.f32.mrb[0].mxu0
  %v677 = vadd.f32 %v84, %v676
  %v678 = vpop.f32.mrb[0].mxu0
  %679 = vmatprep.mubr.f32.mxu0 0.0
  %680 = vmatmul.mubr.f32.gmra.mrb[0].mxu0 %v470
  %v681 = vpop.f32.mrb[0].mxu0
  %v682 = vadd.f32 %v84, %v681
  %v683 = vpop.f32.mrb[0].mxu0
  %684 = vmatprep.mubr.f32.mxu0 0.0
  %685 = vmatmul.mubr.f32.gmra.mrb[0].mxu0 %v471
  %v686 = vpop.f32.mrb[0].mxu0
  %v687 = vadd.f32 %v84, %v686
  %v688 = vpop.f32.mrb[0].mxu0
  %689 = vmatprep.mubr.f32.mxu0 0.0
  %690 = vmatmul.mubr.f32.gmra.mrb[0].mxu0 %v472
  %v691 = vpop.f32.mrb[0].mxu0
  %v692 = vadd.f32 %v84, %v691
  %v693 = vpop.f32.mrb[0].mxu0
  %694 = vmatprep.mubr.f32.mxu0 0.0
  %695 = vmatmul.mubr.f32.gmra.mrb[0].mxu0 %v473
  %v696 = vpop.f32.mrb[0].mxu0
  %v697 = vadd.f32 %v84, %v696
  %v698 = vpop.f32.mrb[0].mxu0
  %699 = vmatprep.mubr.f32.mxu0 0.0
  %700 = vmatmul.mubr.f32.gmra.mrb[0].mxu0 %v474
  %v701 = vpop.f32.mrb[0].mxu0
  %v702 = vadd.f32 %v84, %v701
  %v703 = vpop.f32.mrb[0].mxu0
  %704 = vmatprep.mubr.f32.mxu0 0.0
  %705 = vmatmul.mubr.f32.gmra.mrb[0].mxu0 %v475
  %v706 = vpop.f32.mrb[0].mxu0
  %v707 = vadd.f32 %v84, %v706
  %v708 = vpop.f32.mrb[0].mxu0
  %709 = vmatprep.mubr.f32.mxu0 0.0
  %710 = vmatmul.mubr.f32.gmra.mrb[0].mxu0 %v476
  %v711 = vpop.f32.mrb[0].mxu0
  %v712 = vadd.f32 %v84, %v711
  %v713 = vpop.f32.mrb[0].mxu0
  %714 = vmatprep.mubr.f32.mxu0 0.0
  %715 = vmatmul.mubr.f32.gmra.mrb[0].mxu0 %v477
  %v716 = vpop.f32.mrb[0].mxu0
  %v717 = vadd.f32 %v84, %v716
  %v718 = vpop.f32.mrb[0].mxu0
  %719 = vmatprep.mubr.f32.mxu0 0.0
  %720 = vmatmul.mubr.f32.gmra.mrb[0].mxu0 %v478
  %v721 = vpop.f32.mrb[0].mxu0
  %v722 = vadd.f32 %v84, %v721
  %v723 = vpop.f32.mrb[0].mxu0
  %724 = vmatprep.mubr.f32.mxu0 0.0
  %725 = vmatmul.mubr.f32.gmra.mrb[0].mxu0 %v479
  %v726 = vpop.f32.mrb[0].mxu0
  %v727 = vadd.f32 %v84, %v726
  %v728 = vpop.f32.mrb[0].mxu0
  %729 = vmatprep.mubr.f32.mxu0 0.0
  %730 = vmatmul.mubr.f32.gmra.mrb[0].mxu0 %v480
  %v731 = vpop.f32.mrb[0].mxu0
  %v732 = vadd.f32 %v84, %v731
  %v733 = vpop.f32.mrb[0].mxu0
  %734 = vmatprep.mubr.f32.mxu0 0.0
  %735 = vmatmul.mubr.f32.gmra.mrb[0].mxu0 %v481
  %v736 = vpop.f32.mrb[0].mxu0
  %v737 = vadd.f32 %v84, %v736
  %v738 = vpop.f32.mrb[0].mxu0
  %739 = vmatprep.mubr.f32.mxu0 0.0
  %740 = vmatmul.mubr.f32.gmra.mrb[0].mxu0 %v482
  %v741 = vpop.f32.mrb[0].mxu0
  %v742 = vadd.f32 %v84, %v741
  %v743 = vpop.f32.mrb[0].mxu0
  %744 = vmatprep.mubr.f32.mxu0 0.0
  %745 = vmatmul.mubr.f32.gmra.mrb[0].mxu0 %v483
  %v746 = vpop.f32.mrb[0].mxu0
  %v747 = vadd.f32 %v84, %v746
  %v748 = vpop.f32.mrb[0].mxu0
  %749 = vmatprep.mubr.f32.mxu0 0.0
  %750 = vmatmul.mubr.f32.gmra.mrb[0].mxu0 %v484
  %v751 = vpop.f32.mrb[0].mxu0
  %v752 = vadd.f32 %v84, %v751
  %v753 = vpop.f32.mrb[0].mxu0
  %754 = vmatprep.mubr.f32.mxu0 0.0
  %755 = vmatmul.mubr.f32.gmra.mrb[0].mxu0 %v485
  %v756 = vpop.f32.mrb[0].mxu0
  %v757 = vadd.f32 %v84, %v756
  %v758 = vpop.f32.mrb[0].mxu0
  %759 = vmatprep.mubr.f32.mxu0 0.0
  %760 = vmatmul.mubr.f32.gmra.mrb[0].mxu0 %v486
  %v761 = vpop.f32.mrb[0].mxu0
  %v762 = vadd.f32 %v84, %v761
  %v763 = vpop.f32.mrb[0].mxu0
  %764 = vmatprep.mubr.f32.mxu0 0.0
  %765 = vmatmul.mubr.f32.gmra.mrb[0].mxu0 %v487
  %v766 = vpop.f32.mrb[0].mxu0
  %v767 = vadd.f32 %v84, %v766
  %v768 = vpop.f32.mrb[0].mxu0
  %769 = vmatprep.mubr.f32.mxu0 0.0
  %770 = vmatmul.mubr.f32.gmra.mrb[0].mxu0 %v488
  %v771 = vpop.f32.mrb[0].mxu0
  %v772 = vadd.f32 %v84, %v771
  %v773 = vpop.f32.mrb[0].mxu0
  %774 = vmatprep.mubr.f32.mxu0 0.0
  %775 = vmatmul.mubr.f32.gmra.mrb[0].mxu0 %v489
  %v776 = vpop.f32.mrb[0].mxu0
  %v777 = vadd.f32 %v84, %v776
  %v778 = vpop.f32.mrb[0].mxu0
  %779 = vmatprep.mubr.f32.mxu0 0.0
  %780 = vmatmul.mubr.f32.gmra.mrb[0].mxu0 %v490
  %v781 = vpop.f32.mrb[0].mxu0
  %v782 = vadd.f32 %v84, %v781
  %v783 = vpop.f32.mrb[0].mxu0
  %784 = vmatprep.mubr.f32.mxu0 0.0
  %785 = vmatmul.mubr.f32.gmra.mrb[0].mxu0 %v491
  %v786 = vpop.f32.mrb[0].mxu0
  %v787 = vadd.f32 %v84, %v786
  %v788 = vpop.f32.mrb[0].mxu0
  %789 = vmatprep.mubr.f32.mxu0 0.0
  %790 = vmatmul.mubr.f32.gmra.mrb[0].mxu0 %v492
  %v791 = vpop.f32.mrb[0].mxu0
  %v792 = vadd.f32 %v84, %v791
  %v793 = vpop.f32.mrb[0].mxu0
  %794 = vmatprep.mubr.f32.mxu0 0.0
  %795 = vmatmul.mubr.f32.gmra.mrb[0].mxu0 %v493
  %v796 = vpop.f32.mrb[0].mxu0
  %v797 = vadd.f32 %v84, %v796
  %v798 = vpop.f32.mrb[0].mxu0
  %799 = vmatprep.mubr.f32.mxu0 0.0
  %800 = vmatmul.mubr.f32.gmra.mrb[0].mxu0 %v494
  %v801 = vpop.f32.mrb[0].mxu0
  %v802 = vadd.f32 %v84, %v801
  %v803 = vpop.f32.mrb[0].mxu0
  %804 = vdwg.mxu0
  %v805 = vmax.f32 %v562, 0.0
  %v806 = vmax.f32 %v567, 0.0
  %v807 = vmax.f32 %v572, 0.0
  %v808 = vmax.f32 %v577, 0.0
  %v809 = vmax.f32 %v582, 0.0
  %v810 = vmax.f32 %v587, 0.0
  %v811 = vmax.f32 %v592, 0.0
  %v812 = vmax.f32 %v597, 0.0
  %v813 = vmax.f32 %v602, 0.0
  %v814 = vmax.f32 %v607, 0.0
  %v815 = vmax.f32 %v612, 0.0
  %v816 = vmax.f32 %v617, 0.0
  %v817 = vmax.f32 %v622, 0.0
  %v818 = vmax.f32 %v627, 0.0
  %v819 = vmax.f32 %v632, 0.0
  %v820 = vmax.f32 %v637, 0.0
  %v821 = vmax.f32 %v642, 0.0
  %v822 = vmax.f32 %v647, 0.0
  %v823 = vmax.f32 %v652, 0.0
  %v824 = vmax.f32 %v657, 0.0
  %v825 = vmax.f32 %v662, 0.0
  %v826 = vmax.f32 %v667, 0.0
  %v827 = vmax.f32 %v672, 0.0
  %v828 = vmax.f32 %v677, 0.0
  %v829 = vmax.f32 %v682, 0.0
  %v830 = vmax.f32 %v687, 0.0
  %v831 = vmax.f32 %v692, 0.0
  %v832 = vmax.f32 %v697, 0.0
  %v833 = vmax.f32 %v702, 0.0
  %v834 = vmax.f32 %v707, 0.0
  %v835 = vmax.f32 %v712, 0.0
  %v836 = vmax.f32 %v717, 0.0
  %v837 = vmax.f32 %v722, 0.0
  %v838 = vmax.f32 %v727, 0.0
  %v839 = vmax.f32 %v732, 0.0
  %v840 = vmax.f32 %v737, 0.0
  %v841 = vmax.f32 %v742, 0.0
  %v842 = vmax.f32 %v747, 0.0
  %v843 = vmax.f32 %v752, 0.0
  %v844 = vmax.f32 %v757, 0.0
  %v845 = vmax.f32 %v762, 0.0
  %v846 = vmax.f32 %v767, 0.0
  %v847 = vmax.f32 %v772, 0.0
  %v848 = vmax.f32 %v777, 0.0
  %v849 = vmax.f32 %v782, 0.0
  %v850 = vmax.f32 %v787, 0.0
  %v851 = vmax.f32 %v792, 0.0
  %v852 = vmax.f32 %v797, 0.0
  %v853 = vmax.f32 %v802, 0.0
  %v854 = vmax.f32 %v396, %v805
  %v855 = vmax.f32 %v397, %v806
  %v856 = vmax.f32 %v398, %v807
  %v857 = vmax.f32 %v399, %v808
  %v858 = vmax.f32 %v400, %v809
  %v859 = vmax.f32 %v401, %v810
  %v860 = vmax.f32 %v402, %v811
  %v861 = vmax.f32 %v403, %v812
  %v862 = vmax.f32 %v404, %v813
  %v863 = vmax.f32 %v405, %v814
  %v864 = vmax.f32 %v406, %v815
  %v865 = vmax.f32 %v407, %v816
  %v866 = vmax.f32 %v408, %v817
  %v867 = vmax.f32 %v409, %v818
  %v868 = vmax.f32 %v410, %v819
  %v869 = vmax.f32 %v411, %v820
  %v870 = vmax.f32 %v412, %v821
  %v871 = vmax.f32 %v413, %v822
  %v872 = vmax.f32 %v414, %v823
  %v873 = vmax.f32 %v415, %v824
  %v874 = vmax.f32 %v416, %v825
  %v875 = vmax.f32 %v417, %v826
  %v876 = vmax.f32 %v418, %v827
  %v877 = vmax.f32 %v419, %v828
  %v878 = vmax.f32 %v420, %v829
  %v879 = vmax.f32 %v421, %v830
  %v880 = vmax.f32 %v422, %v831
  %v881 = vmax.f32 %v423, %v832
  %v882 = vmax.f32 %v424, %v833
  %v883 = vmax.f32 %v425, %v834
  %v884 = vmax.f32 %v426, %v835
  %v885 = vmax.f32 %v427, %v836
  %v886 = vmax.f32 %v428, %v837
  %v887 = vmax.f32 %v429, %v838
  %v888 = vmax.f32 %v430, %v839
  %v889 = vmax.f32 %v431, %v840
  %v890 = vmax.f32 %v432, %v841
  %v891 = vmax.f32 %v433, %v842
  %v892 = vmax.f32 %v434, %v843
  %v893 = vmax.f32 %v435, %v844
  %v894 = vmax.f32 %v436, %v845
  %v895 = vmax.f32 %v437, %v846
  %v896 = vmax.f32 %v438, %v847
  %v897 = vmax.f32 %v439, %v848
  %v898 = vmax.f32 %v440, %v849
  %v899 = vmax.f32 %v441, %v850
  %v900 = vmax.f32 %v442, %v851
  %v901 = vmax.f32 %v443, %v852
  %v902 = vmax.f32 %v444, %v853
  %s903 = scalar_lea.vmem %s0, 784
  %v904 = vld [vmem:[%s903] sm:$0xff]
  %v905 = vld [vmem:[%s903 + $0x8] sm:$0xff]
  %v906 = vld [vmem:[%s903 + $0x10] sm:$0xff]
  %v907 = vld [vmem:[%s903 + $0x18] sm:$0xff]
  %v908 = vld [vmem:[%s903 + $0x20] sm:$0xff]
  %v909 = vld [vmem:[%s903 + $0x28] sm:$0xff]
  %v910 = vld [vmem:[%s903 + $0x30] sm:$0xff]
  %v911 = vld [vmem:[%s903 + $0x38] sm:$0xff]
  %v912 = vld [vmem:[%s903 + $0x40] sm:$0xff]
  %v913 = vld [vmem:[%s903 + $0x48] sm:$0xff]
  %v914 = vld [vmem:[%s903 + $0x50] sm:$0xff]
  %v915 = vld [vmem:[%s903 + $0x58] sm:$0xff]
  %v916 = vld [vmem:[%s903 + $0x60] sm:$0xff]
  %v917 = vld [vmem:[%s903 + $0x68] sm:$0xff]
  %v918 = vld [vmem:[%s903 + $0x70] sm:$0xff]
  %v919 = vld [vmem:[%s903 + $0x78] sm:$0xff]
  %v920 = vld [vmem:[%s903 + $0x80] sm:$0xff]
  %v921 = vld [vmem:[%s903 + $0x88] sm:$0xff]
  %v922 = vld [vmem:[%s903 + $0x90] sm:$0xff]
  %v923 = vld [vmem:[%s903 + $0x98] sm:$0xff]
  %v924 = vld [vmem:[%s903 + $0xa0] sm:$0xff]
  %v925 = vld [vmem:[%s903 + $0xa8] sm:$0xff]
  %v926 = vld [vmem:[%s903 + $0xb0] sm:$0xff]
  %v927 = vld [vmem:[%s903 + $0xb8] sm:$0xff]
  %v928 = vld [vmem:[%s903 + $0xc0] sm:$0xff]
  %v929 = vld [vmem:[%s903 + $0xc8] sm:$0xff]
  %v930 = vld [vmem:[%s903 + $0xd0] sm:$0xff]
  %v931 = vld [vmem:[%s903 + $0xd8] sm:$0xff]
  %v932 = vld [vmem:[%s903 + $0xe0] sm:$0xff]
  %v933 = vld [vmem:[%s903 + $0xe8] sm:$0xff]
  %v934 = vld [vmem:[%s903 + $0xf0] sm:$0xff]
  %v935 = vld [vmem:[%s903 + $0xf8] sm:$0xff]
  %v936 = vld [vmem:[%s903 + $0x100] sm:$0xff]
  %v937 = vld [vmem:[%s903 + $0x108] sm:$0xff]
  %v938 = vld [vmem:[%s903 + $0x110] sm:$0xff]
  %v939 = vld [vmem:[%s903 + $0x118] sm:$0xff]
  %v940 = vld [vmem:[%s903 + $0x120] sm:$0xff]
  %v941 = vld [vmem:[%s903 + $0x128] sm:$0xff]
  %v942 = vld [vmem:[%s903 + $0x130] sm:$0xff]
  %v943 = vld [vmem:[%s903 + $0x138] sm:$0xff]
  %v944 = vld [vmem:[%s903 + $0x140] sm:$0xff]
  %v945 = vld [vmem:[%s903 + $0x148] sm:$0xff]
  %v946 = vld [vmem:[%s903 + $0x150] sm:$0xff]
  %v947 = vld [vmem:[%s903 + $0x158] sm:$0xff]
  %v948 = vld [vmem:[%s903 + $0x160] sm:$0xff]
  %v949 = vld [vmem:[%s903 + $0x168] sm:$0xff]
  %v950 = vld [vmem:[%s903 + $0x170] sm:$0xff]
  %v951 = vld [vmem:[%s903 + $0x178] sm:$0xff]
  %v952 = vld [vmem:[%s903 + $0x180] sm:$0xff]
  %953 = vmatprep.subr.mxu0 0.0
  %954 = vmatpush1.msra.mxu0 %v14
  %955 = vmatprep.subr.mxu0 0.0
  %956 = vmatpush1.msra.mxu0 %v15
  %957 = vmatprep.subr.mxu0 0.0
  %958 = vmatpush1.msra.mxu0 %v16
  %959 = vmatprep.subr.mxu0 0.0
  %960 = vmatpush1.msra.mxu0 %v17
  %961 = vmatprep.subr.mxu0 0.0
  %962 = vmatpush1.msra.mxu0 %v18
  %963 = vmatprep.subr.mxu0 0.0
  %964 = vmatpush1.msra.mxu0 %v19
  %965 = vmatprep.subr.mxu0 0.0
  %966 = vmatpush1.msra.mxu0 %v20
  %967 = vmatprep.subr.mxu0 0.0
  %968 = vmatpush1.msra.mxu0 %v21
  %969 = vmatprep.subr.mxu0 0.0
  %970 = vmatpush1.msra.mxu0 %v22
  %971 = vmatprep.subr.mxu0 0.0
  %972 = vmatpush1.msra.mxu0 %v23
  %973 = vmatprep.subr.mxu0 0.0
  %974 = vmatpush1.msra.mxu0 %v24
  %975 = vmatprep.subr.mxu0 0.0
  %976 = vmatpush1.msra.mxu0 %v25
  %977 = vmatprep.subr.mxu0 0.0
  %978 = vmatpush1.msra.mxu0 %v26
  %979 = vmatprep.subr.mxu0 0.0
  %980 = vmatpush1.msra.mxu0 %v27
  %981 = vmatprep.subr.mxu0 0.0
  %982 = vmatpush1.msra.mxu0 %v28
  %983 = vmatprep.subr.mxu0 0.0
  %984 = vmatpush1.msra.mxu0 %v29
  %985 = vmatprep.subr.mxu0 0.0
  %986 = vmatpush1.msra.mxu0 0.0
  %987 = vmatprep.subr.mxu0 0.0
  %988 = vmatpush1.msra.mxu0 0.0
  %989 = vmatprep.subr.mxu0 0.0
  %990 = vmatpush1.msra.mxu0 0.0
  %991 = vmatprep.subr.mxu0 0.0
  %992 = vmatpush1.msra.mxu0 0.0
  %993 = vmatprep.subr.mxu0 0.0
  %994 = vmatpush1.msra.mxu0 0.0
  %995 = vmatprep.subr.mxu0 0.0
  %996 = vmatpush1.msra.mxu0 0.0
  %997 = vmatprep.subr.mxu0 0.0
  %998 = vmatpush1.msra.mxu0 0.0
  %999 = vmatprep.subr.mxu0 0.0
  %1000 = vmatpush1.msra.mxu0 0.0
  %1001 = vmatprep.subr.mxu0 0.0
  %1002 = vmatpush1.msra.mxu0 0.0
  %1003 = vmatprep.subr.mxu0 0.0
  %1004 = vmatpush1.msra.mxu0 0.0
  %1005 = vmatprep.subr.mxu0 0.0
  %1006 = vmatpush1.msra.mxu0 0.0
  %1007 = vmatprep.subr.mxu0 0.0
  %1008 = vmatpush1.msra.mxu0 0.0
  %1009 = vmatprep.subr.mxu0 0.0
  %1010 = vmatpush1.msra.mxu0 0.0
  %1011 = vmatprep.subr.mxu0 0.0
  %1012 = vmatpush1.msra.mxu0 0.0
  %1013 = vmatprep.subr.mxu0 0.0
  %1014 = vmatpush1.msra.mxu0 0.0
  %1015 = vmatprep.subr.mxu0 0.0
  %1016 = vmatpush1.msra.mxu0 0.0
  %1017 = vmatprep.mubr.f32.mxu0 0.0
  %1018 = vmatmul.mubr.f32.gmra.mrb[0].mxu0 %v904
  %v1019 = vpop.f32.mrb[0].mxu0
  %v1020 = vadd.f32 %v84, %v1019
  %v1021 = vpop.f32.mrb[0].mxu0
  %1022 = vmatprep.mubr.f32.mxu0 0.0
  %1023 = vmatmul.mubr.f32.gmra.mrb[0].mxu0 %v905
  %v1024 = vpop.f32.mrb[0].mxu0
  %v1025 = vadd.f32 %v84, %v1024
  %v1026 = vpop.f32.mrb[0].mxu0
  %1027 = vmatprep.mubr.f32.mxu0 0.0
  %1028 = vmatmul.mubr.f32.gmra.mrb[0].mxu0 %v906
  %v1029 = vpop.f32.mrb[0].mxu0
  %v1030 = vadd.f32 %v84, %v1029
  %v1031 = vpop.f32.mrb[0].mxu0
  %1032 = vmatprep.mubr.f32.mxu0 0.0
  %1033 = vmatmul.mubr.f32.gmra.mrb[0].mxu0 %v907
  %v1034 = vpop.f32.mrb[0].mxu0
  %v1035 = vadd.f32 %v84, %v1034
  %v1036 = vpop.f32.mrb[0].mxu0
  %1037 = vmatprep.mubr.f32.mxu0 0.0
  %1038 = vmatmul.mubr.f32.gmra.mrb[0].mxu0 %v908
  %v1039 = vpop.f32.mrb[0].mxu0
  %v1040 = vadd.f32 %v84, %v1039
  %v1041 = vpop.f32.mrb[0].mxu0
  %1042 = vmatprep.mubr.f32.mxu0 0.0
  %1043 = vmatmul.mubr.f32.gmra.mrb[0].mxu0 %v909
  %v1044 = vpop.f32.mrb[0].mxu0
  %v1045 = vadd.f32 %v84, %v1044
  %v1046 = vpop.f32.mrb[0].mxu0
  %1047 = vmatprep.mubr.f32.mxu0 0.0
  %1048 = vmatmul.mubr.f32.gmra.mrb[0].mxu0 %v910
  %v1049 = vpop.f32.mrb[0].mxu0
  %v1050 = vadd.f32 %v84, %v1049
  %v1051 = vpop.f32.mrb[0].mxu0
  %1052 = vmatprep.mubr.f32.mxu0 0.0
  %1053 = vmatmul.mubr.f32.gmra.mrb[0].mxu0 %v911
  %v1054 = vpop.f32.mrb[0].mxu0
  %v1055 = vadd.f32 %v84, %v1054
  %v1056 = vpop.f32.mrb[0].mxu0
  %1057 = vmatprep.mubr.f32.mxu0 0.0
  %1058 = vmatmul.mubr.f32.gmra.mrb[0].mxu0 %v912
  %v1059 = vpop.f32.mrb[0].mxu0
  %v1060 = vadd.f32 %v84, %v1059
  %v1061 = vpop.f32.mrb[0].mxu0
  %1062 = vmatprep.mubr.f32.mxu0 0.0
  %1063 = vmatmul.mubr.f32.gmra.mrb[0].mxu0 %v913
  %v1064 = vpop.f32.mrb[0].mxu0
  %v1065 = vadd.f32 %v84, %v1064
  %v1066 = vpop.f32.mrb[0].mxu0
  %1067 = vmatprep.mubr.f32.mxu0 0.0
  %1068 = vmatmul.mubr.f32.gmra.mrb[0].mxu0 %v914
  %v1069 = vpop.f32.mrb[0].mxu0
  %v1070 = vadd.f32 %v84, %v1069
  %v1071 = vpop.f32.mrb[0].mxu0
  %1072 = vmatprep.mubr.f32.mxu0 0.0
  %1073 = vmatmul.mubr.f32.gmra.mrb[0].mxu0 %v915
  %v1074 = vpop.f32.mrb[0].mxu0
  %v1075 = vadd.f32 %v84, %v1074
  %v1076 = vpop.f32.mrb[0].mxu0
  %1077 = vmatprep.mubr.f32.mxu0 0.0
  %1078 = vmatmul.mubr.f32.gmra.mrb[0].mxu0 %v916
  %v1079 = vpop.f32.mrb[0].mxu0
  %v1080 = vadd.f32 %v84, %v1079
  %v1081 = vpop.f32.mrb[0].mxu0
  %1082 = vmatprep.mubr.f32.mxu0 0.0
  %1083 = vmatmul.mubr.f32.gmra.mrb[0].mxu0 %v917
  %v1084 = vpop.f32.mrb[0].mxu0
  %v1085 = vadd.f32 %v84, %v1084
  %v1086 = vpop.f32.mrb[0].mxu0
  %1087 = vmatprep.mubr.f32.mxu0 0.0
  %1088 = vmatmul.mubr.f32.gmra.mrb[0].mxu0 %v918
  %v1089 = vpop.f32.mrb[0].mxu0
  %v1090 = vadd.f32 %v84, %v1089
  %v1091 = vpop.f32.mrb[0].mxu0
  %1092 = vmatprep.mubr.f32.mxu0 0.0
  %1093 = vmatmul.mubr.f32.gmra.mrb[0].mxu0 %v919
  %v1094 = vpop.f32.mrb[0].mxu0
  %v1095 = vadd.f32 %v84, %v1094
  %v1096 = vpop.f32.mrb[0].mxu0
  %1097 = vmatprep.mubr.f32.mxu0 0.0
  %1098 = vmatmul.mubr.f32.gmra.mrb[0].mxu0 %v920
  %v1099 = vpop.f32.mrb[0].mxu0
  %v1100 = vadd.f32 %v84, %v1099
  %v1101 = vpop.f32.mrb[0].mxu0
  %1102 = vmatprep.mubr.f32.mxu0 0.0
  %1103 = vmatmul.mubr.f32.gmra.mrb[0].mxu0 %v921
  %v1104 = vpop.f32.mrb[0].mxu0
  %v1105 = vadd.f32 %v84, %v1104
  %v1106 = vpop.f32.mrb[0].mxu0
  %1107 = vmatprep.mubr.f32.mxu0 0.0
  %1108 = vmatmul.mubr.f32.gmra.mrb[0].mxu0 %v922
  %v1109 = vpop.f32.mrb[0].mxu0
  %v1110 = vadd.f32 %v84, %v1109
  %v1111 = vpop.f32.mrb[0].mxu0
  %1112 = vmatprep.mubr.f32.mxu0 0.0
  %1113 = vmatmul.mubr.f32.gmra.mrb[0].mxu0 %v923
  %v1114 = vpop.f32.mrb[0].mxu0
  %v1115 = vadd.f32 %v84, %v1114
  %v1116 = vpop.f32.mrb[0].mxu0
  %1117 = vmatprep.mubr.f32.mxu0 0.0
  %1118 = vmatmul.mubr.f32.gmra.mrb[0].mxu0 %v924
  %v1119 = vpop.f32.mrb[0].mxu0
  %v1120 = vadd.f32 %v84, %v1119
  %v1121 = vpop.f32.mrb[0].mxu0
  %1122 = vmatprep.mubr.f32.mxu0 0.0
  %1123 = vmatmul.mubr.f32.gmra.mrb[0].mxu0 %v925
  %v1124 = vpop.f32.mrb[0].mxu0
  %v1125 = vadd.f32 %v84, %v1124
  %v1126 = vpop.f32.mrb[0].mxu0
  %1127 = vmatprep.mubr.f32.mxu0 0.0
  %1128 = vmatmul.mubr.f32.gmra.mrb[0].mxu0 %v926
  %v1129 = vpop.f32.mrb[0].mxu0
  %v1130 = vadd.f32 %v84, %v1129
  %v1131 = vpop.f32.mrb[0].mxu0
  %1132 = vmatprep.mubr.f32.mxu0 0.0
  %1133 = vmatmul.mubr.f32.gmra.mrb[0].mxu0 %v927
  %v1134 = vpop.f32.mrb[0].mxu0
  %v1135 = vadd.f32 %v84, %v1134
  %v1136 = vpop.f32.mrb[0].mxu0
  %1137 = vmatprep.mubr.f32.mxu0 0.0
  %1138 = vmatmul.mubr.f32.gmra.mrb[0].mxu0 %v928
  %v1139 = vpop.f32.mrb[0].mxu0
  %v1140 = vadd.f32 %v84, %v1139
  %v1141 = vpop.f32.mrb[0].mxu0
  %1142 = vmatprep.mubr.f32.mxu0 0.0
  %1143 = vmatmul.mubr.f32.gmra.mrb[0].mxu0 %v929
  %v1144 = vpop.f32.mrb[0].mxu0
  %v1145 = vadd.f32 %v84, %v1144
  %v1146 = vpop.f32.mrb[0].mxu0
  %1147 = vmatprep.mubr.f32.mxu0 0.0
  %1148 = vmatmul.mubr.f32.gmra.mrb[0].mxu0 %v930
  %v1149 = vpop.f32.mrb[0].mxu0
  %v1150 = vadd.f32 %v84, %v1149
  %v1151 = vpop.f32.mrb[0].mxu0
  %1152 = vmatprep.mubr.f32.mxu0 0.0
  %1153 = vmatmul.mubr.f32.gmra.mrb[0].mxu0 %v931
  %v1154 = vpop.f32.mrb[0].mxu0
  %v1155 = vadd.f32 %v84, %v1154
  %v1156 = vpop.f32.mrb[0].mxu0
  %1157 = vmatprep.mubr.f32.mxu0 0.0
  %1158 = vmatmul.mubr.f32.gmra.mrb[0].mxu0 %v932
  %v1159 = vpop.f32.mrb[0].mxu0
  %v1160 = vadd.f32 %v84, %v1159
  %v1161 = vpop.f32.mrb[0].mxu0
  %1162 = vmatprep.mubr.f32.mxu0 0.0
  %1163 = vmatmul.mubr.f32.gmra.mrb[0].mxu0 %v933
  %v1164 = vpop.f32.mrb[0].mxu0
  %v1165 = vadd.f32 %v84, %v1164
  %v1166 = vpop.f32.mrb[0].mxu0
  %1167 = vmatprep.mubr.f32.mxu0 0.0
  %1168 = vmatmul.mubr.f32.gmra.mrb[0].mxu0 %v934
  %v1169 = vpop.f32.mrb[0].mxu0
  %v1170 = vadd.f32 %v84, %v1169
  %v1171 = vpop.f32.mrb[0].mxu0
  %1172 = vmatprep.mubr.f32.mxu0 0.0
  %1173 = vmatmul.mubr.f32.gmra.mrb[0].mxu0 %v935
  %v1174 = vpop.f32.mrb[0].mxu0
  %v1175 = vadd.f32 %v84, %v1174
  %v1176 = vpop.f32.mrb[0].mxu0
  %1177 = vmatprep.mubr.f32.mxu0 0.0
  %1178 = vmatmul.mubr.f32.gmra.mrb[0].mxu0 %v936
  %v1179 = vpop.f32.mrb[0].mxu0
  %v1180 = vadd.f32 %v84, %v1179
  %v1181 = vpop.f32.mrb[0].mxu0
  %1182 = vmatprep.mubr.f32.mxu0 0.0
  %1183 = vmatmul.mubr.f32.gmra.mrb[0].mxu0 %v937
  %v1184 = vpop.f32.mrb[0].mxu0
  %v1185 = vadd.f32 %v84, %v1184
  %v1186 = vpop.f32.mrb[0].mxu0
  %1187 = vmatprep.mubr.f32.mxu0 0.0
  %1188 = vmatmul.mubr.f32.gmra.mrb[0].mxu0 %v938
  %v1189 = vpop.f32.mrb[0].mxu0
  %v1190 = vadd.f32 %v84, %v1189
  %v1191 = vpop.f32.mrb[0].mxu0
  %1192 = vmatprep.mubr.f32.mxu0 0.0
  %1193 = vmatmul.mubr.f32.gmra.mrb[0].mxu0 %v939
  %v1194 = vpop.f32.mrb[0].mxu0
  %v1195 = vadd.f32 %v84, %v1194
  %v1196 = vpop.f32.mrb[0].mxu0
  %1197 = vmatprep.mubr.f32.mxu0 0.0
  %1198 = vmatmul.mubr.f32.gmra.mrb[0].mxu0 %v940
  %v1199 = vpop.f32.mrb[0].mxu0
  %v1200 = vadd.f32 %v84, %v1199
  %v1201 = vpop.f32.mrb[0].mxu0
  %1202 = vmatprep.mubr.f32.mxu0 0.0
  %1203 = vmatmul.mubr.f32.gmra.mrb[0].mxu0 %v941
  %v1204 = vpop.f32.mrb[0].mxu0
  %v1205 = vadd.f32 %v84, %v1204
  %v1206 = vpop.f32.mrb[0].mxu0
  %1207 = vmatprep.mubr.f32.mxu0 0.0
  %1208 = vmatmul.mubr.f32.gmra.mrb[0].mxu0 %v942
  %v1209 = vpop.f32.mrb[0].mxu0
  %v1210 = vadd.f32 %v84, %v1209
  %v1211 = vpop.f32.mrb[0].mxu0
  %1212 = vmatprep.mubr.f32.mxu0 0.0
  %1213 = vmatmul.mubr.f32.gmra.mrb[0].mxu0 %v943
  %v1214 = vpop.f32.mrb[0].mxu0
  %v1215 = vadd.f32 %v84, %v1214
  %v1216 = vpop.f32.mrb[0].mxu0
  %1217 = vmatprep.mubr.f32.mxu0 0.0
  %1218 = vmatmul.mubr.f32.gmra.mrb[0].mxu0 %v944
  %v1219 = vpop.f32.mrb[0].mxu0
  %v1220 = vadd.f32 %v84, %v1219
  %v1221 = vpop.f32.mrb[0].mxu0
  %1222 = vmatprep.mubr.f32.mxu0 0.0
  %1223 = vmatmul.mubr.f32.gmra.mrb[0].mxu0 %v945
  %v1224 = vpop.f32.mrb[0].mxu0
  %v1225 = vadd.f32 %v84, %v1224
  %v1226 = vpop.f32.mrb[0].mxu0
  %1227 = vmatprep.mubr.f32.mxu0 0.0
  %1228 = vmatmul.mubr.f32.gmra.mrb[0].mxu0 %v946
  %v1229 = vpop.f32.mrb[0].mxu0
  %v1230 = vadd.f32 %v84, %v1229
  %v1231 = vpop.f32.mrb[0].mxu0
  %1232 = vmatprep.mubr.f32.mxu0 0.0
  %1233 = vmatmul.mubr.f32.gmra.mrb[0].mxu0 %v947
  %v1234 = vpop.f32.mrb[0].mxu0
  %v1235 = vadd.f32 %v84, %v1234
  %v1236 = vpop.f32.mrb[0].mxu0
  %1237 = vmatprep.mubr.f32.mxu0 0.0
  %1238 = vmatmul.mubr.f32.gmra.mrb[0].mxu0 %v948
  %v1239 = vpop.f32.mrb[0].mxu0
  %v1240 = vadd.f32 %v84, %v1239
  %v1241 = vpop.f32.mrb[0].mxu0
  %1242 = vmatprep.mubr.f32.mxu0 0.0
  %1243 = vmatmul.mubr.f32.gmra.mrb[0].mxu0 %v949
  %v1244 = vpop.f32.mrb[0].mxu0
  %v1245 = vadd.f32 %v84, %v1244
  %v1246 = vpop.f32.mrb[0].mxu0
  %1247 = vmatprep.mubr.f32.mxu0 0.0
  %1248 = vmatmul.mubr.f32.gmra.mrb[0].mxu0 %v950
  %v1249 = vpop.f32.mrb[0].mxu0
  %v1250 = vadd.f32 %v84, %v1249
  %v1251 = vpop.f32.mrb[0].mxu0
  %1252 = vmatprep.mubr.f32.mxu0 0.0
  %1253 = vmatmul.mubr.f32.gmra.mrb[0].mxu0 %v951
  %v1254 = vpop.f32.mrb[0].mxu0
  %v1255 = vadd.f32 %v84, %v1254
  %v1256 = vpop.f32.mrb[0].mxu0
  %1257 = vmatprep.mubr.f32.mxu0 0.0
  %1258 = vmatmul.mubr.f32.gmra.mrb[0].mxu0 %v952
  %v1259 = vpop.f32.mrb[0].mxu0
  %v1260 = vadd.f32 %v84, %v1259
  %v1261 = vpop.f32.mrb[0].mxu0
  %1262 = vdwg.mxu0
  %v1263 = vmax.f32 %v1020, 0.0
  %v1264 = vmax.f32 %v1025, 0.0
  %v1265 = vmax.f32 %v1030, 0.0
  %v1266 = vmax.f32 %v1035, 0.0
  %v1267 = vmax.f32 %v1040, 0.0
  %v1268 = vmax.f32 %v1045, 0.0
  %v1269 = vmax.f32 %v1050, 0.0
  %v1270 = vmax.f32 %v1055, 0.0
  %v1271 = vmax.f32 %v1060, 0.0
  %v1272 = vmax.f32 %v1065, 0.0
  %v1273 = vmax.f32 %v1070, 0.0
  %v1274 = vmax.f32 %v1075, 0.0
  %v1275 = vmax.f32 %v1080, 0.0
  %v1276 = vmax.f32 %v1085, 0.0
  %v1277 = vmax.f32 %v1090, 0.0
  %v1278 = vmax.f32 %v1095, 0.0
  %v1279 = vmax.f32 %v1100, 0.0
  %v1280 = vmax.f32 %v1105, 0.0
  %v1281 = vmax.f32 %v1110, 0.0
  %v1282 = vmax.f32 %v1115, 0.0
  %v1283 = vmax.f32 %v1120, 0.0
  %v1284 = vmax.f32 %v1125, 0.0
  %v1285 = vmax.f32 %v1130, 0.0
  %v1286 = vmax.f32 %v1135, 0.0
  %v1287 = vmax.f32 %v1140, 0.0
  %v1288 = vmax.f32 %v1145, 0.0
  %v1289 = vmax.f32 %v1150, 0.0
  %v1290 = vmax.f32 %v1155, 0.0
  %v1291 = vmax.f32 %v1160, 0.0
  %v1292 = vmax.f32 %v1165, 0.0
  %v1293 = vmax.f32 %v1170, 0.0
  %v1294 = vmax.f32 %v1175, 0.0
  %v1295 = vmax.f32 %v1180, 0.0
  %v1296 = vmax.f32 %v1185, 0.0
  %v1297 = vmax.f32 %v1190, 0.0
  %v1298 = vmax.f32 %v1195, 0.0
  %v1299 = vmax.f32 %v1200, 0.0
  %v1300 = vmax.f32 %v1205, 0.0
  %v1301 = vmax.f32 %v1210, 0.0
  %v1302 = vmax.f32 %v1215, 0.0
  %v1303 = vmax.f32 %v1220, 0.0
  %v1304 = vmax.f32 %v1225, 0.0
  %v1305 = vmax.f32 %v1230, 0.0
  %v1306 = vmax.f32 %v1235, 0.0
  %v1307 = vmax.f32 %v1240, 0.0
  %v1308 = vmax.f32 %v1245, 0.0
  %v1309 = vmax.f32 %v1250, 0.0
  %v1310 = vmax.f32 %v1255, 0.0
  %v1311 = vmax.f32 %v1260, 0.0
  %s1312 = scalar_lea.vmem %s0, 1176
  %v1313 = vld [vmem:[%s1312] sm:$0xff]
  %v1314 = vld [vmem:[%s1312 + $0x8] sm:$0xff]
  %v1315 = vld [vmem:[%s1312 + $0x10] sm:$0xff]
  %v1316 = vld [vmem:[%s1312 + $0x18] sm:$0xff]
  %v1317 = vld [vmem:[%s1312 + $0x20] sm:$0xff]
  %v1318 = vld [vmem:[%s1312 + $0x28] sm:$0xff]
  %v1319 = vld [vmem:[%s1312 + $0x30] sm:$0xff]
  %v1320 = vld [vmem:[%s1312 + $0x38] sm:$0xff]
  %v1321 = vld [vmem:[%s1312 + $0x40] sm:$0xff]
  %v1322 = vld [vmem:[%s1312 + $0x48] sm:$0xff]
  %v1323 = vld [vmem:[%s1312 + $0x50] sm:$0xff]
  %v1324 = vld [vmem:[%s1312 + $0x58] sm:$0xff]
  %v1325 = vld [vmem:[%s1312 + $0x60] sm:$0xff]
  %v1326 = vld [vmem:[%s1312 + $0x68] sm:$0xff]
  %v1327 = vld [vmem:[%s1312 + $0x70] sm:$0xff]
  %v1328 = vld [vmem:[%s1312 + $0x78] sm:$0xff]
  %v1329 = vld [vmem:[%s1312 + $0x80] sm:$0xff]
  %v1330 = vld [vmem:[%s1312 + $0x88] sm:$0xff]
  %v1331 = vld [vmem:[%s1312 + $0x90] sm:$0xff]
  %v1332 = vld [vmem:[%s1312 + $0x98] sm:$0xff]
  %v1333 = vld [vmem:[%s1312 + $0xa0] sm:$0xff]
  %v1334 = vld [vmem:[%s1312 + $0xa8] sm:$0xff]
  %v1335 = vld [vmem:[%s1312 + $0xb0] sm:$0xff]
  %v1336 = vld [vmem:[%s1312 + $0xb8] sm:$0xff]
  %v1337 = vld [vmem:[%s1312 + $0xc0] sm:$0xff]
  %v1338 = vld [vmem:[%s1312 + $0xc8] sm:$0xff]
  %v1339 = vld [vmem:[%s1312 + $0xd0] sm:$0xff]
  %v1340 = vld [vmem:[%s1312 + $0xd8] sm:$0xff]
  %v1341 = vld [vmem:[%s1312 + $0xe0] sm:$0xff]
  %v1342 = vld [vmem:[%s1312 + $0xe8] sm:$0xff]
  %v1343 = vld [vmem:[%s1312 + $0xf0] sm:$0xff]
  %v1344 = vld [vmem:[%s1312 + $0xf8] sm:$0xff]
  %v1345 = vld [vmem:[%s1312 + $0x100] sm:$0xff]
  %v1346 = vld [vmem:[%s1312 + $0x108] sm:$0xff]
  %v1347 = vld [vmem:[%s1312 + $0x110] sm:$0xff]
  %v1348 = vld [vmem:[%s1312 + $0x118] sm:$0xff]
  %v1349 = vld [vmem:[%s1312 + $0x120] sm:$0xff]
  %v1350 = vld [vmem:[%s1312 + $0x128] sm:$0xff]
  %v1351 = vld [vmem:[%s1312 + $0x130] sm:$0xff]
  %v1352 = vld [vmem:[%s1312 + $0x138] sm:$0xff]
  %v1353 = vld [vmem:[%s1312 + $0x140] sm:$0xff]
  %v1354 = vld [vmem:[%s1312 + $0x148] sm:$0xff]
  %v1355 = vld [vmem:[%s1312 + $0x150] sm:$0xff]
  %v1356 = vld [vmem:[%s1312 + $0x158] sm:$0xff]
  %v1357 = vld [vmem:[%s1312 + $0x160] sm:$0xff]
  %v1358 = vld [vmem:[%s1312 + $0x168] sm:$0xff]
  %v1359 = vld [vmem:[%s1312 + $0x170] sm:$0xff]
  %v1360 = vld [vmem:[%s1312 + $0x178] sm:$0xff]
  %v1361 = vld [vmem:[%s1312 + $0x180] sm:$0xff]
  %1362 = vmatprep.subr.mxu0 0.0
  %1363 = vmatpush1.msra.mxu0 %v14
  %1364 = vmatprep.subr.mxu0 0.0
  %1365 = vmatpush1.msra.mxu0 %v15
  %1366 = vmatprep.subr.mxu0 0.0
  %1367 = vmatpush1.msra.mxu0 %v16
  %1368 = vmatprep.subr.mxu0 0.0
  %1369 = vmatpush1.msra.mxu0 %v17
  %1370 = vmatprep.subr.mxu0 0.0
  %1371 = vmatpush1.msra.mxu0 %v18
  %1372 = vmatprep.subr.mxu0 0.0
  %1373 = vmatpush1.msra.mxu0 %v19
  %1374 = vmatprep.subr.mxu0 0.0
  %1375 = vmatpush1.msra.mxu0 %v20
  %1376 = vmatprep.subr.mxu0 0.0
  %1377 = vmatpush1.msra.mxu0 %v21
  %1378 = vmatprep.subr.mxu0 0.0
  %1379 = vmatpush1.msra.mxu0 %v22
  %1380 = vmatprep.subr.mxu0 0.0
  %1381 = vmatpush1.msra.mxu0 %v23
  %1382 = vmatprep.subr.mxu0 0.0
  %1383 = vmatpush1.msra.mxu0 %v24
  %1384 = vmatprep.subr.mxu0 0.0
  %1385 = vmatpush1.msra.mxu0 %v25
  %1386 = vmatprep.subr.mxu0 0.0
  %1387 = vmatpush1.msra.mxu0 %v26
  %1388 = vmatprep.subr.mxu0 0.0
  %1389 = vmatpush1.msra.mxu0 %v27
  %1390 = vmatprep.subr.mxu0 0.0
  %1391 = vmatpush1.msra.mxu0 %v28
  %1392 = vmatprep.subr.mxu0 0.0
  %1393 = vmatpush1.msra.mxu0 %v29
  %1394 = vmatprep.subr.mxu0 0.0
  %1395 = vmatpush1.msra.mxu0 0.0
  %1396 = vmatprep.subr.mxu0 0.0
  %1397 = vmatpush1.msra.mxu0 0.0
  %1398 = vmatprep.subr.mxu0 0.0
  %1399 = vmatpush1.msra.mxu0 0.0
  %1400 = vmatprep.subr.mxu0 0.0
  %1401 = vmatpush1.msra.mxu0 0.0
  %1402 = vmatprep.subr.mxu0 0.0
  %1403 = vmatpush1.msra.mxu0 0.0
  %1404 = vmatprep.subr.mxu0 0.0
  %1405 = vmatpush1.msra.mxu0 0.0
  %1406 = vmatprep.subr.mxu0 0.0
  %1407 = vmatpush1.msra.mxu0 0.0
  %1408 = vmatprep.subr.mxu0 0.0
  %1409 = vmatpush1.msra.mxu0 0.0
  %1410 = vmatprep.subr.mxu0 0.0
  %1411 = vmatpush1.msra.mxu0 0.0
  %1412 = vmatprep.subr.mxu0 0.0
  %1413 = vmatpush1.msra.mxu0 0.0
  %1414 = vmatprep.subr.mxu0 0.0
  %1415 = vmatpush1.msra.mxu0 0.0
  %1416 = vmatprep.subr.mxu0 0.0
  %1417 = vmatpush1.msra.mxu0 0.0
  %1418 = vmatprep.subr.mxu0 0.0
  %1419 = vmatpush1.msra.mxu0 0.0
  %1420 = vmatprep.subr.mxu0 0.0
  %1421 = vmatpush1.msra.mxu0 0.0
  %1422 = vmatprep.subr.mxu0 0.0
  %1423 = vmatpush1.msra.mxu0 0.0
  %1424 = vmatprep.subr.mxu0 0.0
  %1425 = vmatpush1.msra.mxu0 0.0
  %1426 = vmatprep.mubr.f32.mxu0 0.0
  %1427 = vmatmul.mubr.f32.gmra.mrb[0].mxu0 %v1313
  %v1428 = vpop.f32.mrb[0].mxu0
  %v1429 = vadd.f32 %v84, %v1428
  %v1430 = vpop.f32.mrb[0].mxu0
  %1431 = vmatprep.mubr.f32.mxu0 0.0
  %1432 = vmatmul.mubr.f32.gmra.mrb[0].mxu0 %v1314
  %v1433 = vpop.f32.mrb[0].mxu0
  %v1434 = vadd.f32 %v84, %v1433
  %v1435 = vpop.f32.mrb[0].mxu0
  %1436 = vmatprep.mubr.f32.mxu0 0.0
  %1437 = vmatmul.mubr.f32.gmra.mrb[0].mxu0 %v1315
  %v1438 = vpop.f32.mrb[0].mxu0
  %v1439 = vadd.f32 %v84, %v1438
  %v1440 = vpop.f32.mrb[0].mxu0
  %1441 = vmatprep.mubr.f32.mxu0 0.0
  %1442 = vmatmul.mubr.f32.gmra.mrb[0].mxu0 %v1316
  %v1443 = vpop.f32.mrb[0].mxu0
  %v1444 = vadd.f32 %v84, %v1443
  %v1445 = vpop.f32.mrb[0].mxu0
  %1446 = vmatprep.mubr.f32.mxu0 0.0
  %1447 = vmatmul.mubr.f32.gmra.mrb[0].mxu0 %v1317
  %v1448 = vpop.f32.mrb[0].mxu0
  %v1449 = vadd.f32 %v84, %v1448
  %v1450 = vpop.f32.mrb[0].mxu0
  %1451 = vmatprep.mubr.f32.mxu0 0.0
  %1452 = vmatmul.mubr.f32.gmra.mrb[0].mxu0 %v1318
  %v1453 = vpop.f32.mrb[0].mxu0
  %v1454 = vadd.f32 %v84, %v1453
  %v1455 = vpop.f32.mrb[0].mxu0
  %1456 = vmatprep.mubr.f32.mxu0 0.0
  %1457 = vmatmul.mubr.f32.gmra.mrb[0].mxu0 %v1319
  %v1458 = vpop.f32.mrb[0].mxu0
  %v1459 = vadd.f32 %v84, %v1458
  %v1460 = vpop.f32.mrb[0].mxu0
  %1461 = vmatprep.mubr.f32.mxu0 0.0
  %1462 = vmatmul.mubr.f32.gmra.mrb[0].mxu0 %v1320
  %v1463 = vpop.f32.mrb[0].mxu0
  %v1464 = vadd.f32 %v84, %v1463
  %v1465 = vpop.f32.mrb[0].mxu0
  %1466 = vmatprep.mubr.f32.mxu0 0.0
  %1467 = vmatmul.mubr.f32.gmra.mrb[0].mxu0 %v1321
  %v1468 = vpop.f32.mrb[0].mxu0
  %v1469 = vadd.f32 %v84, %v1468
  %v1470 = vpop.f32.mrb[0].mxu0
  %1471 = vmatprep.mubr.f32.mxu0 0.0
  %1472 = vmatmul.mubr.f32.gmra.mrb[0].mxu0 %v1322
  %v1473 = vpop.f32.mrb[0].mxu0
  %v1474 = vadd.f32 %v84, %v1473
  %v1475 = vpop.f32.mrb[0].mxu0
  %1476 = vmatprep.mubr.f32.mxu0 0.0
  %1477 = vmatmul.mubr.f32.gmra.mrb[0].mxu0 %v1323
  %v1478 = vpop.f32.mrb[0].mxu0
  %v1479 = vadd.f32 %v84, %v1478
  %v1480 = vpop.f32.mrb[0].mxu0
  %1481 = vmatprep.mubr.f32.mxu0 0.0
  %1482 = vmatmul.mubr.f32.gmra.mrb[0].mxu0 %v1324
  %v1483 = vpop.f32.mrb[0].mxu0
  %v1484 = vadd.f32 %v84, %v1483
  %v1485 = vpop.f32.mrb[0].mxu0
  %1486 = vmatprep.mubr.f32.mxu0 0.0
  %1487 = vmatmul.mubr.f32.gmra.mrb[0].mxu0 %v1325
  %v1488 = vpop.f32.mrb[0].mxu0
  %v1489 = vadd.f32 %v84, %v1488
  %v1490 = vpop.f32.mrb[0].mxu0
  %1491 = vmatprep.mubr.f32.mxu0 0.0
  %1492 = vmatmul.mubr.f32.gmra.mrb[0].mxu0 %v1326
  %v1493 = vpop.f32.mrb[0].mxu0
  %v1494 = vadd.f32 %v84, %v1493
  %v1495 = vpop.f32.mrb[0].mxu0
  %1496 = vmatprep.mubr.f32.mxu0 0.0
  %1497 = vmatmul.mubr.f32.gmra.mrb[0].mxu0 %v1327
  %v1498 = vpop.f32.mrb[0].mxu0
  %v1499 = vadd.f32 %v84, %v1498
  %v1500 = vpop.f32.mrb[0].mxu0
  %1501 = vmatprep.mubr.f32.mxu0 0.0
  %1502 = vmatmul.mubr.f32.gmra.mrb[0].mxu0 %v1328
  %v1503 = vpop.f32.mrb[0].mxu0
  %v1504 = vadd.f32 %v84, %v1503
  %v1505 = vpop.f32.mrb[0].mxu0
  %1506 = vmatprep.mubr.f32.mxu0 0.0
  %1507 = vmatmul.mubr.f32.gmra.mrb[0].mxu0 %v1329
  %v1508 = vpop.f32.mrb[0].mxu0
  %v1509 = vadd.f32 %v84, %v1508
  %v1510 = vpop.f32.mrb[0].mxu0
  %1511 = vmatprep.mubr.f32.mxu0 0.0
  %1512 = vmatmul.mubr.f32.gmra.mrb[0].mxu0 %v1330
  %v1513 = vpop.f32.mrb[0].mxu0
  %v1514 = vadd.f32 %v84, %v1513
  %v1515 = vpop.f32.mrb[0].mxu0
  %1516 = vmatprep.mubr.f32.mxu0 0.0
  %1517 = vmatmul.mubr.f32.gmra.mrb[0].mxu0 %v1331
  %v1518 = vpop.f32.mrb[0].mxu0
  %v1519 = vadd.f32 %v84, %v1518
  %v1520 = vpop.f32.mrb[0].mxu0
  %1521 = vmatprep.mubr.f32.mxu0 0.0
  %1522 = vmatmul.mubr.f32.gmra.mrb[0].mxu0 %v1332
  %v1523 = vpop.f32.mrb[0].mxu0
  %v1524 = vadd.f32 %v84, %v1523
  %v1525 = vpop.f32.mrb[0].mxu0
  %1526 = vmatprep.mubr.f32.mxu0 0.0
  %1527 = vmatmul.mubr.f32.gmra.mrb[0].mxu0 %v1333
  %v1528 = vpop.f32.mrb[0].mxu0
  %v1529 = vadd.f32 %v84, %v1528
  %v1530 = vpop.f32.mrb[0].mxu0
  %1531 = vmatprep.mubr.f32.mxu0 0.0
  %1532 = vmatmul.mubr.f32.gmra.mrb[0].mxu0 %v1334
  %v1533 = vpop.f32.mrb[0].mxu0
  %v1534 = vadd.f32 %v84, %v1533
  %v1535 = vpop.f32.mrb[0].mxu0
  %1536 = vmatprep.mubr.f32.mxu0 0.0
  %1537 = vmatmul.mubr.f32.gmra.mrb[0].mxu0 %v1335
  %v1538 = vpop.f32.mrb[0].mxu0
  %v1539 = vadd.f32 %v84, %v1538
  %v1540 = vpop.f32.mrb[0].mxu0
  %1541 = vmatprep.mubr.f32.mxu0 0.0
  %1542 = vmatmul.mubr.f32.gmra.mrb[0].mxu0 %v1336
  %v1543 = vpop.f32.mrb[0].mxu0
  %v1544 = vadd.f32 %v84, %v1543
  %v1545 = vpop.f32.mrb[0].mxu0
  %1546 = vmatprep.mubr.f32.mxu0 0.0
  %1547 = vmatmul.mubr.f32.gmra.mrb[0].mxu0 %v1337
  %v1548 = vpop.f32.mrb[0].mxu0
  %v1549 = vadd.f32 %v84, %v1548
  %v1550 = vpop.f32.mrb[0].mxu0
  %1551 = vmatprep.mubr.f32.mxu0 0.0
  %1552 = vmatmul.mubr.f32.gmra.mrb[0].mxu0 %v1338
  %v1553 = vpop.f32.mrb[0].mxu0
  %v1554 = vadd.f32 %v84, %v1553
  %v1555 = vpop.f32.mrb[0].mxu0
  %1556 = vmatprep.mubr.f32.mxu0 0.0
  %1557 = vmatmul.mubr.f32.gmra.mrb[0].mxu0 %v1339
  %v1558 = vpop.f32.mrb[0].mxu0
  %v1559 = vadd.f32 %v84, %v1558
  %v1560 = vpop.f32.mrb[0].mxu0
  %1561 = vmatprep.mubr.f32.mxu0 0.0
  %1562 = vmatmul.mubr.f32.gmra.mrb[0].mxu0 %v1340
  %v1563 = vpop.f32.mrb[0].mxu0
  %v1564 = vadd.f32 %v84, %v1563
  %v1565 = vpop.f32.mrb[0].mxu0
  %1566 = vmatprep.mubr.f32.mxu0 0.0
  %1567 = vmatmul.mubr.f32.gmra.mrb[0].mxu0 %v1341
  %v1568 = vpop.f32.mrb[0].mxu0
  %v1569 = vadd.f32 %v84, %v1568
  %v1570 = vpop.f32.mrb[0].mxu0
  %1571 = vmatprep.mubr.f32.mxu0 0.0
  %1572 = vmatmul.mubr.f32.gmra.mrb[0].mxu0 %v1342
  %v1573 = vpop.f32.mrb[0].mxu0
  %v1574 = vadd.f32 %v84, %v1573
  %v1575 = vpop.f32.mrb[0].mxu0
  %1576 = vmatprep.mubr.f32.mxu0 0.0
  %1577 = vmatmul.mubr.f32.gmra.mrb[0].mxu0 %v1343
  %v1578 = vpop.f32.mrb[0].mxu0
  %v1579 = vadd.f32 %v84, %v1578
  %v1580 = vpop.f32.mrb[0].mxu0
  %1581 = vmatprep.mubr.f32.mxu0 0.0
  %1582 = vmatmul.mubr.f32.gmra.mrb[0].mxu0 %v1344
  %v1583 = vpop.f32.mrb[0].mxu0
  %v1584 = vadd.f32 %v84, %v1583
  %v1585 = vpop.f32.mrb[0].mxu0
  %1586 = vmatprep.mubr.f32.mxu0 0.0
  %1587 = vmatmul.mubr.f32.gmra.mrb[0].mxu0 %v1345
  %v1588 = vpop.f32.mrb[0].mxu0
  %v1589 = vadd.f32 %v84, %v1588
  %v1590 = vpop.f32.mrb[0].mxu0
  %1591 = vmatprep.mubr.f32.mxu0 0.0
  %1592 = vmatmul.mubr.f32.gmra.mrb[0].mxu0 %v1346
  %v1593 = vpop.f32.mrb[0].mxu0
  %v1594 = vadd.f32 %v84, %v1593
  %v1595 = vpop.f32.mrb[0].mxu0
  %1596 = vmatprep.mubr.f32.mxu0 0.0
  %1597 = vmatmul.mubr.f32.gmra.mrb[0].mxu0 %v1347
  %v1598 = vpop.f32.mrb[0].mxu0
  %v1599 = vadd.f32 %v84, %v1598
  %v1600 = vpop.f32.mrb[0].mxu0
  %1601 = vmatprep.mubr.f32.mxu0 0.0
  %1602 = vmatmul.mubr.f32.gmra.mrb[0].mxu0 %v1348
  %v1603 = vpop.f32.mrb[0].mxu0
  %v1604 = vadd.f32 %v84, %v1603
  %v1605 = vpop.f32.mrb[0].mxu0
  %1606 = vmatprep.mubr.f32.mxu0 0.0
  %1607 = vmatmul.mubr.f32.gmra.mrb[0].mxu0 %v1349
  %v1608 = vpop.f32.mrb[0].mxu0
  %v1609 = vadd.f32 %v84, %v1608
  %v1610 = vpop.f32.mrb[0].mxu0
  %1611 = vmatprep.mubr.f32.mxu0 0.0
  %1612 = vmatmul.mubr.f32.gmra.mrb[0].mxu0 %v1350
  %v1613 = vpop.f32.mrb[0].mxu0
  %v1614 = vadd.f32 %v84, %v1613
  %v1615 = vpop.f32.mrb[0].mxu0
  %1616 = vmatprep.mubr.f32.mxu0 0.0
  %1617 = vmatmul.mubr.f32.gmra.mrb[0].mxu0 %v1351
  %v1618 = vpop.f32.mrb[0].mxu0
  %v1619 = vadd.f32 %v84, %v1618
  %v1620 = vpop.f32.mrb[0].mxu0
  %1621 = vmatprep.mubr.f32.mxu0 0.0
  %1622 = vmatmul.mubr.f32.gmra.mrb[0].mxu0 %v1352
  %v1623 = vpop.f32.mrb[0].mxu0
  %v1624 = vadd.f32 %v84, %v1623
  %v1625 = vpop.f32.mrb[0].mxu0
  %1626 = vmatprep.mubr.f32.mxu0 0.0
  %1627 = vmatmul.mubr.f32.gmra.mrb[0].mxu0 %v1353
  %v1628 = vpop.f32.mrb[0].mxu0
  %v1629 = vadd.f32 %v84, %v1628
  %v1630 = vpop.f32.mrb[0].mxu0
  %1631 = vmatprep.mubr.f32.mxu0 0.0
  %1632 = vmatmul.mubr.f32.gmra.mrb[0].mxu0 %v1354
  %v1633 = vpop.f32.mrb[0].mxu0
  %v1634 = vadd.f32 %v84, %v1633
  %v1635 = vpop.f32.mrb[0].mxu0
  %1636 = vmatprep.mubr.f32.mxu0 0.0
  %1637 = vmatmul.mubr.f32.gmra.mrb[0].mxu0 %v1355
  %v1638 = vpop.f32.mrb[0].mxu0
  %v1639 = vadd.f32 %v84, %v1638
  %v1640 = vpop.f32.mrb[0].mxu0
  %1641 = vmatprep.mubr.f32.mxu0 0.0
  %1642 = vmatmul.mubr.f32.gmra.mrb[0].mxu0 %v1356
  %v1643 = vpop.f32.mrb[0].mxu0
  %v1644 = vadd.f32 %v84, %v1643
  %v1645 = vpop.f32.mrb[0].mxu0
  %1646 = vmatprep.mubr.f32.mxu0 0.0
  %1647 = vmatmul.mubr.f32.gmra.mrb[0].mxu0 %v1357
  %v1648 = vpop.f32.mrb[0].mxu0
  %v1649 = vadd.f32 %v84, %v1648
  %v1650 = vpop.f32.mrb[0].mxu0
  %1651 = vmatprep.mubr.f32.mxu0 0.0
  %1652 = vmatmul.mubr.f32.gmra.mrb[0].mxu0 %v1358
  %v1653 = vpop.f32.mrb[0].mxu0
  %v1654 = vadd.f32 %v84, %v1653
  %v1655 = vpop.f32.mrb[0].mxu0
  %1656 = vmatprep.mubr.f32.mxu0 0.0
  %1657 = vmatmul.mubr.f32.gmra.mrb[0].mxu0 %v1359
  %v1658 = vpop.f32.mrb[0].mxu0
  %v1659 = vadd.f32 %v84, %v1658
  %v1660 = vpop.f32.mrb[0].mxu0
  %1661 = vmatprep.mubr.f32.mxu0 0.0
  %1662 = vmatmul.mubr.f32.gmra.mrb[0].mxu0 %v1360
  %v1663 = vpop.f32.mrb[0].mxu0
  %v1664 = vadd.f32 %v84, %v1663
  %v1665 = vpop.f32.mrb[0].mxu0
  %1666 = vmatprep.mubr.f32.mxu0 0.0
  %1667 = vmatmul.mubr.f32.gmra.mrb[0].mxu0 %v1361
  %v1668 = vpop.f32.mrb[0].mxu0
  %v1669 = vadd.f32 %v84, %v1668
  %v1670 = vpop.f32.mrb[0].mxu0
  %1671 = vdwg.mxu0
  %v1672 = vmax.f32 %v1429, 0.0
  %v1673 = vmax.f32 %v1434, 0.0
  %v1674 = vmax.f32 %v1439, 0.0
  %v1675 = vmax.f32 %v1444, 0.0
  %v1676 = vmax.f32 %v1449, 0.0
  %v1677 = vmax.f32 %v1454, 0.0
  %v1678 = vmax.f32 %v1459, 0.0
  %v1679 = vmax.f32 %v1464, 0.0
  %v1680 = vmax.f32 %v1469, 0.0
  %v1681 = vmax.f32 %v1474, 0.0
  %v1682 = vmax.f32 %v1479, 0.0
  %v1683 = vmax.f32 %v1484, 0.0
  %v1684 = vmax.f32 %v1489, 0.0
  %v1685 = vmax.f32 %v1494, 0.0
  %v1686 = vmax.f32 %v1499, 0.0
  %v1687 = vmax.f32 %v1504, 0.0
  %v1688 = vmax.f32 %v1509, 0.0
  %v1689 = vmax.f32 %v1514, 0.0
  %v1690 = vmax.f32 %v1519, 0.0
  %v1691 = vmax.f32 %v1524, 0.0
  %v1692 = vmax.f32 %v1529, 0.0
  %v1693 = vmax.f32 %v1534, 0.0
  %v1694 = vmax.f32 %v1539, 0.0
  %v1695 = vmax.f32 %v1544, 0.0
  %v1696 = vmax.f32 %v1549, 0.0
  %v1697 = vmax.f32 %v1554, 0.0
  %v1698 = vmax.f32 %v1559, 0.0
  %v1699 = vmax.f32 %v1564, 0.0
  %v1700 = vmax.f32 %v1569, 0.0
  %v1701 = vmax.f32 %v1574, 0.0
  %v1702 = vmax.f32 %v1579, 0.0
  %v1703 = vmax.f32 %v1584, 0.0
  %v1704 = vmax.f32 %v1589, 0.0
  %v1705 = vmax.f32 %v1594, 0.0
  %v1706 = vmax.f32 %v1599, 0.0
  %v1707 = vmax.f32 %v1604, 0.0
  %v1708 = vmax.f32 %v1609, 0.0
  %v1709 = vmax.f32 %v1614, 0.0
  %v1710 = vmax.f32 %v1619, 0.0
  %v1711 = vmax.f32 %v1624, 0.0
  %v1712 = vmax.f32 %v1629, 0.0
  %v1713 = vmax.f32 %v1634, 0.0
  %v1714 = vmax.f32 %v1639, 0.0
  %v1715 = vmax.f32 %v1644, 0.0
  %v1716 = vmax.f32 %v1649, 0.0
  %v1717 = vmax.f32 %v1654, 0.0
  %v1718 = vmax.f32 %v1659, 0.0
  %v1719 = vmax.f32 %v1664, 0.0
  %v1720 = vmax.f32 %v1669, 0.0
  %v1721 = vmax.f32 %v1263, %v1672
  %v1722 = vmax.f32 %v1264, %v1673
  %v1723 = vmax.f32 %v1265, %v1674
  %v1724 = vmax.f32 %v1266, %v1675
  %v1725 = vmax.f32 %v1267, %v1676
  %v1726 = vmax.f32 %v1268, %v1677
  %v1727 = vmax.f32 %v1269, %v1678
  %v1728 = vmax.f32 %v1270, %v1679
  %v1729 = vmax.f32 %v1271, %v1680
  %v1730 = vmax.f32 %v1272, %v1681
  %v1731 = vmax.f32 %v1273, %v1682
  %v1732 = vmax.f32 %v1274, %v1683
  %v1733 = vmax.f32 %v1275, %v1684
  %v1734 = vmax.f32 %v1276, %v1685
  %v1735 = vmax.f32 %v1277, %v1686
  %v1736 = vmax.f32 %v1278, %v1687
  %v1737 = vmax.f32 %v1279, %v1688
  %v1738 = vmax.f32 %v1280, %v1689
  %v1739 = vmax.f32 %v1281, %v1690
  %v1740 = vmax.f32 %v1282, %v1691
  %v1741 = vmax.f32 %v1283, %v1692
  %v1742 = vmax.f32 %v1284, %v1693
  %v1743 = vmax.f32 %v1285, %v1694
  %v1744 = vmax.f32 %v1286, %v1695
  %v1745 = vmax.f32 %v1287, %v1696
  %v1746 = vmax.f32 %v1288, %v1697
  %v1747 = vmax.f32 %v1289, %v1698
  %v1748 = vmax.f32 %v1290, %v1699
  %v1749 = vmax.f32 %v1291, %v1700
  %v1750 = vmax.f32 %v1292, %v1701
  %v1751 = vmax.f32 %v1293, %v1702
  %v1752 = vmax.f32 %v1294, %v1703
  %v1753 = vmax.f32 %v1295, %v1704
  %v1754 = vmax.f32 %v1296, %v1705
  %v1755 = vmax.f32 %v1297, %v1706
  %v1756 = vmax.f32 %v1298, %v1707
  %v1757 = vmax.f32 %v1299, %v1708
  %v1758 = vmax.f32 %v1300, %v1709
  %v1759 = vmax.f32 %v1301, %v1710
  %v1760 = vmax.f32 %v1302, %v1711
  %v1761 = vmax.f32 %v1303, %v1712
  %v1762 = vmax.f32 %v1304, %v1713
  %v1763 = vmax.f32 %v1305, %v1714
  %v1764 = vmax.f32 %v1306, %v1715
  %v1765 = vmax.f32 %v1307, %v1716
  %v1766 = vmax.f32 %v1308, %v1717
  %v1767 = vmax.f32 %v1309, %v1718
  %v1768 = vmax.f32 %v1310, %v1719
  %v1769 = vmax.f32 %v1311, %v1720
  %v1770 = vmax.f32 %v854, %v1721
  %v1771 = vmax.f32 %v855, %v1722
  %v1772 = vmax.f32 %v856, %v1723
  %v1773 = vmax.f32 %v857, %v1724
  %v1774 = vmax.f32 %v858, %v1725
  %v1775 = vmax.f32 %v859, %v1726
  %v1776 = vmax.f32 %v860, %v1727
  %v1777 = vmax.f32 %v861, %v1728
  %v1778 = vmax.f32 %v862, %v1729
  %v1779 = vmax.f32 %v863, %v1730
  %v1780 = vmax.f32 %v864, %v1731
  %v1781 = vmax.f32 %v865, %v1732
  %v1782 = vmax.f32 %v866, %v1733
  %v1783 = vmax.f32 %v867, %v1734
  %v1784 = vmax.f32 %v868, %v1735
  %v1785 = vmax.f32 %v869, %v1736
  %v1786 = vmax.f32 %v870, %v1737
  %v1787 = vmax.f32 %v871, %v1738
  %v1788 = vmax.f32 %v872, %v1739
  %v1789 = vmax.f32 %v873, %v1740
  %v1790 = vmax.f32 %v874, %v1741
  %v1791 = vmax.f32 %v875, %v1742
  %v1792 = vmax.f32 %v876, %v1743
  %v1793 = vmax.f32 %v877, %v1744
  %v1794 = vmax.f32 %v878, %v1745
  %v1795 = vmax.f32 %v879, %v1746
  %v1796 = vmax.f32 %v880, %v1747
  %v1797 = vmax.f32 %v881, %v1748
  %v1798 = vmax.f32 %v882, %v1749
  %v1799 = vmax.f32 %v883, %v1750
  %v1800 = vmax.f32 %v884, %v1751
  %v1801 = vmax.f32 %v885, %v1752
  %v1802 = vmax.f32 %v886, %v1753
  %v1803 = vmax.f32 %v887, %v1754
  %v1804 = vmax.f32 %v888, %v1755
  %v1805 = vmax.f32 %v889, %v1756
  %v1806 = vmax.f32 %v890, %v1757
  %v1807 = vmax.f32 %v891, %v1758
  %v1808 = vmax.f32 %v892, %v1759
  %v1809 = vmax.f32 %v893, %v1760
  %v1810 = vmax.f32 %v894, %v1761
  %v1811 = vmax.f32 %v895, %v1762
  %v1812 = vmax.f32 %v896, %v1763
  %v1813 = vmax.f32 %v897, %v1764
  %v1814 = vmax.f32 %v898, %v1765
  %v1815 = vmax.f32 %v899, %v1766
  %v1816 = vmax.f32 %v900, %v1767
  %v1817 = vmax.f32 %v901, %v1768
  %v1818 = vmax.f32 %v902, %v1769
  %1819 = vst [vmem:[%s3] sm:$0xff] %v1770
  %1820 = vst [vmem:[%s3 + $0x8] sm:$0xff] %v1771
  %1821 = vst [vmem:[%s3 + $0x10] sm:$0xff] %v1772
  %1822 = vst [vmem:[%s3 + $0x18] sm:$0xff] %v1773
  %1823 = vst [vmem:[%s3 + $0x20] sm:$0xff] %v1774
  %1824 = vst [vmem:[%s3 + $0x28] sm:$0xff] %v1775
  %1825 = vst [vmem:[%s3 + $0x30] sm:$0xff] %v1776
  %1826 = vst [vmem:[%s3 + $0x38] sm:$0xff] %v1777
  %1827 = vst [vmem:[%s3 + $0x40] sm:$0xff] %v1778
  %1828 = vst [vmem:[%s3 + $0x48] sm:$0xff] %v1779
  %1829 = vst [vmem:[%s3 + $0x50] sm:$0xff] %v1780
  %1830 = vst [vmem:[%s3 + $0x58] sm:$0xff] %v1781
  %1831 = vst [vmem:[%s3 + $0x60] sm:$0xff] %v1782
  %1832 = vst [vmem:[%s3 + $0x68] sm:$0xff] %v1783
  %1833 = vst [vmem:[%s3 + $0x70] sm:$0xff] %v1784
  %1834 = vst [vmem:[%s3 + $0x78] sm:$0xff] %v1785
  %1835 = vst [vmem:[%s3 + $0x80] sm:$0xff] %v1786
  %1836 = vst [vmem:[%s3 + $0x88] sm:$0xff] %v1787
  %1837 = vst [vmem:[%s3 + $0x90] sm:$0xff] %v1788
  %1838 = vst [vmem:[%s3 + $0x98] sm:$0xff] %v1789
  %1839 = vst [vmem:[%s3 + $0xa0] sm:$0xff] %v1790
  %1840 = vst [vmem:[%s3 + $0xa8] sm:$0xff] %v1791
  %1841 = vst [vmem:[%s3 + $0xb0] sm:$0xff] %v1792
  %1842 = vst [vmem:[%s3 + $0xb8] sm:$0xff] %v1793
  %1843 = vst [vmem:[%s3 + $0xc0] sm:$0xff] %v1794
  %1844 = vst [vmem:[%s3 + $0xc8] sm:$0xff] %v1795
  %1845 = vst [vmem:[%s3 + $0xd0] sm:$0xff] %v1796
  %1846 = vst [vmem:[%s3 + $0xd8] sm:$0xff] %v1797
  %1847 = vst [vmem:[%s3 + $0xe0] sm:$0xff] %v1798
  %1848 = vst [vmem:[%s3 + $0xe8] sm:$0xff] %v1799
  %1849 = vst [vmem:[%s3 + $0xf0] sm:$0xff] %v1800
  %1850 = vst [vmem:[%s3 + $0xf8] sm:$0xff] %v1801
  %1851 = vst [vmem:[%s3 + $0x100] sm:$0xff] %v1802
  %1852 = vst [vmem:[%s3 + $0x108] sm:$0xff] %v1803
  %1853 = vst [vmem:[%s3 + $0x110] sm:$0xff] %v1804
  %1854 = vst [vmem:[%s3 + $0x118] sm:$0xff] %v1805
  %1855 = vst [vmem:[%s3 + $0x120] sm:$0xff] %v1806
  %1856 = vst [vmem:[%s3 + $0x128] sm:$0xff] %v1807
  %1857 = vst [vmem:[%s3 + $0x130] sm:$0xff] %v1808
  %1858 = vst [vmem:[%s3 + $0x138] sm:$0xff] %v1809
  %1859 = vst [vmem:[%s3 + $0x140] sm:$0xff] %v1810
  %1860 = vst [vmem:[%s3 + $0x148] sm:$0xff] %v1811
  %1861 = vst [vmem:[%s3 + $0x150] sm:$0xff] %v1812
  %1862 = vst [vmem:[%s3 + $0x158] sm:$0xff] %v1813
  %1863 = vst [vmem:[%s3 + $0x160] sm:$0xff] %v1814
  %1864 = vst [vmem:[%s3 + $0x168] sm:$0xff] %v1815
  %1865 = vst [vmem:[%s3 + $0x170] sm:$0xff] %v1816
  %1866 = vst [vmem:[%s3 + $0x178] sm:$0xff] %v1817
  %1867 = vst [vmem:[%s3 + $0x180] sm:$0xff] %v1818
  // Predicated region
  $region14: #{net_forward.3} parent=0 // pred_check
    _
  $region15: #{net_forward.3} parent=0 // pred_check_branch
    %1869 = sbr.rel (0) target = $region17
  $region16: #{net_forward.3} parent=0 // pred_region
    _
  $region17: #{net_forward.3} parent=0 // pred_fallthru
    _
  // Predicated region
  $region18: #{net_forward.3} parent=0 // pred_check
    _
  $region19: #{net_forward.3} parent=0 // pred_check_branch
    %1871 = sbr.rel (0) target = $region21
  $region20: #{net_forward.3} parent=0 // pred_region
    _
  $region21: #{net_forward.3} parent=0 // pred_fallthru
    _

// kernel: net_forward.4
$region0: #{net_forward.4}
  #allocation0 [shape = 'u32[]', space=smem, size = 0x4, offset = 0x4, fixed_abs, tag = 'smem constant byte address 0x4 - core index']
  #allocation1 [shape = 'u32[144,128]{1,0:T(1,128)}', space=vmem, size = 0x12000, scoped, tag = 'internal scratch']
  %s0 = inlined_call_operand.vmem [shape: f32[4,56,256], index: 0, kind: input, shape index: {}]
  %s1 = inlined_call_operand.vmem [shape: f32[256,128], index: 1, kind: input, shape index: {}]
  %s2 = inlined_call_operand.vmem [shape: f32[1,128], index: 2, kind: input, shape index: {}]
  %s3 = inlined_call_operand.vmem [shape: f32[56,128], index: 3, kind: output, shape index: {}]
  %s4 = sld [smem:[#allocation0]]
  $region22: #{net_forward.4} parent=0
    _
  %s6 = ssub.s32 1, %s4
  %s7 = scalar_select 0, %s6, %s4
  // Predicated region
  $region2: #{net_forward.4} parent=0 // pred_check
    _
  $region3: #{net_forward.4} parent=0 // pred_check_branch
    %9 = sbr.rel (0) target = $region5
  $region4: #{net_forward.4} parent=0 // pred_region
    _
  $region5: #{net_forward.4} parent=0 // pred_fallthru
    _
  // Predicated region
  $region6: #{net_forward.4} parent=0 // pred_check
    _
  $region7: #{net_forward.4} parent=0 // pred_check_branch
    %11 = sbr.rel (0) target = $region9
  $region8: #{net_forward.4} parent=0 // pred_region
    _
  $region9: #{net_forward.4} parent=0 // pred_fallthru
    _
  // Predicated region
  $region10: #{net_forward.4} parent=0 // pred_check
    _
  $region11: #{net_forward.4} parent=0 // pred_check_branch
    %13 = sbr.rel (0) target = $region13
  $region12: #{net_forward.4} parent=0 // pred_region
    _
  $region13: #{net_forward.4} parent=0 // pred_fallthru
    _
  %v14 = vld [vmem:[%s1] sm:$0xff]
  %v15 = vld [vmem:[%s1 + $0x8] sm:$0xff]
  %v16 = vld [vmem:[%s1 + $0x10] sm:$0xff]
  %v17 = vld [vmem:[%s1 + $0x18] sm:$0xff]
  %v18 = vld [vmem:[%s1 + $0x20] sm:$0xff]
  %v19 = vld [vmem:[%s1 + $0x28] sm:$0xff]
  %v20 = vld [vmem:[%s1 + $0x30] sm:$0xff]
  %v21 = vld [vmem:[%s1 + $0x38] sm:$0xff]
  %v22 = vld [vmem:[%s1 + $0x40] sm:$0xff]
  %v23 = vld [vmem:[%s1 + $0x48] sm:$0xff]
  %v24 = vld [vmem:[%s1 + $0x50] sm:$0xff]
  %v25 = vld [vmem:[%s1 + $0x58] sm:$0xff]
  %v26 = vld [vmem:[%s1 + $0x60] sm:$0xff]
  %v27 = vld [vmem:[%s1 + $0x68] sm:$0xff]
  %v28 = vld [vmem:[%s1 + $0x70] sm:$0xff]
  %v29 = vld [vmem:[%s1 + $0x78] sm:$0xff]
  %v30 = vld [vmem:[%s1 + $0x80] sm:$0xff]
  %v31 = vld [vmem:[%s1 + $0x88] sm:$0xff]
  %v32 = vld [vmem:[%s1 + $0x90] sm:$0xff]
  %v33 = vld [vmem:[%s1 + $0x98] sm:$0xff]
  %v34 = vld [vmem:[%s1 + $0xa0] sm:$0xff]
  %v35 = vld [vmem:[%s1 + $0xa8] sm:$0xff]
  %v36 = vld [vmem:[%s1 + $0xb0] sm:$0xff]
  %v37 = vld [vmem:[%s1 + $0xb8] sm:$0xff]
  %v38 = vld [vmem:[%s1 + $0xc0] sm:$0xff]
  %v39 = vld [vmem:[%s1 + $0xc8] sm:$0xff]
  %v40 = vld [vmem:[%s1 + $0xd0] sm:$0xff]
  %v41 = vld [vmem:[%s1 + $0xd8] sm:$0xff]
  %v42 = vld [vmem:[%s1 + $0xe0] sm:$0xff]
  %v43 = vld [vmem:[%s1 + $0xe8] sm:$0xff]
  %v44 = vld [vmem:[%s1 + $0xf0] sm:$0xff]
  %v45 = vld [vmem:[%s1 + $0xf8] sm:$0xff]
  %v46 = vld [vmem:[%s2] sm:$0x1]
  %v47 = vld [vmem:[%s0] sm:$0xff]
  %v48 = vld [vmem:[%s0 + $0x8] sm:$0xff]
  %v49 = vld [vmem:[%s0 + $0x10] sm:$0xff]
  %v50 = vld [vmem:[%s0 + $0x18] sm:$0xff]
  %v51 = vld [vmem:[%s0 + $0x20] sm:$0xff]
  %v52 = vld [vmem:[%s0 + $0x28] sm:$0xff]
  %v53 = vld [vmem:[%s0 + $0x30] sm:$0xff]
  %v54 = vld [vmem:[%s0 + $0x38] sm:$0xff]
  %v55 = vld [vmem:[%s0 + $0x40] sm:$0xff]
  %v56 = vld [vmem:[%s0 + $0x48] sm:$0xff]
  %v57 = vld [vmem:[%s0 + $0x50] sm:$0xff]
  %v58 = vld [vmem:[%s0 + $0x58] sm:$0xff]
  %v59 = vld [vmem:[%s0 + $0x60] sm:$0xff]
  %v60 = vld [vmem:[%s0 + $0x68] sm:$0xff]
  %v62 = vlaneseq
  %v63 = vshrl.u32 %v62, 7
  %v64 = vsub.s32 0, %v63
  %v65 = vrot.slane %v46, %v64
  %67 = vmatprep.subr.mxu0 0.0
  %68 = vmatpush1.msra.mxu0 %v14
  %69 = vmatprep.subr.mxu0 0.0
  %70 = vmatpush1.msra.mxu0 %v15
  %71 = vmatprep.subr.mxu0 0.0
  %72 = vmatpush1.msra.mxu0 %v16
  %73 = vmatprep.subr.mxu0 0.0
  %74 = vmatpush1.msra.mxu0 %v17
  %75 = vmatprep.subr.mxu0 0.0
  %76 = vmatpush1.msra.mxu0 %v18
  %77 = vmatprep.subr.mxu0 0.0
  %78 = vmatpush1.msra.mxu0 %v19
  %79 = vmatprep.subr.mxu0 0.0
  %80 = vmatpush1.msra.mxu0 %v20
  %81 = vmatprep.subr.mxu0 0.0
  %82 = vmatpush1.msra.mxu0 %v21
  %83 = vmatprep.subr.mxu0 0.0
  %84 = vmatpush1.msra.mxu0 %v22
  %85 = vmatprep.subr.mxu0 0.0
  %86 = vmatpush1.msra.mxu0 %v23
  %87 = vmatprep.subr.mxu0 0.0
  %88 = vmatpush1.msra.mxu0 %v24
  %89 = vmatprep.subr.mxu0 0.0
  %90 = vmatpush1.msra.mxu0 %v25
  %91 = vmatprep.subr.mxu0 0.0
  %92 = vmatpush1.msra.mxu0 %v26
  %93 = vmatprep.subr.mxu0 0.0
  %94 = vmatpush1.msra.mxu0 %v27
  %95 = vmatprep.subr.mxu0 0.0
  %96 = vmatpush1.msra.mxu0 %v28
  %97 = vmatprep.subr.mxu0 0.0
  %98 = vmatpush1.msra.mxu0 %v29
  %99 = vmatprep.subr.mxu0 0.0
  %100 = vmatpush1.msra.mxu0 %v30
  %101 = vmatprep.subr.mxu0 0.0
  %102 = vmatpush1.msra.mxu0 %v31
  %103 = vmatprep.subr.mxu0 0.0
  %104 = vmatpush1.msra.mxu0 %v32
  %105 = vmatprep.subr.mxu0 0.0
  %106 = vmatpush1.msra.mxu0 %v33
  %107 = vmatprep.subr.mxu0 0.0
  %108 = vmatpush1.msra.mxu0 %v34
  %109 = vmatprep.subr.mxu0 0.0
  %110 = vmatpush1.msra.mxu0 %v35
  %111 = vmatprep.subr.mxu0 0.0
  %112 = vmatpush1.msra.mxu0 %v36
  %113 = vmatprep.subr.mxu0 0.0
  %114 = vmatpush1.msra.mxu0 %v37
  %115 = vmatprep.subr.mxu0 0.0
  %116 = vmatpush1.msra.mxu0 %v38
  %117 = vmatprep.subr.mxu0 0.0
  %118 = vmatpush1.msra.mxu0 %v39
  %119 = vmatprep.subr.mxu0 0.0
  %120 = vmatpush1.msra.mxu0 %v40
  %121 = vmatprep.subr.mxu0 0.0
  %122 = vmatpush1.msra.mxu0 %v41
  %123 = vmatprep.subr.mxu0 0.0
  %124 = vmatpush1.msra.mxu0 %v42
  %125 = vmatprep.subr.mxu0 0.0
  %126 = vmatpush1.msra.mxu0 %v43
  %127 = vmatprep.subr.mxu0 0.0
  %128 = vmatpush1.msra.mxu0 %v44
  %129 = vmatprep.subr.mxu0 0.0
  %130 = vmatpush1.msra.mxu0 %v45
  %131 = vmatprep.mubr.f32.mxu0 %v48
  %132 = vmatmul.mubr.f32.gmra.mrb[0].mxu0 %v47
  %v133 = vpop.f32.mrb[0].mxu0
  %v134 = vadd.f32 %v65, %v133
  %v135 = vpop.f32.mrb[0].mxu0
  %136 = vmatprep.mubr.f32.mxu0 %v50
  %137 = vmatmul.mubr.f32.gmra.mrb[0].mxu0 %v49
  %v138 = vpop.f32.mrb[0].mxu0
  %v139 = vadd.f32 %v65, %v138
  %v140 = vpop.f32.mrb[0].mxu0
  %141 = vmatprep.mubr.f32.mxu0 %v52
  %142 = vmatmul.mubr.f32.gmra.mrb[0].mxu0 %v51
  %v143 = vpop.f32.mrb[0].mxu0
  %v144 = vadd.f32 %v65, %v143
  %v145 = vpop.f32.mrb[0].mxu0
  %146 = vmatprep.mubr.f32.mxu0 %v54
  %147 = vmatmul.mubr.f32.gmra.mrb[0].mxu0 %v53
  %v148 = vpop.f32.mrb[0].mxu0
  %v149 = vadd.f32 %v65, %v148
  %v150 = vpop.f32.mrb[0].mxu0
  %151 = vmatprep.mubr.f32.mxu0 %v56
  %152 = vmatmul.mubr.f32.gmra.mrb[0].mxu0 %v55
  %v153 = vpop.f32.mrb[0].mxu0
  %v154 = vadd.f32 %v65, %v153
  %v155 = vpop.f32.mrb[0].mxu0
  %156 = vmatprep.mubr.f32.mxu0 %v58
  %157 = vmatmul.mubr.f32.gmra.mrb[0].mxu0 %v57
  %v158 = vpop.f32.mrb[0].mxu0
  %v159 = vadd.f32 %v65, %v158
  %v160 = vpop.f32.mrb[0].mxu0
  %161 = vmatprep.mubr.f32.mxu0 %v60
  %162 = vmatmul.mubr.f32.gmra.mrb[0].mxu0 %v59
  %v163 = vpop.f32.mrb[0].mxu0
  %v164 = vadd.f32 %v65, %v163
  %v165 = vpop.f32.mrb[0].mxu0
  %166 = vdwg.mxu0
  %v167 = vmax.f32 %v134, 0.0
  %v168 = vmax.f32 %v139, 0.0
  %v169 = vmax.f32 %v144, 0.0
  %v170 = vmax.f32 %v149, 0.0
  %v171 = vmax.f32 %v154, 0.0
  %v172 = vmax.f32 %v159, 0.0
  %v173 = vmax.f32 %v164, 0.0
  %s174 = scalar_lea.vmem %s0, 112
  %v175 = vld [vmem:[%s174] sm:$0xff]
  %v176 = vld [vmem:[%s174 + $0x8] sm:$0xff]
  %v177 = vld [vmem:[%s174 + $0x10] sm:$0xff]
  %v178 = vld [vmem:[%s174 + $0x18] sm:$0xff]
  %v179 = vld [vmem:[%s174 + $0x20] sm:$0xff]
  %v180 = vld [vmem:[%s174 + $0x28] sm:$0xff]
  %v181 = vld [vmem:[%s174 + $0x30] sm:$0xff]
  %v182 = vld [vmem:[%s174 + $0x38] sm:$0xff]
  %v183 = vld [vmem:[%s174 + $0x40] sm:$0xff]
  %v184 = vld [vmem:[%s174 + $0x48] sm:$0xff]
  %v185 = vld [vmem:[%s174 + $0x50] sm:$0xff]
  %v186 = vld [vmem:[%s174 + $0x58] sm:$0xff]
  %v187 = vld [vmem:[%s174 + $0x60] sm:$0xff]
  %v188 = vld [vmem:[%s174 + $0x68] sm:$0xff]
  %189 = vmatprep.subr.mxu0 0.0
  %190 = vmatpush1.msra.mxu0 %v14
  %191 = vmatprep.subr.mxu0 0.0
  %192 = vmatpush1.msra.mxu0 %v15
  %193 = vmatprep.subr.mxu0 0.0
  %194 = vmatpush1.msra.mxu0 %v16
  %195 = vmatprep.subr.mxu0 0.0
  %196 = vmatpush1.msra.mxu0 %v17
  %197 = vmatprep.subr.mxu0 0.0
  %198 = vmatpush1.msra.mxu0 %v18
  %199 = vmatprep.subr.mxu0 0.0
  %200 = vmatpush1.msra.mxu0 %v19
  %201 = vmatprep.subr.mxu0 0.0
  %202 = vmatpush1.msra.mxu0 %v20
  %203 = vmatprep.subr.mxu0 0.0
  %204 = vmatpush1.msra.mxu0 %v21
  %205 = vmatprep.subr.mxu0 0.0
  %206 = vmatpush1.msra.mxu0 %v22
  %207 = vmatprep.subr.mxu0 0.0
  %208 = vmatpush1.msra.mxu0 %v23
  %209 = vmatprep.subr.mxu0 0.0
  %210 = vmatpush1.msra.mxu0 %v24
  %211 = vmatprep.subr.mxu0 0.0
  %212 = vmatpush1.msra.mxu0 %v25
  %213 = vmatprep.subr.mxu0 0.0
  %214 = vmatpush1.msra.mxu0 %v26
  %215 = vmatprep.subr.mxu0 0.0
  %216 = vmatpush1.msra.mxu0 %v27
  %217 = vmatprep.subr.mxu0 0.0
  %218 = vmatpush1.msra.mxu0 %v28
  %219 = vmatprep.subr.mxu0 0.0
  %220 = vmatpush1.msra.mxu0 %v29
  %221 = vmatprep.subr.mxu0 0.0
  %222 = vmatpush1.msra.mxu0 %v30
  %223 = vmatprep.subr.mxu0 0.0
  %224 = vmatpush1.msra.mxu0 %v31
  %225 = vmatprep.subr.mxu0 0.0
  %226 = vmatpush1.msra.mxu0 %v32
  %227 = vmatprep.subr.mxu0 0.0
  %228 = vmatpush1.msra.mxu0 %v33
  %229 = vmatprep.subr.mxu0 0.0
  %230 = vmatpush1.msra.mxu0 %v34
  %231 = vmatprep.subr.mxu0 0.0
  %232 = vmatpush1.msra.mxu0 %v35
  %233 = vmatprep.subr.mxu0 0.0
  %234 = vmatpush1.msra.mxu0 %v36
  %235 = vmatprep.subr.mxu0 0.0
  %236 = vmatpush1.msra.mxu0 %v37
  %237 = vmatprep.subr.mxu0 0.0
  %238 = vmatpush1.msra.mxu0 %v38
  %239 = vmatprep.subr.mxu0 0.0
  %240 = vmatpush1.msra.mxu0 %v39
  %241 = vmatprep.subr.mxu0 0.0
  %242 = vmatpush1.msra.mxu0 %v40
  %243 = vmatprep.subr.mxu0 0.0
  %244 = vmatpush1.msra.mxu0 %v41
  %245 = vmatprep.subr.mxu0 0.0
  %246 = vmatpush1.msra.mxu0 %v42
  %247 = vmatprep.subr.mxu0 0.0
  %248 = vmatpush1.msra.mxu0 %v43
  %249 = vmatprep.subr.mxu0 0.0
  %250 = vmatpush1.msra.mxu0 %v44
  %251 = vmatprep.subr.mxu0 0.0
  %252 = vmatpush1.msra.mxu0 %v45
  %253 = vmatprep.mubr.f32.mxu0 %v176
  %254 = vmatmul.mubr.f32.gmra.mrb[0].mxu0 %v175
  %v255 = vpop.f32.mrb[0].mxu0
  %v256 = vadd.f32 %v65, %v255
  %v257 = vpop.f32.mrb[0].mxu0
  %258 = vmatprep.mubr.f32.mxu0 %v178
  %259 = vmatmul.mubr.f32.gmra.mrb[0].mxu0 %v177
  %v260 = vpop.f32.mrb[0].mxu0
  %v261 = vadd.f32 %v65, %v260
  %v262 = vpop.f32.mrb[0].mxu0
  %263 = vmatprep.mubr.f32.mxu0 %v180
  %264 = vmatmul.mubr.f32.gmra.mrb[0].mxu0 %v179
  %v265 = vpop.f32.mrb[0].mxu0
  %v266 = vadd.f32 %v65, %v265
  %v267 = vpop.f32.mrb[0].mxu0
  %268 = vmatprep.mubr.f32.mxu0 %v182
  %269 = vmatmul.mubr.f32.gmra.mrb[0].mxu0 %v181
  %v270 = vpop.f32.mrb[0].mxu0
  %v271 = vadd.f32 %v65, %v270
  %v272 = vpop.f32.mrb[0].mxu0
  %273 = vmatprep.mubr.f32.mxu0 %v184
  %274 = vmatmul.mubr.f32.gmra.mrb[0].mxu0 %v183
  %v275 = vpop.f32.mrb[0].mxu0
  %v276 = vadd.f32 %v65, %v275
  %v277 = vpop.f32.mrb[0].mxu0
  %278 = vmatprep.mubr.f32.mxu0 %v186
  %279 = vmatmul.mubr.f32.gmra.mrb[0].mxu0 %v185
  %v280 = vpop.f32.mrb[0].mxu0
  %v281 = vadd.f32 %v65, %v280
  %v282 = vpop.f32.mrb[0].mxu0
  %283 = vmatprep.mubr.f32.mxu0 %v188
  %284 = vmatmul.mubr.f32.gmra.mrb[0].mxu0 %v187
  %v285 = vpop.f32.mrb[0].mxu0
  %v286 = vadd.f32 %v65, %v285
  %v287 = vpop.f32.mrb[0].mxu0
  %288 = vdwg.mxu0
  %v289 = vmax.f32 %v256, 0.0
  %v290 = vmax.f32 %v261, 0.0
  %v291 = vmax.f32 %v266, 0.0
  %v292 = vmax.f32 %v271, 0.0
  %v293 = vmax.f32 %v276, 0.0
  %v294 = vmax.f32 %v281, 0.0
  %v295 = vmax.f32 %v286, 0.0
  %v296 = vmax.f32 %v167, %v289
  %v297 = vmax.f32 %v168, %v290
  %v298 = vmax.f32 %v169, %v291
  %v299 = vmax.f32 %v170, %v292
  %v300 = vmax.f32 %v171, %v293
  %v301 = vmax.f32 %v172, %v294
  %v302 = vmax.f32 %v173, %v295
  %s303 = scalar_lea.vmem %s0, 224
  %v304 = vld [vmem:[%s303] sm:$0xff]
  %v305 = vld [vmem:[%s303 + $0x8] sm:$0xff]
  %v306 = vld [vmem:[%s303 + $0x10] sm:$0xff]
  %v307 = vld [vmem:[%s303 + $0x18] sm:$0xff]
  %v308 = vld [vmem:[%s303 + $0x20] sm:$0xff]
  %v309 = vld [vmem:[%s303 + $0x28] sm:$0xff]
  %v310 = vld [vmem:[%s303 + $0x30] sm:$0xff]
  %v311 = vld [vmem:[%s303 + $0x38] sm:$0xff]
  %v312 = vld [vmem:[%s303 + $0x40] sm:$0xff]
  %v313 = vld [vmem:[%s303 + $0x48] sm:$0xff]
  %v314 = vld [vmem:[%s303 + $0x50] sm:$0xff]
  %v315 = vld [vmem:[%s303 + $0x58] sm:$0xff]
  %v316 = vld [vmem:[%s303 + $0x60] sm:$0xff]
  %v317 = vld [vmem:[%s303 + $0x68] sm:$0xff]
  %318 = vmatprep.subr.mxu0 0.0
  %319 = vmatpush1.msra.mxu0 %v14
  %320 = vmatprep.subr.mxu0 0.0
  %321 = vmatpush1.msra.mxu0 %v15
  %322 = vmatprep.subr.mxu0 0.0
  %323 = vmatpush1.msra.mxu0 %v16
  %324 = vmatprep.subr.mxu0 0.0
  %325 = vmatpush1.msra.mxu0 %v17
  %326 = vmatprep.subr.mxu0 0.0
  %327 = vmatpush1.msra.mxu0 %v18
  %328 = vmatprep.subr.mxu0 0.0
  %329 = vmatpush1.msra.mxu0 %v19
  %330 = vmatprep.subr.mxu0 0.0
  %331 = vmatpush1.msra.mxu0 %v20
  %332 = vmatprep.subr.mxu0 0.0
  %333 = vmatpush1.msra.mxu0 %v21
  %334 = vmatprep.subr.mxu0 0.0
  %335 = vmatpush1.msra.mxu0 %v22
  %336 = vmatprep.subr.mxu0 0.0
  %337 = vmatpush1.msra.mxu0 %v23
  %338 = vmatprep.subr.mxu0 0.0
  %339 = vmatpush1.msra.mxu0 %v24
  %340 = vmatprep.subr.mxu0 0.0
  %341 = vmatpush1.msra.mxu0 %v25
  %342 = vmatprep.subr.mxu0 0.0
  %343 = vmatpush1.msra.mxu0 %v26
  %344 = vmatprep.subr.mxu0 0.0
  %345 = vmatpush1.msra.mxu0 %v27
  %346 = vmatprep.subr.mxu0 0.0
  %347 = vmatpush1.msra.mxu0 %v28
  %348 = vmatprep.subr.mxu0 0.0
  %349 = vmatpush1.msra.mxu0 %v29
  %350 = vmatprep.subr.mxu0 0.0
  %351 = vmatpush1.msra.mxu0 %v30
  %352 = vmatprep.subr.mxu0 0.0
  %353 = vmatpush1.msra.mxu0 %v31
  %354 = vmatprep.subr.mxu0 0.0
  %355 = vmatpush1.msra.mxu0 %v32
  %356 = vmatprep.subr.mxu0 0.0
  %357 = vmatpush1.msra.mxu0 %v33
  %358 = vmatprep.subr.mxu0 0.0
  %359 = vmatpush1.msra.mxu0 %v34
  %360 = vmatprep.subr.mxu0 0.0
  %361 = vmatpush1.msra.mxu0 %v35
  %362 = vmatprep.subr.mxu0 0.0
  %363 = vmatpush1.msra.mxu0 %v36
  %364 = vmatprep.subr.mxu0 0.0
  %365 = vmatpush1.msra.mxu0 %v37
  %366 = vmatprep.subr.mxu0 0.0
  %367 = vmatpush1.msra.mxu0 %v38
  %368 = vmatprep.subr.mxu0 0.0
  %369 = vmatpush1.msra.mxu0 %v39
  %370 = vmatprep.subr.mxu0 0.0
  %371 = vmatpush1.msra.mxu0 %v40
  %372 = vmatprep.subr.mxu0 0.0
  %373 = vmatpush1.msra.mxu0 %v41
  %374 = vmatprep.subr.mxu0 0.0
  %375 = vmatpush1.msra.mxu0 %v42
  %376 = vmatprep.subr.mxu0 0.0
  %377 = vmatpush1.msra.mxu0 %v43
  %378 = vmatprep.subr.mxu0 0.0
  %379 = vmatpush1.msra.mxu0 %v44
  %380 = vmatprep.subr.mxu0 0.0
  %381 = vmatpush1.msra.mxu0 %v45
  %382 = vmatprep.mubr.f32.mxu0 %v305
  %383 = vmatmul.mubr.f32.gmra.mrb[0].mxu0 %v304
  %v384 = vpop.f32.mrb[0].mxu0
  %v385 = vadd.f32 %v65, %v384
  %v386 = vpop.f32.mrb[0].mxu0
  %387 = vmatprep.mubr.f32.mxu0 %v307
  %388 = vmatmul.mubr.f32.gmra.mrb[0].mxu0 %v306
  %v389 = vpop.f32.mrb[0].mxu0
  %v390 = vadd.f32 %v65, %v389
  %v391 = vpop.f32.mrb[0].mxu0
  %392 = vmatprep.mubr.f32.mxu0 %v309
  %393 = vmatmul.mubr.f32.gmra.mrb[0].mxu0 %v308
  %v394 = vpop.f32.mrb[0].mxu0
  %v395 = vadd.f32 %v65, %v394
  %v396 = vpop.f32.mrb[0].mxu0
  %397 = vmatprep.mubr.f32.mxu0 %v311
  %398 = vmatmul.mubr.f32.gmra.mrb[0].mxu0 %v310
  %v399 = vpop.f32.mrb[0].mxu0
  %v400 = vadd.f32 %v65, %v399
  %v401 = vpop.f32.mrb[0].mxu0
  %402 = vmatprep.mubr.f32.mxu0 %v313
  %403 = vmatmul.mubr.f32.gmra.mrb[0].mxu0 %v312
  %v404 = vpop.f32.mrb[0].mxu0
  %v405 = vadd.f32 %v65, %v404
  %v406 = vpop.f32.mrb[0].mxu0
  %407 = vmatprep.mubr.f32.mxu0 %v315
  %408 = vmatmul.mubr.f32.gmra.mrb[0].mxu0 %v314
  %v409 = vpop.f32.mrb[0].mxu0
  %v410 = vadd.f32 %v65, %v409
  %v411 = vpop.f32.mrb[0].mxu0
  %412 = vmatprep.mubr.f32.mxu0 %v317
  %413 = vmatmul.mubr.f32.gmra.mrb[0].mxu0 %v316
  %v414 = vpop.f32.mrb[0].mxu0
  %v415 = vadd.f32 %v65, %v414
  %v416 = vpop.f32.mrb[0].mxu0
  %417 = vdwg.mxu0
  %v418 = vmax.f32 %v385, 0.0
  %v419 = vmax.f32 %v390, 0.0
  %v420 = vmax.f32 %v395, 0.0
  %v421 = vmax.f32 %v400, 0.0
  %v422 = vmax.f32 %v405, 0.0
  %v423 = vmax.f32 %v410, 0.0
  %v424 = vmax.f32 %v415, 0.0
  %s425 = scalar_lea.vmem %s0, 336
  %v426 = vld [vmem:[%s425] sm:$0xff]
  %v427 = vld [vmem:[%s425 + $0x8] sm:$0xff]
  %v428 = vld [vmem:[%s425 + $0x10] sm:$0xff]
  %v429 = vld [vmem:[%s425 + $0x18] sm:$0xff]
  %v430 = vld [vmem:[%s425 + $0x20] sm:$0xff]
  %v431 = vld [vmem:[%s425 + $0x28] sm:$0xff]
  %v432 = vld [vmem:[%s425 + $0x30] sm:$0xff]
  %v433 = vld [vmem:[%s425 + $0x38] sm:$0xff]
  %v434 = vld [vmem:[%s425 + $0x40] sm:$0xff]
  %v435 = vld [vmem:[%s425 + $0x48] sm:$0xff]
  %v436 = vld [vmem:[%s425 + $0x50] sm:$0xff]
  %v437 = vld [vmem:[%s425 + $0x58] sm:$0xff]
  %v438 = vld [vmem:[%s425 + $0x60] sm:$0xff]
  %v439 = vld [vmem:[%s425 + $0x68] sm:$0xff]
  %440 = vmatprep.subr.mxu0 0.0
  %441 = vmatpush1.msra.mxu0 %v14
  %442 = vmatprep.subr.mxu0 0.0
  %443 = vmatpush1.msra.mxu0 %v15
  %444 = vmatprep.subr.mxu0 0.0
  %445 = vmatpush1.msra.mxu0 %v16
  %446 = vmatprep.subr.mxu0 0.0
  %447 = vmatpush1.msra.mxu0 %v17
  %448 = vmatprep.subr.mxu0 0.0
  %449 = vmatpush1.msra.mxu0 %v18
  %450 = vmatprep.subr.mxu0 0.0
  %451 = vmatpush1.msra.mxu0 %v19
  %452 = vmatprep.subr.mxu0 0.0
  %453 = vmatpush1.msra.mxu0 %v20
  %454 = vmatprep.subr.mxu0 0.0
  %455 = vmatpush1.msra.mxu0 %v21
  %456 = vmatprep.subr.mxu0 0.0
  %457 = vmatpush1.msra.mxu0 %v22
  %458 = vmatprep.subr.mxu0 0.0
  %459 = vmatpush1.msra.mxu0 %v23
  %460 = vmatprep.subr.mxu0 0.0
  %461 = vmatpush1.msra.mxu0 %v24
  %462 = vmatprep.subr.mxu0 0.0
  %463 = vmatpush1.msra.mxu0 %v25
  %464 = vmatprep.subr.mxu0 0.0
  %465 = vmatpush1.msra.mxu0 %v26
  %466 = vmatprep.subr.mxu0 0.0
  %467 = vmatpush1.msra.mxu0 %v27
  %468 = vmatprep.subr.mxu0 0.0
  %469 = vmatpush1.msra.mxu0 %v28
  %470 = vmatprep.subr.mxu0 0.0
  %471 = vmatpush1.msra.mxu0 %v29
  %472 = vmatprep.subr.mxu0 0.0
  %473 = vmatpush1.msra.mxu0 %v30
  %474 = vmatprep.subr.mxu0 0.0
  %475 = vmatpush1.msra.mxu0 %v31
  %476 = vmatprep.subr.mxu0 0.0
  %477 = vmatpush1.msra.mxu0 %v32
  %478 = vmatprep.subr.mxu0 0.0
  %479 = vmatpush1.msra.mxu0 %v33
  %480 = vmatprep.subr.mxu0 0.0
  %481 = vmatpush1.msra.mxu0 %v34
  %482 = vmatprep.subr.mxu0 0.0
  %483 = vmatpush1.msra.mxu0 %v35
  %484 = vmatprep.subr.mxu0 0.0
  %485 = vmatpush1.msra.mxu0 %v36
  %486 = vmatprep.subr.mxu0 0.0
  %487 = vmatpush1.msra.mxu0 %v37
  %488 = vmatprep.subr.mxu0 0.0
  %489 = vmatpush1.msra.mxu0 %v38
  %490 = vmatprep.subr.mxu0 0.0
  %491 = vmatpush1.msra.mxu0 %v39
  %492 = vmatprep.subr.mxu0 0.0
  %493 = vmatpush1.msra.mxu0 %v40
  %494 = vmatprep.subr.mxu0 0.0
  %495 = vmatpush1.msra.mxu0 %v41
  %496 = vmatprep.subr.mxu0 0.0
  %497 = vmatpush1.msra.mxu0 %v42
  %498 = vmatprep.subr.mxu0 0.0
  %499 = vmatpush1.msra.mxu0 %v43
  %500 = vmatprep.subr.mxu0 0.0
  %501 = vmatpush1.msra.mxu0 %v44
  %502 = vmatprep.subr.mxu0 0.0
  %503 = vmatpush1.msra.mxu0 %v45
  %504 = vmatprep.mubr.f32.mxu0 %v427
  %505 = vmatmul.mubr.f32.gmra.mrb[0].mxu0 %v426
  %v506 = vpop.f32.mrb[0].mxu0
  %v507 = vadd.f32 %v65, %v506
  %v508 = vpop.f32.mrb[0].mxu0
  %509 = vmatprep.mubr.f32.mxu0 %v429
  %510 = vmatmul.mubr.f32.gmra.mrb[0].mxu0 %v428
  %v511 = vpop.f32.mrb[0].mxu0
  %v512 = vadd.f32 %v65, %v511
  %v513 = vpop.f32.mrb[0].mxu0
  %514 = vmatprep.mubr.f32.mxu0 %v431
  %515 = vmatmul.mubr.f32.gmra.mrb[0].mxu0 %v430
  %v516 = vpop.f32.mrb[0].mxu0
  %v517 = vadd.f32 %v65, %v516
  %v518 = vpop.f32.mrb[0].mxu0
  %519 = vmatprep.mubr.f32.mxu0 %v433
  %520 = vmatmul.mubr.f32.gmra.mrb[0].mxu0 %v432
  %v521 = vpop.f32.mrb[0].mxu0
  %v522 = vadd.f32 %v65, %v521
  %v523 = vpop.f32.mrb[0].mxu0
  %524 = vmatprep.mubr.f32.mxu0 %v435
  %525 = vmatmul.mubr.f32.gmra.mrb[0].mxu0 %v434
  %v526 = vpop.f32.mrb[0].mxu0
  %v527 = vadd.f32 %v65, %v526
  %v528 = vpop.f32.mrb[0].mxu0
  %529 = vmatprep.mubr.f32.mxu0 %v437
  %530 = vmatmul.mubr.f32.gmra.mrb[0].mxu0 %v436
  %v531 = vpop.f32.mrb[0].mxu0
  %v532 = vadd.f32 %v65, %v531
  %v533 = vpop.f32.mrb[0].mxu0
  %534 = vmatprep.mubr.f32.mxu0 %v439
  %535 = vmatmul.mubr.f32.gmra.mrb[0].mxu0 %v438
  %v536 = vpop.f32.mrb[0].mxu0
  %v537 = vadd.f32 %v65, %v536
  %v538 = vpop.f32.mrb[0].mxu0
  %539 = vdwg.mxu0
  %v540 = vmax.f32 %v507, 0.0
  %v541 = vmax.f32 %v512, 0.0
  %v542 = vmax.f32 %v517, 0.0
  %v543 = vmax.f32 %v522, 0.0
  %v544 = vmax.f32 %v527, 0.0
  %v545 = vmax.f32 %v532, 0.0
  %v546 = vmax.f32 %v537, 0.0
  %v547 = vmax.f32 %v418, %v540
  %v548 = vmax.f32 %v419, %v541
  %v549 = vmax.f32 %v420, %v542
  %v550 = vmax.f32 %v421, %v543
  %v551 = vmax.f32 %v422, %v544
  %v552 = vmax.f32 %v423, %v545
  %v553 = vmax.f32 %v424, %v546
  %v554 = vmax.f32 %v296, %v547
  %v555 = vmax.f32 %v297, %v548
  %v556 = vmax.f32 %v298, %v549
  %v557 = vmax.f32 %v299, %v550
  %v558 = vmax.f32 %v300, %v551
  %v559 = vmax.f32 %v301, %v552
  %v560 = vmax.f32 %v302, %v553
  %561 = vst [vmem:[%s3] sm:$0xff] %v554
  %562 = vst [vmem:[%s3 + $0x8] sm:$0xff] %v555
  %563 = vst [vmem:[%s3 + $0x10] sm:$0xff] %v556
  %564 = vst [vmem:[%s3 + $0x18] sm:$0xff] %v557
  %565 = vst [vmem:[%s3 + $0x20] sm:$0xff] %v558
  %566 = vst [vmem:[%s3 + $0x28] sm:$0xff] %v559
  %567 = vst [vmem:[%s3 + $0x30] sm:$0xff] %v560
  // Predicated region
  $region14: #{net_forward.4} parent=0 // pred_check
    _
  $region15: #{net_forward.4} parent=0 // pred_check_branch
    %569 = sbr.rel (0) target = $region17
  $region16: #{net_forward.4} parent=0 // pred_region
    _
  $region17: #{net_forward.4} parent=0 // pred_fallthru
    _
  // Predicated region
  $region18: #{net_forward.4} parent=0 // pred_check
    _
  $region19: #{net_forward.4} parent=0 // pred_check_branch
    %571 = sbr.rel (0) target = $region21
  $region20: #{net_forward.4} parent=0 // pred_region
    _
  $region21: #{net_forward.4} parent=0 // pred_fallthru
    _

// kernel: net_forward.5
$region0: #{net_forward.5}
  #allocation0 [shape = 'u32[]', space=smem, size = 0x4, offset = 0x4, fixed_abs, tag = 'smem constant byte address 0x4 - core index']
  #allocation1 [shape = 'u32[144,128]{1,0:T(1,128)}', space=vmem, size = 0x12000, scoped, tag = 'internal scratch']
  %s0 = inlined_call_operand.vmem [shape: f32[8,3200], index: 0, kind: input, shape index: {}]
  %s1 = inlined_call_operand.vmem [shape: f32[3200,128], index: 1, kind: input, shape index: {}]
  %s2 = inlined_call_operand.vmem [shape: f32[1,128], index: 2, kind: input, shape index: {}]
  %s3 = inlined_call_operand.vmem [shape: f32[128,128], index: 3, kind: input, shape index: {}]
  %s4 = inlined_call_operand.vmem [shape: f32[1,128], index: 4, kind: input, shape index: {}]
  %s5 = inlined_call_operand.vmem [shape: f32[128,128], index: 5, kind: input, shape index: {}]
  %s6 = inlined_call_operand.vmem [shape: f32[1,128], index: 6, kind: input, shape index: {}]
  %s7 = inlined_call_operand.vmem [shape: f32[8,128], index: 7, kind: output, shape index: {}]
  %s8 = sld [smem:[#allocation0]]
  $region38: #{net_forward.5} parent=0
    _
  %s10 = ssub.s32 1, %s8
  %s11 = scalar_select 0, %s10, %s8
  // Predicated region
  $region2: #{net_forward.5} parent=0 // pred_check
    _
  $region3: #{net_forward.5} parent=0 // pred_check_branch
    %13 = sbr.rel (0) target = $region5
  $region4: #{net_forward.5} parent=0 // pred_region
    _
  $region5: #{net_forward.5} parent=0 // pred_fallthru
    _
  // Predicated region
  $region6: #{net_forward.5} parent=0 // pred_check
    _
  $region7: #{net_forward.5} parent=0 // pred_check_branch
    %15 = sbr.rel (0) target = $region9
  $region8: #{net_forward.5} parent=0 // pred_region
    _
  $region9: #{net_forward.5} parent=0 // pred_fallthru
    _
  // Predicated region
  $region10: #{net_forward.5} parent=0 // pred_check
    _
  $region11: #{net_forward.5} parent=0 // pred_check_branch
    %17 = sbr.rel (0) target = $region13
  $region12: #{net_forward.5} parent=0 // pred_region
    _
  $region13: #{net_forward.5} parent=0 // pred_fallthru
    _
  // Predicated region
  $region14: #{net_forward.5} parent=0 // pred_check
    _
  $region15: #{net_forward.5} parent=0 // pred_check_branch
    %19 = sbr.rel (0) target = $region17
  $region16: #{net_forward.5} parent=0 // pred_region
    _
  $region17: #{net_forward.5} parent=0 // pred_fallthru
    _
  // Predicated region
  $region18: #{net_forward.5} parent=0 // pred_check
    _
  $region19: #{net_forward.5} parent=0 // pred_check_branch
    %21 = sbr.rel (0) target = $region21
  $region20: #{net_forward.5} parent=0 // pred_region
    _
  $region21: #{net_forward.5} parent=0 // pred_fallthru
    _
  // Predicated region
  $region22: #{net_forward.5} parent=0 // pred_check
    _
  $region23: #{net_forward.5} parent=0 // pred_check_branch
    %23 = sbr.rel (0) target = $region25
  $region24: #{net_forward.5} parent=0 // pred_region
    _
  $region25: #{net_forward.5} parent=0 // pred_fallthru
    _
  // Predicated region
  $region26: #{net_forward.5} parent=0 // pred_check
    _
  $region27: #{net_forward.5} parent=0 // pred_check_branch
    %25 = sbr.rel (0) target = $region29
  $region28: #{net_forward.5} parent=0 // pred_region
    _
  $region29: #{net_forward.5} parent=0 // pred_fallthru
    _
  %v26 = vld [vmem:[%s0] sm:$0xff]
  %v27 = vld [vmem:[%s0 + $0x8] sm:$0xff]
  %v28 = vld [vmem:[%s0 + $0x10] sm:$0xff]
  %v29 = vld [vmem:[%s0 + $0x18] sm:$0xff]
  %v30 = vld [vmem:[%s0 + $0x20] sm:$0xff]
  %v31 = vld [vmem:[%s0 + $0x28] sm:$0xff]
  %v32 = vld [vmem:[%s0 + $0x30] sm:$0xff]
  %v33 = vld [vmem:[%s0 + $0x38] sm:$0xff]
  %v34 = vld [vmem:[%s0 + $0x40] sm:$0xff]
  %v35 = vld [vmem:[%s0 + $0x48] sm:$0xff]
  %v36 = vld [vmem:[%s0 + $0x50] sm:$0xff]
  %v37 = vld [vmem:[%s0 + $0x58] sm:$0xff]
  %v38 = vld [vmem:[%s0 + $0x60] sm:$0xff]
  %v39 = vld [vmem:[%s0 + $0x68] sm:$0xff]
  %v40 = vld [vmem:[%s0 + $0x70] sm:$0xff]
  %v41 = vld [vmem:[%s0 + $0x78] sm:$0xff]
  %v42 = vld [vmem:[%s0 + $0x80] sm:$0xff]
  %v43 = vld [vmem:[%s0 + $0x88] sm:$0xff]
  %v44 = vld [vmem:[%s0 + $0x90] sm:$0xff]
  %v45 = vld [vmem:[%s0 + $0x98] sm:$0xff]
  %v46 = vld [vmem:[%s0 + $0xa0] sm:$0xff]
  %v47 = vld [vmem:[%s0 + $0xa8] sm:$0xff]
  %v48 = vld [vmem:[%s0 + $0xb0] sm:$0xff]
  %v49 = vld [vmem:[%s0 + $0xb8] sm:$0xff]
  %v50 = vld [vmem:[%s0 + $0xc0] sm:$0xff]
  %v51 = vld [vmem:[%s1] sm:$0xff]
  %v52 = vld [vmem:[%s1 + $0x8] sm:$0xff]
  %v53 = vld [vmem:[%s1 + $0x10] sm:$0xff]
  %v54 = vld [vmem:[%s1 + $0x18] sm:$0xff]
  %v55 = vld [vmem:[%s1 + $0x20] sm:$0xff]
  %v56 = vld [vmem:[%s1 + $0x28] sm:$0xff]
  %v57 = vld [vmem:[%s1 + $0x30] sm:$0xff]
  %v58 = vld [vmem:[%s1 + $0x38] sm:$0xff]
  %v59 = vld [vmem:[%s1 + $0x40] sm:$0xff]
  %v60 = vld [vmem:[%s1 + $0x48] sm:$0xff]
  %v61 = vld [vmem:[%s1 + $0x50] sm:$0xff]
  %v62 = vld [vmem:[%s1 + $0x58] sm:$0xff]
  %v63 = vld [vmem:[%s1 + $0x60] sm:$0xff]
  %v64 = vld [vmem:[%s1 + $0x68] sm:$0xff]
  %v65 = vld [vmem:[%s1 + $0x70] sm:$0xff]
  %v66 = vld [vmem:[%s1 + $0x78] sm:$0xff]
  %v67 = vld [vmem:[%s1 + $0x80] sm:$0xff]
  %v68 = vld [vmem:[%s1 + $0x88] sm:$0xff]
  %v69 = vld [vmem:[%s1 + $0x90] sm:$0xff]
  %v70 = vld [vmem:[%s1 + $0x98] sm:$0xff]
  %v71 = vld [vmem:[%s1 + $0xa0] sm:$0xff]
  %v72 = vld [vmem:[%s1 + $0xa8] sm:$0xff]
  %v73 = vld [vmem:[%s1 + $0xb0] sm:$0xff]
  %v74 = vld [vmem:[%s1 + $0xb8] sm:$0xff]
  %v75 = vld [vmem:[%s1 + $0xc0] sm:$0xff]
  %v76 = vld [vmem:[%s1 + $0xc8] sm:$0xff]
  %v77 = vld [vmem:[%s1 + $0xd0] sm:$0xff]
  %v78 = vld [vmem:[%s1 + $0xd8] sm:$0xff]
  %v79 = vld [vmem:[%s1 + $0xe0] sm:$0xff]
  %v80 = vld [vmem:[%s1 + $0xe8] sm:$0xff]
  %v81 = vld [vmem:[%s1 + $0xf0] sm:$0xff]
  %v82 = vld [vmem:[%s1 + $0xf8] sm:$0xff]
  %v83 = vld [vmem:[%s1 + $0x100] sm:$0xff]
  %v84 = vld [vmem:[%s1 + $0x108] sm:$0xff]
  %v85 = vld [vmem:[%s1 + $0x110] sm:$0xff]
  %v86 = vld [vmem:[%s1 + $0x118] sm:$0xff]
  %v87 = vld [vmem:[%s1 + $0x120] sm:$0xff]
  %v88 = vld [vmem:[%s1 + $0x128] sm:$0xff]
  %v89 = vld [vmem:[%s1 + $0x130] sm:$0xff]
  %v90 = vld [vmem:[%s1 + $0x138] sm:$0xff]
  %v91 = vld [vmem:[%s1 + $0x140] sm:$0xff]
  %v92 = vld [vmem:[%s1 + $0x148] sm:$0xff]
  %v93 = vld [vmem:[%s1 + $0x150] sm:$0xff]
  %v94 = vld [vmem:[%s1 + $0x158] sm:$0xff]
  %v95 = vld [vmem:[%s1 + $0x160] sm:$0xff]
  %v96 = vld [vmem:[%s1 + $0x168] sm:$0xff]
  %v97 = vld [vmem:[%s1 + $0x170] sm:$0xff]
  %v98 = vld [vmem:[%s1 + $0x178] sm:$0xff]
  %v99 = vld [vmem:[%s1 + $0x180] sm:$0xff]
  %v100 = vld [vmem:[%s1 + $0x188] sm:$0xff]
  %v101 = vld [vmem:[%s1 + $0x190] sm:$0xff]
  %v102 = vld [vmem:[%s1 + $0x198] sm:$0xff]
  %v103 = vld [vmem:[%s1 + $0x1a0] sm:$0xff]
  %v104 = vld [vmem:[%s1 + $0x1a8] sm:$0xff]
  %v105 = vld [vmem:[%s1 + $0x1b0] sm:$0xff]
  %v106 = vld [vmem:[%s1 + $0x1b8] sm:$0xff]
  %v107 = vld [vmem:[%s1 + $0x1c0] sm:$0xff]
  %v108 = vld [vmem:[%s1 + $0x1c8] sm:$0xff]
  %v109 = vld [vmem:[%s1 + $0x1d0] sm:$0xff]
  %v110 = vld [vmem:[%s1 + $0x1d8] sm:$0xff]
  %v111 = vld [vmem:[%s1 + $0x1e0] sm:$0xff]
  %v112 = vld [vmem:[%s1 + $0x1e8] sm:$0xff]
  %v113 = vld [vmem:[%s1 + $0x1f0] sm:$0xff]
  %v114 = vld [vmem:[%s1 + $0x1f8] sm:$0xff]
  %v115 = vld [vmem:[%s1 + $0x200] sm:$0xff]
  %v116 = vld [vmem:[%s1 + $0x208] sm:$0xff]
  %v117 = vld [vmem:[%s1 + $0x210] sm:$0xff]
  %v118 = vld [vmem:[%s1 + $0x218] sm:$0xff]
  %v119 = vld [vmem:[%s1 + $0x220] sm:$0xff]
  %v120 = vld [vmem:[%s1 + $0x228] sm:$0xff]
  %v121 = vld [vmem:[%s1 + $0x230] sm:$0xff]
  %v122 = vld [vmem:[%s1 + $0x238] sm:$0xff]
  %v123 = vld [vmem:[%s1 + $0x240] sm:$0xff]
  %v124 = vld [vmem:[%s1 + $0x248] sm:$0xff]
  %v125 = vld [vmem:[%s1 + $0x250] sm:$0xff]
  %v126 = vld [vmem:[%s1 + $0x258] sm:$0xff]
  %v127 = vld [vmem:[%s1 + $0x260] sm:$0xff]
  %v128 = vld [vmem:[%s1 + $0x268] sm:$0xff]
  %v129 = vld [vmem:[%s1 + $0x270] sm:$0xff]
  %v130 = vld [vmem:[%s1 + $0x278] sm:$0xff]
  %v131 = vld [vmem:[%s1 + $0x280] sm:$0xff]
  %v132 = vld [vmem:[%s1 + $0x288] sm:$0xff]
  %v133 = vld [vmem:[%s1 + $0x290] sm:$0xff]
  %v134 = vld [vmem:[%s1 + $0x298] sm:$0xff]
  %v135 = vld [vmem:[%s1 + $0x2a0] sm:$0xff]
  %v136 = vld [vmem:[%s1 + $0x2a8] sm:$0xff]
  %v137 = vld [vmem:[%s1 + $0x2b0] sm:$0xff]
  %v138 = vld [vmem:[%s1 + $0x2b8] sm:$0xff]
  %v139 = vld [vmem:[%s1 + $0x2c0] sm:$0xff]
  %v140 = vld [vmem:[%s1 + $0x2c8] sm:$0xff]
  %v141 = vld [vmem:[%s1 + $0x2d0] sm:$0xff]
  %v142 = vld [vmem:[%s1 + $0x2d8] sm:$0xff]
  %v143 = vld [vmem:[%s1 + $0x2e0] sm:$0xff]
  %v144 = vld [vmem:[%s1 + $0x2e8] sm:$0xff]
  %v145 = vld [vmem:[%s1 + $0x2f0] sm:$0xff]
  %v146 = vld [vmem:[%s1 + $0x2f8] sm:$0xff]
  %v147 = vld [vmem:[%s1 + $0x300] sm:$0xff]
  %v148 = vld [vmem:[%s1 + $0x308] sm:$0xff]
  %v149 = vld [vmem:[%s1 + $0x310] sm:$0xff]
  %v150 = vld [vmem:[%s1 + $0x318] sm:$0xff]
  %v151 = vld [vmem:[%s1 + $0x320] sm:$0xff]
  %v152 = vld [vmem:[%s1 + $0x328] sm:$0xff]
  %v153 = vld [vmem:[%s1 + $0x330] sm:$0xff]
  %v154 = vld [vmem:[%s1 + $0x338] sm:$0xff]
  %v155 = vld [vmem:[%s1 + $0x340] sm:$0xff]
  %v156 = vld [vmem:[%s1 + $0x348] sm:$0xff]
  %v157 = vld [vmem:[%s1 + $0x350] sm:$0xff]
  %v158 = vld [vmem:[%s1 + $0x358] sm:$0xff]
  %v159 = vld [vmem:[%s1 + $0x360] sm:$0xff]
  %v160 = vld [vmem:[%s1 + $0x368] sm:$0xff]
  %v161 = vld [vmem:[%s1 + $0x370] sm:$0xff]
  %v162 = vld [vmem:[%s1 + $0x378] sm:$0xff]
  %v163 = vld [vmem:[%s1 + $0x380] sm:$0xff]
  %v164 = vld [vmem:[%s1 + $0x388] sm:$0xff]
  %v165 = vld [vmem:[%s1 + $0x390] sm:$0xff]
  %v166 = vld [vmem:[%s1 + $0x398] sm:$0xff]
  %v167 = vld [vmem:[%s1 + $0x3a0] sm:$0xff]
  %v168 = vld [vmem:[%s1 + $0x3a8] sm:$0xff]
  %v169 = vld [vmem:[%s1 + $0x3b0] sm:$0xff]
  %v170 = vld [vmem:[%s1 + $0x3b8] sm:$0xff]
  %v171 = vld [vmem:[%s1 + $0x3c0] sm:$0xff]
  %v172 = vld [vmem:[%s1 + $0x3c8] sm:$0xff]
  %v173 = vld [vmem:[%s1 + $0x3d0] sm:$0xff]
  %v174 = vld [vmem:[%s1 + $0x3d8] sm:$0xff]
  %v175 = vld [vmem:[%s1 + $0x3e0] sm:$0xff]
  %v176 = vld [vmem:[%s1 + $0x3e8] sm:$0xff]
  %v177 = vld [vmem:[%s1 + $0x3f0] sm:$0xff]
  %v178 = vld [vmem:[%s1 + $0x3f8] sm:$0xff]
  %v179 = vld [vmem:[%s1 + $0x400] sm:$0xff]
  %v180 = vld [vmem:[%s1 + $0x408] sm:$0xff]
  %v181 = vld [vmem:[%s1 + $0x410] sm:$0xff]
  %v182 = vld [vmem:[%s1 + $0x418] sm:$0xff]
  %v183 = vld [vmem:[%s1 + $0x420] sm:$0xff]
  %v184 = vld [vmem:[%s1 + $0x428] sm:$0xff]
  %v185 = vld [vmem:[%s1 + $0x430] sm:$0xff]
  %v186 = vld [vmem:[%s1 + $0x438] sm:$0xff]
  %v187 = vld [vmem:[%s1 + $0x440] sm:$0xff]
  %v188 = vld [vmem:[%s1 + $0x448] sm:$0xff]
  %v189 = vld [vmem:[%s1 + $0x450] sm:$0xff]
  %v190 = vld [vmem:[%s1 + $0x458] sm:$0xff]
  %v191 = vld [vmem:[%s1 + $0x460] sm:$0xff]
  %v192 = vld [vmem:[%s1 + $0x468] sm:$0xff]
  %v193 = vld [vmem:[%s1 + $0x470] sm:$0xff]
  %v194 = vld [vmem:[%s1 + $0x478] sm:$0xff]
  %v195 = vld [vmem:[%s1 + $0x480] sm:$0xff]
  %v196 = vld [vmem:[%s1 + $0x488] sm:$0xff]
  %v197 = vld [vmem:[%s1 + $0x490] sm:$0xff]
  %v198 = vld [vmem:[%s1 + $0x498] sm:$0xff]
  %v199 = vld [vmem:[%s1 + $0x4a0] sm:$0xff]
  %v200 = vld [vmem:[%s1 + $0x4a8] sm:$0xff]
  %v201 = vld [vmem:[%s1 + $0x4b0] sm:$0xff]
  %v202 = vld [vmem:[%s1 + $0x4b8] sm:$0xff]
  %v203 = vld [vmem:[%s1 + $0x4c0] sm:$0xff]
  %v204 = vld [vmem:[%s1 + $0x4c8] sm:$0xff]
  %v205 = vld [vmem:[%s1 + $0x4d0] sm:$0xff]
  %v206 = vld [vmem:[%s1 + $0x4d8] sm:$0xff]
  %v207 = vld [vmem:[%s1 + $0x4e0] sm:$0xff]
  %v208 = vld [vmem:[%s1 + $0x4e8] sm:$0xff]
  %v209 = vld [vmem:[%s1 + $0x4f0] sm:$0xff]
  %v210 = vld [vmem:[%s1 + $0x4f8] sm:$0xff]
  %v211 = vld [vmem:[%s1 + $0x500] sm:$0xff]
  %v212 = vld [vmem:[%s1 + $0x508] sm:$0xff]
  %v213 = vld [vmem:[%s1 + $0x510] sm:$0xff]
  %v214 = vld [vmem:[%s1 + $0x518] sm:$0xff]
  %v215 = vld [vmem:[%s1 + $0x520] sm:$0xff]
  %v216 = vld [vmem:[%s1 + $0x528] sm:$0xff]
  %v217 = vld [vmem:[%s1 + $0x530] sm:$0xff]
  %v218 = vld [vmem:[%s1 + $0x538] sm:$0xff]
  %v219 = vld [vmem:[%s1 + $0x540] sm:$0xff]
  %v220 = vld [vmem:[%s1 + $0x548] sm:$0xff]
  %v221 = vld [vmem:[%s1 + $0x550] sm:$0xff]
  %v222 = vld [vmem:[%s1 + $0x558] sm:$0xff]
  %v223 = vld [vmem:[%s1 + $0x560] sm:$0xff]
  %v224 = vld [vmem:[%s1 + $0x568] sm:$0xff]
  %v225 = vld [vmem:[%s1 + $0x570] sm:$0xff]
  %v226 = vld [vmem:[%s1 + $0x578] sm:$0xff]
  %v227 = vld [vmem:[%s1 + $0x580] sm:$0xff]
  %v228 = vld [vmem:[%s1 + $0x588] sm:$0xff]
  %v229 = vld [vmem:[%s1 + $0x590] sm:$0xff]
  %v230 = vld [vmem:[%s1 + $0x598] sm:$0xff]
  %v231 = vld [vmem:[%s1 + $0x5a0] sm:$0xff]
  %v232 = vld [vmem:[%s1 + $0x5a8] sm:$0xff]
  %v233 = vld [vmem:[%s1 + $0x5b0] sm:$0xff]
  %v234 = vld [vmem:[%s1 + $0x5b8] sm:$0xff]
  %v235 = vld [vmem:[%s1 + $0x5c0] sm:$0xff]
  %v236 = vld [vmem:[%s1 + $0x5c8] sm:$0xff]
  %v237 = vld [vmem:[%s1 + $0x5d0] sm:$0xff]
  %v238 = vld [vmem:[%s1 + $0x5d8] sm:$0xff]
  %v239 = vld [vmem:[%s1 + $0x5e0] sm:$0xff]
  %v240 = vld [vmem:[%s1 + $0x5e8] sm:$0xff]
  %v241 = vld [vmem:[%s1 + $0x5f0] sm:$0xff]
  %v242 = vld [vmem:[%s1 + $0x5f8] sm:$0xff]
  %v243 = vld [vmem:[%s1 + $0x600] sm:$0xff]
  %v244 = vld [vmem:[%s1 + $0x608] sm:$0xff]
  %v245 = vld [vmem:[%s1 + $0x610] sm:$0xff]
  %v246 = vld [vmem:[%s1 + $0x618] sm:$0xff]
  %v247 = vld [vmem:[%s1 + $0x620] sm:$0xff]
  %v248 = vld [vmem:[%s1 + $0x628] sm:$0xff]
  %v249 = vld [vmem:[%s1 + $0x630] sm:$0xff]
  %v250 = vld [vmem:[%s1 + $0x638] sm:$0xff]
  %v251 = vld [vmem:[%s1 + $0x640] sm:$0xff]
  %v252 = vld [vmem:[%s1 + $0x648] sm:$0xff]
  %v253 = vld [vmem:[%s1 + $0x650] sm:$0xff]
  %v254 = vld [vmem:[%s1 + $0x658] sm:$0xff]
  %v255 = vld [vmem:[%s1 + $0x660] sm:$0xff]
  %v256 = vld [vmem:[%s1 + $0x668] sm:$0xff]
  %v257 = vld [vmem:[%s1 + $0x670] sm:$0xff]
  %v258 = vld [vmem:[%s1 + $0x678] sm:$0xff]
  %v259 = vld [vmem:[%s1 + $0x680] sm:$0xff]
  %v260 = vld [vmem:[%s1 + $0x688] sm:$0xff]
  %v261 = vld [vmem:[%s1 + $0x690] sm:$0xff]
  %v262 = vld [vmem:[%s1 + $0x698] sm:$0xff]
  %v263 = vld [vmem:[%s1 + $0x6a0] sm:$0xff]
  %v264 = vld [vmem:[%s1 + $0x6a8] sm:$0xff]
  %v265 = vld [vmem:[%s1 + $0x6b0] sm:$0xff]
  %v266 = vld [vmem:[%s1 + $0x6b8] sm:$0xff]
  %v267 = vld [vmem:[%s1 + $0x6c0] sm:$0xff]
  %v268 = vld [vmem:[%s1 + $0x6c8] sm:$0xff]
  %v269 = vld [vmem:[%s1 + $0x6d0] sm:$0xff]
  %v270 = vld [vmem:[%s1 + $0x6d8] sm:$0xff]
  %v271 = vld [vmem:[%s1 + $0x6e0] sm:$0xff]
  %v272 = vld [vmem:[%s1 + $0x6e8] sm:$0xff]
  %v273 = vld [vmem:[%s1 + $0x6f0] sm:$0xff]
  %v274 = vld [vmem:[%s1 + $0x6f8] sm:$0xff]
  %v275 = vld [vmem:[%s1 + $0x700] sm:$0xff]
  %v276 = vld [vmem:[%s1 + $0x708] sm:$0xff]
  %v277 = vld [vmem:[%s1 + $0x710] sm:$0xff]
  %v278 = vld [vmem:[%s1 + $0x718] sm:$0xff]
  %v279 = vld [vmem:[%s1 + $0x720] sm:$0xff]
  %v280 = vld [vmem:[%s1 + $0x728] sm:$0xff]
  %v281 = vld [vmem:[%s1 + $0x730] sm:$0xff]
  %v282 = vld [vmem:[%s1 + $0x738] sm:$0xff]
  %v283 = vld [vmem:[%s1 + $0x740] sm:$0xff]
  %v284 = vld [vmem:[%s1 + $0x748] sm:$0xff]
  %v285 = vld [vmem:[%s1 + $0x750] sm:$0xff]
  %v286 = vld [vmem:[%s1 + $0x758] sm:$0xff]
  %v287 = vld [vmem:[%s1 + $0x760] sm:$0xff]
  %v288 = vld [vmem:[%s1 + $0x768] sm:$0xff]
  %v289 = vld [vmem:[%s1 + $0x770] sm:$0xff]
  %v290 = vld [vmem:[%s1 + $0x778] sm:$0xff]
  %v291 = vld [vmem:[%s1 + $0x780] sm:$0xff]
  %v292 = vld [vmem:[%s1 + $0x788] sm:$0xff]
  %v293 = vld [vmem:[%s1 + $0x790] sm:$0xff]
  %v294 = vld [vmem:[%s1 + $0x798] sm:$0xff]
  %v295 = vld [vmem:[%s1 + $0x7a0] sm:$0xff]
  %v296 = vld [vmem:[%s1 + $0x7a8] sm:$0xff]
  %v297 = vld [vmem:[%s1 + $0x7b0] sm:$0xff]
  %v298 = vld [vmem:[%s1 + $0x7b8] sm:$0xff]
  %v299 = vld [vmem:[%s1 + $0x7c0] sm:$0xff]
  %v300 = vld [vmem:[%s1 + $0x7c8] sm:$0xff]
  %v301 = vld [vmem:[%s1 + $0x7d0] sm:$0xff]
  %v302 = vld [vmem:[%s1 + $0x7d8] sm:$0xff]
  %v303 = vld [vmem:[%s1 + $0x7e0] sm:$0xff]
  %v304 = vld [vmem:[%s1 + $0x7e8] sm:$0xff]
  %v305 = vld [vmem:[%s1 + $0x7f0] sm:$0xff]
  %v306 = vld [vmem:[%s1 + $0x7f8] sm:$0xff]
  %v307 = vld [vmem:[%s1 + $0x800] sm:$0xff]
  %v308 = vld [vmem:[%s1 + $0x808] sm:$0xff]
  %v309 = vld [vmem:[%s1 + $0x810] sm:$0xff]
  %v310 = vld [vmem:[%s1 + $0x818] sm:$0xff]
  %v311 = vld [vmem:[%s1 + $0x820] sm:$0xff]
  %v312 = vld [vmem:[%s1 + $0x828] sm:$0xff]
  %v313 = vld [vmem:[%s1 + $0x830] sm:$0xff]
  %v314 = vld [vmem:[%s1 + $0x838] sm:$0xff]
  %v315 = vld [vmem:[%s1 + $0x840] sm:$0xff]
  %v316 = vld [vmem:[%s1 + $0x848] sm:$0xff]
  %v317 = vld [vmem:[%s1 + $0x850] sm:$0xff]
  %v318 = vld [vmem:[%s1 + $0x858] sm:$0xff]
  %v319 = vld [vmem:[%s1 + $0x860] sm:$0xff]
  %v320 = vld [vmem:[%s1 + $0x868] sm:$0xff]
  %v321 = vld [vmem:[%s1 + $0x870] sm:$0xff]
  %v322 = vld [vmem:[%s1 + $0x878] sm:$0xff]
  %v323 = vld [vmem:[%s1 + $0x880] sm:$0xff]
  %v324 = vld [vmem:[%s1 + $0x888] sm:$0xff]
  %v325 = vld [vmem:[%s1 + $0x890] sm:$0xff]
  %v326 = vld [vmem:[%s1 + $0x898] sm:$0xff]
  %v327 = vld [vmem:[%s1 + $0x8a0] sm:$0xff]
  %v328 = vld [vmem:[%s1 + $0x8a8] sm:$0xff]
  %v329 = vld [vmem:[%s1 + $0x8b0] sm:$0xff]
  %v330 = vld [vmem:[%s1 + $0x8b8] sm:$0xff]
  %v331 = vld [vmem:[%s1 + $0x8c0] sm:$0xff]
  %v332 = vld [vmem:[%s1 + $0x8c8] sm:$0xff]
  %v333 = vld [vmem:[%s1 + $0x8d0] sm:$0xff]
  %v334 = vld [vmem:[%s1 + $0x8d8] sm:$0xff]
  %v335 = vld [vmem:[%s1 + $0x8e0] sm:$0xff]
  %v336 = vld [vmem:[%s1 + $0x8e8] sm:$0xff]
  %v337 = vld [vmem:[%s1 + $0x8f0] sm:$0xff]
  %v338 = vld [vmem:[%s1 + $0x8f8] sm:$0xff]
  %v339 = vld [vmem:[%s1 + $0x900] sm:$0xff]
  %v340 = vld [vmem:[%s1 + $0x908] sm:$0xff]
  %v341 = vld [vmem:[%s1 + $0x910] sm:$0xff]
  %v342 = vld [vmem:[%s1 + $0x918] sm:$0xff]
  %v343 = vld [vmem:[%s1 + $0x920] sm:$0xff]
  %v344 = vld [vmem:[%s1 + $0x928] sm:$0xff]
  %v345 = vld [vmem:[%s1 + $0x930] sm:$0xff]
  %v346 = vld [vmem:[%s1 + $0x938] sm:$0xff]
  %v347 = vld [vmem:[%s1 + $0x940] sm:$0xff]
  %v348 = vld [vmem:[%s1 + $0x948] sm:$0xff]
  %v349 = vld [vmem:[%s1 + $0x950] sm:$0xff]
  %v350 = vld [vmem:[%s1 + $0x958] sm:$0xff]
  %v351 = vld [vmem:[%s1 + $0x960] sm:$0xff]
  %v352 = vld [vmem:[%s1 + $0x968] sm:$0xff]
  %v353 = vld [vmem:[%s1 + $0x970] sm:$0xff]
  %v354 = vld [vmem:[%s1 + $0x978] sm:$0xff]
  %v355 = vld [vmem:[%s1 + $0x980] sm:$0xff]
  %v356 = vld [vmem:[%s1 + $0x988] sm:$0xff]
  %v357 = vld [vmem:[%s1 + $0x990] sm:$0xff]
  %v358 = vld [vmem:[%s1 + $0x998] sm:$0xff]
  %v359 = vld [vmem:[%s1 + $0x9a0] sm:$0xff]
  %v360 = vld [vmem:[%s1 + $0x9a8] sm:$0xff]
  %v361 = vld [vmem:[%s1 + $0x9b0] sm:$0xff]
  %v362 = vld [vmem:[%s1 + $0x9b8] sm:$0xff]
  %v363 = vld [vmem:[%s1 + $0x9c0] sm:$0xff]
  %v364 = vld [vmem:[%s1 + $0x9c8] sm:$0xff]
  %v365 = vld [vmem:[%s1 + $0x9d0] sm:$0xff]
  %v366 = vld [vmem:[%s1 + $0x9d8] sm:$0xff]
  %v367 = vld [vmem:[%s1 + $0x9e0] sm:$0xff]
  %v368 = vld [vmem:[%s1 + $0x9e8] sm:$0xff]
  %v369 = vld [vmem:[%s1 + $0x9f0] sm:$0xff]
  %v370 = vld [vmem:[%s1 + $0x9f8] sm:$0xff]
  %v371 = vld [vmem:[%s1 + $0xa00] sm:$0xff]
  %v372 = vld [vmem:[%s1 + $0xa08] sm:$0xff]
  %v373 = vld [vmem:[%s1 + $0xa10] sm:$0xff]
  %v374 = vld [vmem:[%s1 + $0xa18] sm:$0xff]
  %v375 = vld [vmem:[%s1 + $0xa20] sm:$0xff]
  %v376 = vld [vmem:[%s1 + $0xa28] sm:$0xff]
  %v377 = vld [vmem:[%s1 + $0xa30] sm:$0xff]
  %v378 = vld [vmem:[%s1 + $0xa38] sm:$0xff]
  %v379 = vld [vmem:[%s1 + $0xa40] sm:$0xff]
  %v380 = vld [vmem:[%s1 + $0xa48] sm:$0xff]
  %v381 = vld [vmem:[%s1 + $0xa50] sm:$0xff]
  %v382 = vld [vmem:[%s1 + $0xa58] sm:$0xff]
  %v383 = vld [vmem:[%s1 + $0xa60] sm:$0xff]
  %v384 = vld [vmem:[%s1 + $0xa68] sm:$0xff]
  %v385 = vld [vmem:[%s1 + $0xa70] sm:$0xff]
  %v386 = vld [vmem:[%s1 + $0xa78] sm:$0xff]
  %v387 = vld [vmem:[%s1 + $0xa80] sm:$0xff]
  %v388 = vld [vmem:[%s1 + $0xa88] sm:$0xff]
  %v389 = vld [vmem:[%s1 + $0xa90] sm:$0xff]
  %v390 = vld [vmem:[%s1 + $0xa98] sm:$0xff]
  %v391 = vld [vmem:[%s1 + $0xaa0] sm:$0xff]
  %v392 = vld [vmem:[%s1 + $0xaa8] sm:$0xff]
  %v393 = vld [vmem:[%s1 + $0xab0] sm:$0xff]
  %v394 = vld [vmem:[%s1 + $0xab8] sm:$0xff]
  %v395 = vld [vmem:[%s1 + $0xac0] sm:$0xff]
  %v396 = vld [vmem:[%s1 + $0xac8] sm:$0xff]
  %v397 = vld [vmem:[%s1 + $0xad0] sm:$0xff]
  %v398 = vld [vmem:[%s1 + $0xad8] sm:$0xff]
  %v399 = vld [vmem:[%s1 + $0xae0] sm:$0xff]
  %v400 = vld [vmem:[%s1 + $0xae8] sm:$0xff]
  %v401 = vld [vmem:[%s1 + $0xaf0] sm:$0xff]
  %v402 = vld [vmem:[%s1 + $0xaf8] sm:$0xff]
  %v403 = vld [vmem:[%s1 + $0xb00] sm:$0xff]
  %v404 = vld [vmem:[%s1 + $0xb08] sm:$0xff]
  %v405 = vld [vmem:[%s1 + $0xb10] sm:$0xff]
  %v406 = vld [vmem:[%s1 + $0xb18] sm:$0xff]
  %v407 = vld [vmem:[%s1 + $0xb20] sm:$0xff]
  %v408 = vld [vmem:[%s1 + $0xb28] sm:$0xff]
  %v409 = vld [vmem:[%s1 + $0xb30] sm:$0xff]
  %v410 = vld [vmem:[%s1 + $0xb38] sm:$0xff]
  %v411 = vld [vmem:[%s1 + $0xb40] sm:$0xff]
  %v412 = vld [vmem:[%s1 + $0xb48] sm:$0xff]
  %v413 = vld [vmem:[%s1 + $0xb50] sm:$0xff]
  %v414 = vld [vmem:[%s1 + $0xb58] sm:$0xff]
  %v415 = vld [vmem:[%s1 + $0xb60] sm:$0xff]
  %v416 = vld [vmem:[%s1 + $0xb68] sm:$0xff]
  %v417 = vld [vmem:[%s1 + $0xb70] sm:$0xff]
  %v418 = vld [vmem:[%s1 + $0xb78] sm:$0xff]
  %v419 = vld [vmem:[%s1 + $0xb80] sm:$0xff]
  %v420 = vld [vmem:[%s1 + $0xb88] sm:$0xff]
  %v421 = vld [vmem:[%s1 + $0xb90] sm:$0xff]
  %v422 = vld [vmem:[%s1 + $0xb98] sm:$0xff]
  %v423 = vld [vmem:[%s1 + $0xba0] sm:$0xff]
  %v424 = vld [vmem:[%s1 + $0xba8] sm:$0xff]
  %v425 = vld [vmem:[%s1 + $0xbb0] sm:$0xff]
  %v426 = vld [vmem:[%s1 + $0xbb8] sm:$0xff]
  %v427 = vld [vmem:[%s1 + $0xbc0] sm:$0xff]
  %v428 = vld [vmem:[%s1 + $0xbc8] sm:$0xff]
  %v429 = vld [vmem:[%s1 + $0xbd0] sm:$0xff]
  %v430 = vld [vmem:[%s1 + $0xbd8] sm:$0xff]
  %v431 = vld [vmem:[%s1 + $0xbe0] sm:$0xff]
  %v432 = vld [vmem:[%s1 + $0xbe8] sm:$0xff]
  %v433 = vld [vmem:[%s1 + $0xbf0] sm:$0xff]
  %v434 = vld [vmem:[%s1 + $0xbf8] sm:$0xff]
  %v435 = vld [vmem:[%s1 + $0xc00] sm:$0xff]
  %v436 = vld [vmem:[%s1 + $0xc08] sm:$0xff]
  %v437 = vld [vmem:[%s1 + $0xc10] sm:$0xff]
  %v438 = vld [vmem:[%s1 + $0xc18] sm:$0xff]
  %v439 = vld [vmem:[%s1 + $0xc20] sm:$0xff]
  %v440 = vld [vmem:[%s1 + $0xc28] sm:$0xff]
  %v441 = vld [vmem:[%s1 + $0xc30] sm:$0xff]
  %v442 = vld [vmem:[%s1 + $0xc38] sm:$0xff]
  %v443 = vld [vmem:[%s1 + $0xc40] sm:$0xff]
  %v444 = vld [vmem:[%s1 + $0xc48] sm:$0xff]
  %v445 = vld [vmem:[%s1 + $0xc50] sm:$0xff]
  %v446 = vld [vmem:[%s1 + $0xc58] sm:$0xff]
  %v447 = vld [vmem:[%s1 + $0xc60] sm:$0xff]
  %v448 = vld [vmem:[%s1 + $0xc68] sm:$0xff]
  %v449 = vld [vmem:[%s1 + $0xc70] sm:$0xff]
  %v450 = vld [vmem:[%s1 + $0xc78] sm:$0xff]
  %v451 = vld [vmem:[%s2] sm:$0x1]
  %v453 = vlaneseq
  %v454 = vshrl.u32 %v453, 7
  %v455 = vsub.s32 0, %v454
  %v456 = vrot.slane %v451, %v455
  %458 = vmatprep.subr.mxu0 0.0
  %459 = vmatpush1.msra.mxu0 %v51
  %460 = vmatprep.subr.mxu0 0.0
  %461 = vmatpush1.msra.mxu0 %v52
  %462 = vmatprep.subr.mxu0 0.0
  %463 = vmatpush1.msra.mxu0 %v53
  %464 = vmatprep.subr.mxu0 0.0
  %465 = vmatpush1.msra.mxu0 %v54
  %466 = vmatprep.subr.mxu0 0.0
  %467 = vmatpush1.msra.mxu0 %v55
  %468 = vmatprep.subr.mxu0 0.0
  %469 = vmatpush1.msra.mxu0 %v56
  %470 = vmatprep.subr.mxu0 0.0
  %471 = vmatpush1.msra.mxu0 %v57
  %472 = vmatprep.subr.mxu0 0.0
  %473 = vmatpush1.msra.mxu0 %v58
  %474 = vmatprep.subr.mxu0 0.0
  %475 = vmatpush1.msra.mxu0 %v59
  %476 = vmatprep.subr.mxu0 0.0
  %477 = vmatpush1.msra.mxu0 %v60
  %478 = vmatprep.subr.mxu0 0.0
  %479 = vmatpush1.msra.mxu0 %v61
  %480 = vmatprep.subr.mxu0 0.0
  %481 = vmatpush1.msra.mxu0 %v62
  %482 = vmatprep.subr.mxu0 0.0
  %483 = vmatpush1.msra.mxu0 %v63
  %484 = vmatprep.subr.mxu0 0.0
  %485 = vmatpush1.msra.mxu0 %v64
  %486 = vmatprep.subr.mxu0 0.0
  %487 = vmatpush1.msra.mxu0 %v65
  %488 = vmatprep.subr.mxu0 0.0
  %489 = vmatpush1.msra.mxu0 %v66
  %490 = vmatprep.subr.mxu0 0.0
  %491 = vmatpush1.msra.mxu0 %v67
  %492 = vmatprep.subr.mxu0 0.0
  %493 = vmatpush1.msra.mxu0 %v68
  %494 = vmatprep.subr.mxu0 0.0
  %495 = vmatpush1.msra.mxu0 %v69
  %496 = vmatprep.subr.mxu0 0.0
  %497 = vmatpush1.msra.mxu0 %v70
  %498 = vmatprep.subr.mxu0 0.0
  %499 = vmatpush1.msra.mxu0 %v71
  %500 = vmatprep.subr.mxu0 0.0
  %501 = vmatpush1.msra.mxu0 %v72
  %502 = vmatprep.subr.mxu0 0.0
  %503 = vmatpush1.msra.mxu0 %v73
  %504 = vmatprep.subr.mxu0 0.0
  %505 = vmatpush1.msra.mxu0 %v74
  %506 = vmatprep.subr.mxu0 0.0
  %507 = vmatpush1.msra.mxu0 %v75
  %508 = vmatprep.subr.mxu0 0.0
  %509 = vmatpush1.msra.mxu0 %v76
  %510 = vmatprep.subr.mxu0 0.0
  %511 = vmatpush1.msra.mxu0 %v77
  %512 = vmatprep.subr.mxu0 0.0
  %513 = vmatpush1.msra.mxu0 %v78
  %514 = vmatprep.subr.mxu0 0.0
  %515 = vmatpush1.msra.mxu0 %v79
  %516 = vmatprep.subr.mxu0 0.0
  %517 = vmatpush1.msra.mxu0 %v80
  %518 = vmatprep.subr.mxu0 0.0
  %519 = vmatpush1.msra.mxu0 %v81
  %520 = vmatprep.subr.mxu0 0.0
  %521 = vmatpush1.msra.mxu0 %v82
  %522 = vmatprep.mubr.f32.mxu0 %v27
  %523 = vmatmul.mubr.f32.gmra.mrb[0].mxu0 %v26
  %v524 = vpop.f32.mrb[0].mxu0
  %v525 = vadd.f32 %v456, %v524
  %v526 = vpop.f32.mrb[0].mxu0
  %527 = vdwg.mxu0
  %528 = vmatprep.subr.mxu0 0.0
  %529 = vmatpush1.msra.mxu0 %v83
  %530 = vmatprep.subr.mxu0 0.0
  %531 = vmatpush1.msra.mxu0 %v84
  %532 = vmatprep.subr.mxu0 0.0
  %533 = vmatpush1.msra.mxu0 %v85
  %534 = vmatprep.subr.mxu0 0.0
  %535 = vmatpush1.msra.mxu0 %v86
  %536 = vmatprep.subr.mxu0 0.0
  %537 = vmatpush1.msra.mxu0 %v87
  %538 = vmatprep.subr.mxu0 0.0
  %539 = vmatpush1.msra.mxu0 %v88
  %540 = vmatprep.subr.mxu0 0.0
  %541 = vmatpush1.msra.mxu0 %v89
  %542 = vmatprep.subr.mxu0 0.0
  %543 = vmatpush1.msra.mxu0 %v90
  %544 = vmatprep.subr.mxu0 0.0
  %545 = vmatpush1.msra.mxu0 %v91
  %546 = vmatprep.subr.mxu0 0.0
  %547 = vmatpush1.msra.mxu0 %v92
  %548 = vmatprep.subr.mxu0 0.0
  %549 = vmatpush1.msra.mxu0 %v93
  %550 = vmatprep.subr.mxu0 0.0
  %551 = vmatpush1.msra.mxu0 %v94
  %552 = vmatprep.subr.mxu0 0.0
  %553 = vmatpush1.msra.mxu0 %v95
  %554 = vmatprep.subr.mxu0 0.0
  %555 = vmatpush1.msra.mxu0 %v96
  %556 = vmatprep.subr.mxu0 0.0
  %557 = vmatpush1.msra.mxu0 %v97
  %558 = vmatprep.subr.mxu0 0.0
  %559 = vmatpush1.msra.mxu0 %v98
  %560 = vmatprep.subr.mxu0 0.0
  %561 = vmatpush1.msra.mxu0 %v99
  %562 = vmatprep.subr.mxu0 0.0
  %563 = vmatpush1.msra.mxu0 %v100
  %564 = vmatprep.subr.mxu0 0.0
  %565 = vmatpush1.msra.mxu0 %v101
  %566 = vmatprep.subr.mxu0 0.0
  %567 = vmatpush1.msra.mxu0 %v102
  %568 = vmatprep.subr.mxu0 0.0
  %569 = vmatpush1.msra.mxu0 %v103
  %570 = vmatprep.subr.mxu0 0.0
  %571 = vmatpush1.msra.mxu0 %v104
  %572 = vmatprep.subr.mxu0 0.0
  %573 = vmatpush1.msra.mxu0 %v105
  %574 = vmatprep.subr.mxu0 0.0
  %575 = vmatpush1.msra.mxu0 %v106
  %576 = vmatprep.subr.mxu0 0.0
  %577 = vmatpush1.msra.mxu0 %v107
  %578 = vmatprep.subr.mxu0 0.0
  %579 = vmatpush1.msra.mxu0 %v108
  %580 = vmatprep.subr.mxu0 0.0
  %581 = vmatpush1.msra.mxu0 %v109
  %582 = vmatprep.subr.mxu0 0.0
  %583 = vmatpush1.msra.mxu0 %v110
  %584 = vmatprep.subr.mxu0 0.0
  %585 = vmatpush1.msra.mxu0 %v111
  %586 = vmatprep.subr.mxu0 0.0
  %587 = vmatpush1.msra.mxu0 %v112
  %588 = vmatprep.subr.mxu0 0.0
  %589 = vmatpush1.msra.mxu0 %v113
  %590 = vmatprep.subr.mxu0 0.0
  %591 = vmatpush1.msra.mxu0 %v114
  %592 = vmatprep.mubr.f32.mxu0 %v29
  %593 = vmatmul.mubr.f32.gmra.mrb[0].mxu0 %v28
  %v594 = vpop.f32.mrb[0].mxu0
  %v595 = vadd.f32 %v525, %v594
  %v596 = vpop.f32.mrb[0].mxu0
  %597 = vdwg.mxu0
  %598 = vmatprep.subr.mxu0 0.0
  %599 = vmatpush1.msra.mxu0 %v115
  %600 = vmatprep.subr.mxu0 0.0
  %601 = vmatpush1.msra.mxu0 %v116
  %602 = vmatprep.subr.mxu0 0.0
  %603 = vmatpush1.msra.mxu0 %v117
  %604 = vmatprep.subr.mxu0 0.0
  %605 = vmatpush1.msra.mxu0 %v118
  %606 = vmatprep.subr.mxu0 0.0
  %607 = vmatpush1.msra.mxu0 %v119
  %608 = vmatprep.subr.mxu0 0.0
  %609 = vmatpush1.msra.mxu0 %v120
  %610 = vmatprep.subr.mxu0 0.0
  %611 = vmatpush1.msra.mxu0 %v121
  %612 = vmatprep.subr.mxu0 0.0
  %613 = vmatpush1.msra.mxu0 %v122
  %614 = vmatprep.subr.mxu0 0.0
  %615 = vmatpush1.msra.mxu0 %v123
  %616 = vmatprep.subr.mxu0 0.0
  %617 = vmatpush1.msra.mxu0 %v124
  %618 = vmatprep.subr.mxu0 0.0
  %619 = vmatpush1.msra.mxu0 %v125
  %620 = vmatprep.subr.mxu0 0.0
  %621 = vmatpush1.msra.mxu0 %v126
  %622 = vmatprep.subr.mxu0 0.0
  %623 = vmatpush1.msra.mxu0 %v127
  %624 = vmatprep.subr.mxu0 0.0
  %625 = vmatpush1.msra.mxu0 %v128
  %626 = vmatprep.subr.mxu0 0.0
  %627 = vmatpush1.msra.mxu0 %v129
  %628 = vmatprep.subr.mxu0 0.0
  %629 = vmatpush1.msra.mxu0 %v130
  %630 = vmatprep.subr.mxu0 0.0
  %631 = vmatpush1.msra.mxu0 %v131
  %632 = vmatprep.subr.mxu0 0.0
  %633 = vmatpush1.msra.mxu0 %v132
  %634 = vmatprep.subr.mxu0 0.0
  %635 = vmatpush1.msra.mxu0 %v133
  %636 = vmatprep.subr.mxu0 0.0
  %637 = vmatpush1.msra.mxu0 %v134
  %638 = vmatprep.subr.mxu0 0.0
  %639 = vmatpush1.msra.mxu0 %v135
  %640 = vmatprep.subr.mxu0 0.0
  %641 = vmatpush1.msra.mxu0 %v136
  %642 = vmatprep.subr.mxu0 0.0
  %643 = vmatpush1.msra.mxu0 %v137
  %644 = vmatprep.subr.mxu0 0.0
  %645 = vmatpush1.msra.mxu0 %v138
  %646 = vmatprep.subr.mxu0 0.0
  %647 = vmatpush1.msra.mxu0 %v139
  %648 = vmatprep.subr.mxu0 0.0
  %649 = vmatpush1.msra.mxu0 %v140
  %650 = vmatprep.subr.mxu0 0.0
  %651 = vmatpush1.msra.mxu0 %v141
  %652 = vmatprep.subr.mxu0 0.0
  %653 = vmatpush1.msra.mxu0 %v142
  %654 = vmatprep.subr.mxu0 0.0
  %655 = vmatpush1.msra.mxu0 %v143
  %656 = vmatprep.subr.mxu0 0.0
  %657 = vmatpush1.msra.mxu0 %v144
  %658 = vmatprep.subr.mxu0 0.0
  %659 = vmatpush1.msra.mxu0 %v145
  %660 = vmatprep.subr.mxu0 0.0
  %661 = vmatpush1.msra.mxu0 %v146
  %662 = vmatprep.mubr.f32.mxu0 %v31
  %663 = vmatmul.mubr.f32.gmra.mrb[0].mxu0 %v30
  %v664 = vpop.f32.mrb[0].mxu0
  %v665 = vadd.f32 %v595, %v664
  %v666 = vpop.f32.mrb[0].mxu0
  %667 = vdwg.mxu0
  %668 = vmatprep.subr.mxu0 0.0
  %669 = vmatpush1.msra.mxu0 %v147
  %670 = vmatprep.subr.mxu0 0.0
  %671 = vmatpush1.msra.mxu0 %v148
  %672 = vmatprep.subr.mxu0 0.0
  %673 = vmatpush1.msra.mxu0 %v149
  %674 = vmatprep.subr.mxu0 0.0
  %675 = vmatpush1.msra.mxu0 %v150
  %676 = vmatprep.subr.mxu0 0.0
  %677 = vmatpush1.msra.mxu0 %v151
  %678 = vmatprep.subr.mxu0 0.0
  %679 = vmatpush1.msra.mxu0 %v152
  %680 = vmatprep.subr.mxu0 0.0
  %681 = vmatpush1.msra.mxu0 %v153
  %682 = vmatprep.subr.mxu0 0.0
  %683 = vmatpush1.msra.mxu0 %v154
  %684 = vmatprep.subr.mxu0 0.0
  %685 = vmatpush1.msra.mxu0 %v155
  %686 = vmatprep.subr.mxu0 0.0
  %687 = vmatpush1.msra.mxu0 %v156
  %688 = vmatprep.subr.mxu0 0.0
  %689 = vmatpush1.msra.mxu0 %v157
  %690 = vmatprep.subr.mxu0 0.0
  %691 = vmatpush1.msra.mxu0 %v158
  %692 = vmatprep.subr.mxu0 0.0
  %693 = vmatpush1.msra.mxu0 %v159
  %694 = vmatprep.subr.mxu0 0.0
  %695 = vmatpush1.msra.mxu0 %v160
  %696 = vmatprep.subr.mxu0 0.0
  %697 = vmatpush1.msra.mxu0 %v161
  %698 = vmatprep.subr.mxu0 0.0
  %699 = vmatpush1.msra.mxu0 %v162
  %700 = vmatprep.subr.mxu0 0.0
  %701 = vmatpush1.msra.mxu0 %v163
  %702 = vmatprep.subr.mxu0 0.0
  %703 = vmatpush1.msra.mxu0 %v164
  %704 = vmatprep.subr.mxu0 0.0
  %705 = vmatpush1.msra.mxu0 %v165
  %706 = vmatprep.subr.mxu0 0.0
  %707 = vmatpush1.msra.mxu0 %v166
  %708 = vmatprep.subr.mxu0 0.0
  %709 = vmatpush1.msra.mxu0 %v167
  %710 = vmatprep.subr.mxu0 0.0
  %711 = vmatpush1.msra.mxu0 %v168
  %712 = vmatprep.subr.mxu0 0.0
  %713 = vmatpush1.msra.mxu0 %v169
  %714 = vmatprep.subr.mxu0 0.0
  %715 = vmatpush1.msra.mxu0 %v170
  %716 = vmatprep.subr.mxu0 0.0
  %717 = vmatpush1.msra.mxu0 %v171
  %718 = vmatprep.subr.mxu0 0.0
  %719 = vmatpush1.msra.mxu0 %v172
  %720 = vmatprep.subr.mxu0 0.0
  %721 = vmatpush1.msra.mxu0 %v173
  %722 = vmatprep.subr.mxu0 0.0
  %723 = vmatpush1.msra.mxu0 %v174
  %724 = vmatprep.subr.mxu0 0.0
  %725 = vmatpush1.msra.mxu0 %v175
  %726 = vmatprep.subr.mxu0 0.0
  %727 = vmatpush1.msra.mxu0 %v176
  %728 = vmatprep.subr.mxu0 0.0
  %729 = vmatpush1.msra.mxu0 %v177
  %730 = vmatprep.subr.mxu0 0.0
  %731 = vmatpush1.msra.mxu0 %v178
  %732 = vmatprep.mubr.f32.mxu0 %v33
  %733 = vmatmul.mubr.f32.gmra.mrb[0].mxu0 %v32
  %v734 = vpop.f32.mrb[0].mxu0
  %v735 = vadd.f32 %v665, %v734
  %v736 = vpop.f32.mrb[0].mxu0
  %737 = vdwg.mxu0
  %738 = vmatprep.subr.mxu0 0.0
  %739 = vmatpush1.msra.mxu0 %v179
  %740 = vmatprep.subr.mxu0 0.0
  %741 = vmatpush1.msra.mxu0 %v180
  %742 = vmatprep.subr.mxu0 0.0
  %743 = vmatpush1.msra.mxu0 %v181
  %744 = vmatprep.subr.mxu0 0.0
  %745 = vmatpush1.msra.mxu0 %v182
  %746 = vmatprep.subr.mxu0 0.0
  %747 = vmatpush1.msra.mxu0 %v183
  %748 = vmatprep.subr.mxu0 0.0
  %749 = vmatpush1.msra.mxu0 %v184
  %750 = vmatprep.subr.mxu0 0.0
  %751 = vmatpush1.msra.mxu0 %v185
  %752 = vmatprep.subr.mxu0 0.0
  %753 = vmatpush1.msra.mxu0 %v186
  %754 = vmatprep.subr.mxu0 0.0
  %755 = vmatpush1.msra.mxu0 %v187
  %756 = vmatprep.subr.mxu0 0.0
  %757 = vmatpush1.msra.mxu0 %v188
  %758 = vmatprep.subr.mxu0 0.0
  %759 = vmatpush1.msra.mxu0 %v189
  %760 = vmatprep.subr.mxu0 0.0
  %761 = vmatpush1.msra.mxu0 %v190
  %762 = vmatprep.subr.mxu0 0.0
  %763 = vmatpush1.msra.mxu0 %v191
  %764 = vmatprep.subr.mxu0 0.0
  %765 = vmatpush1.msra.mxu0 %v192
  %766 = vmatprep.subr.mxu0 0.0
  %767 = vmatpush1.msra.mxu0 %v193
  %768 = vmatprep.subr.mxu0 0.0
  %769 = vmatpush1.msra.mxu0 %v194
  %770 = vmatprep.subr.mxu0 0.0
  %771 = vmatpush1.msra.mxu0 %v195
  %772 = vmatprep.subr.mxu0 0.0
  %773 = vmatpush1.msra.mxu0 %v196
  %774 = vmatprep.subr.mxu0 0.0
  %775 = vmatpush1.msra.mxu0 %v197
  %776 = vmatprep.subr.mxu0 0.0
  %777 = vmatpush1.msra.mxu0 %v198
  %778 = vmatprep.subr.mxu0 0.0
  %779 = vmatpush1.msra.mxu0 %v199
  %780 = vmatprep.subr.mxu0 0.0
  %781 = vmatpush1.msra.mxu0 %v200
  %782 = vmatprep.subr.mxu0 0.0
  %783 = vmatpush1.msra.mxu0 %v201
  %784 = vmatprep.subr.mxu0 0.0
  %785 = vmatpush1.msra.mxu0 %v202
  %786 = vmatprep.subr.mxu0 0.0
  %787 = vmatpush1.msra.mxu0 %v203
  %788 = vmatprep.subr.mxu0 0.0
  %789 = vmatpush1.msra.mxu0 %v204
  %790 = vmatprep.subr.mxu0 0.0
  %791 = vmatpush1.msra.mxu0 %v205
  %792 = vmatprep.subr.mxu0 0.0
  %793 = vmatpush1.msra.mxu0 %v206
  %794 = vmatprep.subr.mxu0 0.0
  %795 = vmatpush1.msra.mxu0 %v207
  %796 = vmatprep.subr.mxu0 0.0
  %797 = vmatpush1.msra.mxu0 %v208
  %798 = vmatprep.subr.mxu0 0.0
  %799 = vmatpush1.msra.mxu0 %v209
  %800 = vmatprep.subr.mxu0 0.0
  %801 = vmatpush1.msra.mxu0 %v210
  %802 = vmatprep.mubr.f32.mxu0 %v35
  %803 = vmatmul.mubr.f32.gmra.mrb[0].mxu0 %v34
  %v804 = vpop.f32.mrb[0].mxu0
  %v805 = vadd.f32 %v735, %v804
  %v806 = vpop.f32.mrb[0].mxu0
  %807 = vdwg.mxu0
  %808 = vmatprep.subr.mxu0 0.0
  %809 = vmatpush1.msra.mxu0 %v211
  %810 = vmatprep.subr.mxu0 0.0
  %811 = vmatpush1.msra.mxu0 %v212
  %812 = vmatprep.subr.mxu0 0.0
  %813 = vmatpush1.msra.mxu0 %v213
  %814 = vmatprep.subr.mxu0 0.0
  %815 = vmatpush1.msra.mxu0 %v214
  %816 = vmatprep.subr.mxu0 0.0
  %817 = vmatpush1.msra.mxu0 %v215
  %818 = vmatprep.subr.mxu0 0.0
  %819 = vmatpush1.msra.mxu0 %v216
  %820 = vmatprep.subr.mxu0 0.0
  %821 = vmatpush1.msra.mxu0 %v217
  %822 = vmatprep.subr.mxu0 0.0
  %823 = vmatpush1.msra.mxu0 %v218
  %824 = vmatprep.subr.mxu0 0.0
  %825 = vmatpush1.msra.mxu0 %v219
  %826 = vmatprep.subr.mxu0 0.0
  %827 = vmatpush1.msra.mxu0 %v220
  %828 = vmatprep.subr.mxu0 0.0
  %829 = vmatpush1.msra.mxu0 %v221
  %830 = vmatprep.subr.mxu0 0.0
  %831 = vmatpush1.msra.mxu0 %v222
  %832 = vmatprep.subr.mxu0 0.0
  %833 = vmatpush1.msra.mxu0 %v223
  %834 = vmatprep.subr.mxu0 0.0
  %835 = vmatpush1.msra.mxu0 %v224
  %836 = vmatprep.subr.mxu0 0.0
  %837 = vmatpush1.msra.mxu0 %v225
  %838 = vmatprep.subr.mxu0 0.0
  %839 = vmatpush1.msra.mxu0 %v226
  %840 = vmatprep.subr.mxu0 0.0
  %841 = vmatpush1.msra.mxu0 %v227
  %842 = vmatprep.subr.mxu0 0.0
  %843 = vmatpush1.msra.mxu0 %v228
  %844 = vmatprep.subr.mxu0 0.0
  %845 = vmatpush1.msra.mxu0 %v229
  %846 = vmatprep.subr.mxu0 0.0
  %847 = vmatpush1.msra.mxu0 %v230
  %848 = vmatprep.subr.mxu0 0.0
  %849 = vmatpush1.msra.mxu0 %v231
  %850 = vmatprep.subr.mxu0 0.0
  %851 = vmatpush1.msra.mxu0 %v232
  %852 = vmatprep.subr.mxu0 0.0
  %853 = vmatpush1.msra.mxu0 %v233
  %854 = vmatprep.subr.mxu0 0.0
  %855 = vmatpush1.msra.mxu0 %v234
  %856 = vmatprep.subr.mxu0 0.0
  %857 = vmatpush1.msra.mxu0 %v235
  %858 = vmatprep.subr.mxu0 0.0
  %859 = vmatpush1.msra.mxu0 %v236
  %860 = vmatprep.subr.mxu0 0.0
  %861 = vmatpush1.msra.mxu0 %v237
  %862 = vmatprep.subr.mxu0 0.0
  %863 = vmatpush1.msra.mxu0 %v238
  %864 = vmatprep.subr.mxu0 0.0
  %865 = vmatpush1.msra.mxu0 %v239
  %866 = vmatprep.subr.mxu0 0.0
  %867 = vmatpush1.msra.mxu0 %v240
  %868 = vmatprep.subr.mxu0 0.0
  %869 = vmatpush1.msra.mxu0 %v241
  %870 = vmatprep.subr.mxu0 0.0
  %871 = vmatpush1.msra.mxu0 %v242
  %872 = vmatprep.mubr.f32.mxu0 %v37
  %873 = vmatmul.mubr.f32.gmra.mrb[0].mxu0 %v36
  %v874 = vpop.f32.mrb[0].mxu0
  %v875 = vadd.f32 %v805, %v874
  %v876 = vpop.f32.mrb[0].mxu0
  %877 = vdwg.mxu0
  %878 = vmatprep.subr.mxu0 0.0
  %879 = vmatpush1.msra.mxu0 %v243
  %880 = vmatprep.subr.mxu0 0.0
  %881 = vmatpush1.msra.mxu0 %v244
  %882 = vmatprep.subr.mxu0 0.0
  %883 = vmatpush1.msra.mxu0 %v245
  %884 = vmatprep.subr.mxu0 0.0
  %885 = vmatpush1.msra.mxu0 %v246
  %886 = vmatprep.subr.mxu0 0.0
  %887 = vmatpush1.msra.mxu0 %v247
  %888 = vmatprep.subr.mxu0 0.0
  %889 = vmatpush1.msra.mxu0 %v248
  %890 = vmatprep.subr.mxu0 0.0
  %891 = vmatpush1.msra.mxu0 %v249
  %892 = vmatprep.subr.mxu0 0.0
  %893 = vmatpush1.msra.mxu0 %v250
  %894 = vmatprep.subr.mxu0 0.0
  %895 = vmatpush1.msra.mxu0 %v251
  %896 = vmatprep.subr.mxu0 0.0
  %897 = vmatpush1.msra.mxu0 %v252
  %898 = vmatprep.subr.mxu0 0.0
  %899 = vmatpush1.msra.mxu0 %v253
  %900 = vmatprep.subr.mxu0 0.0
  %901 = vmatpush1.msra.mxu0 %v254
  %902 = vmatprep.subr.mxu0 0.0
  %903 = vmatpush1.msra.mxu0 %v255
  %904 = vmatprep.subr.mxu0 0.0
  %905 = vmatpush1.msra.mxu0 %v256
  %906 = vmatprep.subr.mxu0 0.0
  %907 = vmatpush1.msra.mxu0 %v257
  %908 = vmatprep.subr.mxu0 0.0
  %909 = vmatpush1.msra.mxu0 %v258
  %910 = vmatprep.subr.mxu0 0.0
  %911 = vmatpush1.msra.mxu0 %v259
  %912 = vmatprep.subr.mxu0 0.0
  %913 = vmatpush1.msra.mxu0 %v260
  %914 = vmatprep.subr.mxu0 0.0
  %915 = vmatpush1.msra.mxu0 %v261
  %916 = vmatprep.subr.mxu0 0.0
  %917 = vmatpush1.msra.mxu0 %v262
  %918 = vmatprep.subr.mxu0 0.0
  %919 = vmatpush1.msra.mxu0 %v263
  %920 = vmatprep.subr.mxu0 0.0
  %921 = vmatpush1.msra.mxu0 %v264
  %922 = vmatprep.subr.mxu0 0.0
  %923 = vmatpush1.msra.mxu0 %v265
  %924 = vmatprep.subr.mxu0 0.0
  %925 = vmatpush1.msra.mxu0 %v266
  %926 = vmatprep.subr.mxu0 0.0
  %927 = vmatpush1.msra.mxu0 %v267
  %928 = vmatprep.subr.mxu0 0.0
  %929 = vmatpush1.msra.mxu0 %v268
  %930 = vmatprep.subr.mxu0 0.0
  %931 = vmatpush1.msra.mxu0 %v269
  %932 = vmatprep.subr.mxu0 0.0
  %933 = vmatpush1.msra.mxu0 %v270
  %934 = vmatprep.subr.mxu0 0.0
  %935 = vmatpush1.msra.mxu0 %v271
  %936 = vmatprep.subr.mxu0 0.0
  %937 = vmatpush1.msra.mxu0 %v272
  %938 = vmatprep.subr.mxu0 0.0
  %939 = vmatpush1.msra.mxu0 %v273
  %940 = vmatprep.subr.mxu0 0.0
  %941 = vmatpush1.msra.mxu0 %v274
  %942 = vmatprep.mubr.f32.mxu0 %v39
  %943 = vmatmul.mubr.f32.gmra.mrb[0].mxu0 %v38
  %v944 = vpop.f32.mrb[0].mxu0
  %v945 = vadd.f32 %v875, %v944
  %v946 = vpop.f32.mrb[0].mxu0
  %947 = vdwg.mxu0
  %948 = vmatprep.subr.mxu0 0.0
  %949 = vmatpush1.msra.mxu0 %v275
  %950 = vmatprep.subr.mxu0 0.0
  %951 = vmatpush1.msra.mxu0 %v276
  %952 = vmatprep.subr.mxu0 0.0
  %953 = vmatpush1.msra.mxu0 %v277
  %954 = vmatprep.subr.mxu0 0.0
  %955 = vmatpush1.msra.mxu0 %v278
  %956 = vmatprep.subr.mxu0 0.0
  %957 = vmatpush1.msra.mxu0 %v279
  %958 = vmatprep.subr.mxu0 0.0
  %959 = vmatpush1.msra.mxu0 %v280
  %960 = vmatprep.subr.mxu0 0.0
  %961 = vmatpush1.msra.mxu0 %v281
  %962 = vmatprep.subr.mxu0 0.0
  %963 = vmatpush1.msra.mxu0 %v282
  %964 = vmatprep.subr.mxu0 0.0
  %965 = vmatpush1.msra.mxu0 %v283
  %966 = vmatprep.subr.mxu0 0.0
  %967 = vmatpush1.msra.mxu0 %v284
  %968 = vmatprep.subr.mxu0 0.0
  %969 = vmatpush1.msra.mxu0 %v285
  %970 = vmatprep.subr.mxu0 0.0
  %971 = vmatpush1.msra.mxu0 %v286
  %972 = vmatprep.subr.mxu0 0.0
  %973 = vmatpush1.msra.mxu0 %v287
  %974 = vmatprep.subr.mxu0 0.0
  %975 = vmatpush1.msra.mxu0 %v288
  %976 = vmatprep.subr.mxu0 0.0
  %977 = vmatpush1.msra.mxu0 %v289
  %978 = vmatprep.subr.mxu0 0.0
  %979 = vmatpush1.msra.mxu0 %v290
  %980 = vmatprep.subr.mxu0 0.0
  %981 = vmatpush1.msra.mxu0 %v291
  %982 = vmatprep.subr.mxu0 0.0
  %983 = vmatpush1.msra.mxu0 %v292
  %984 = vmatprep.subr.mxu0 0.0
  %985 = vmatpush1.msra.mxu0 %v293
  %986 = vmatprep.subr.mxu0 0.0
  %987 = vmatpush1.msra.mxu0 %v294
  %988 = vmatprep.subr.mxu0 0.0
  %989 = vmatpush1.msra.mxu0 %v295
  %990 = vmatprep.subr.mxu0 0.0
  %991 = vmatpush1.msra.mxu0 %v296
  %992 = vmatprep.subr.mxu0 0.0
  %993 = vmatpush1.msra.mxu0 %v297
  %994 = vmatprep.subr.mxu0 0.0
  %995 = vmatpush1.msra.mxu0 %v298
  %996 = vmatprep.subr.mxu0 0.0
  %997 = vmatpush1.msra.mxu0 %v299
  %998 = vmatprep.subr.mxu0 0.0
  %999 = vmatpush1.msra.mxu0 %v300
  %1000 = vmatprep.subr.mxu0 0.0
  %1001 = vmatpush1.msra.mxu0 %v301
  %1002 = vmatprep.subr.mxu0 0.0
  %1003 = vmatpush1.msra.mxu0 %v302
  %1004 = vmatprep.subr.mxu0 0.0
  %1005 = vmatpush1.msra.mxu0 %v303
  %1006 = vmatprep.subr.mxu0 0.0
  %1007 = vmatpush1.msra.mxu0 %v304
  %1008 = vmatprep.subr.mxu0 0.0
  %1009 = vmatpush1.msra.mxu0 %v305
  %1010 = vmatprep.subr.mxu0 0.0
  %1011 = vmatpush1.msra.mxu0 %v306
  %1012 = vmatprep.mubr.f32.mxu0 %v41
  %1013 = vmatmul.mubr.f32.gmra.mrb[0].mxu0 %v40
  %v1014 = vpop.f32.mrb[0].mxu0
  %v1015 = vadd.f32 %v945, %v1014
  %v1016 = vpop.f32.mrb[0].mxu0
  %1017 = vdwg.mxu0
  %1018 = vmatprep.subr.mxu0 0.0
  %1019 = vmatpush1.msra.mxu0 %v307
  %1020 = vmatprep.subr.mxu0 0.0
  %1021 = vmatpush1.msra.mxu0 %v308
  %1022 = vmatprep.subr.mxu0 0.0
  %1023 = vmatpush1.msra.mxu0 %v309
  %1024 = vmatprep.subr.mxu0 0.0
  %1025 = vmatpush1.msra.mxu0 %v310
  %1026 = vmatprep.subr.mxu0 0.0
  %1027 = vmatpush1.msra.mxu0 %v311
  %1028 = vmatprep.subr.mxu0 0.0
  %1029 = vmatpush1.msra.mxu0 %v312
  %1030 = vmatprep.subr.mxu0 0.0
  %1031 = vmatpush1.msra.mxu0 %v313
  %1032 = vmatprep.subr.mxu0 0.0
  %1033 = vmatpush1.msra.mxu0 %v314
  %1034 = vmatprep.subr.mxu0 0.0
  %1035 = vmatpush1.msra.mxu0 %v315
  %1036 = vmatprep.subr.mxu0 0.0
  %1037 = vmatpush1.msra.mxu0 %v316
  %1038 = vmatprep.subr.mxu0 0.0
  %1039 = vmatpush1.msra.mxu0 %v317
  %1040 = vmatprep.subr.mxu0 0.0
  %1041 = vmatpush1.msra.mxu0 %v318
  %1042 = vmatprep.subr.mxu0 0.0
  %1043 = vmatpush1.msra.mxu0 %v319
  %1044 = vmatprep.subr.mxu0 0.0
  %1045 = vmatpush1.msra.mxu0 %v320
  %1046 = vmatprep.subr.mxu0 0.0
  %1047 = vmatpush1.msra.mxu0 %v321
  %1048 = vmatprep.subr.mxu0 0.0
  %1049 = vmatpush1.msra.mxu0 %v322
  %1050 = vmatprep.subr.mxu0 0.0
  %1051 = vmatpush1.msra.mxu0 %v323
  %1052 = vmatprep.subr.mxu0 0.0
  %1053 = vmatpush1.msra.mxu0 %v324
  %1054 = vmatprep.subr.mxu0 0.0
  %1055 = vmatpush1.msra.mxu0 %v325
  %1056 = vmatprep.subr.mxu0 0.0
  %1057 = vmatpush1.msra.mxu0 %v326
  %1058 = vmatprep.subr.mxu0 0.0
  %1059 = vmatpush1.msra.mxu0 %v327
  %1060 = vmatprep.subr.mxu0 0.0
  %1061 = vmatpush1.msra.mxu0 %v328
  %1062 = vmatprep.subr.mxu0 0.0
  %1063 = vmatpush1.msra.mxu0 %v329
  %1064 = vmatprep.subr.mxu0 0.0
  %1065 = vmatpush1.msra.mxu0 %v330
  %1066 = vmatprep.subr.mxu0 0.0
  %1067 = vmatpush1.msra.mxu0 %v331
  %1068 = vmatprep.subr.mxu0 0.0
  %1069 = vmatpush1.msra.mxu0 %v332
  %1070 = vmatprep.subr.mxu0 0.0
  %1071 = vmatpush1.msra.mxu0 %v333
  %1072 = vmatprep.subr.mxu0 0.0
  %1073 = vmatpush1.msra.mxu0 %v334
  %1074 = vmatprep.subr.mxu0 0.0
  %1075 = vmatpush1.msra.mxu0 %v335
  %1076 = vmatprep.subr.mxu0 0.0
  %1077 = vmatpush1.msra.mxu0 %v336
  %1078 = vmatprep.subr.mxu0 0.0
  %1079 = vmatpush1.msra.mxu0 %v337
  %1080 = vmatprep.subr.mxu0 0.0
  %1081 = vmatpush1.msra.mxu0 %v338
  %1082 = vmatprep.mubr.f32.mxu0 %v43
  %1083 = vmatmul.mubr.f32.gmra.mrb[0].mxu0 %v42
  %v1084 = vpop.f32.mrb[0].mxu0
  %v1085 = vadd.f32 %v1015, %v1084
  %v1086 = vpop.f32.mrb[0].mxu0
  %1087 = vdwg.mxu0
  %1088 = vmatprep.subr.mxu0 0.0
  %1089 = vmatpush1.msra.mxu0 %v339
  %1090 = vmatprep.subr.mxu0 0.0
  %1091 = vmatpush1.msra.mxu0 %v340
  %1092 = vmatprep.subr.mxu0 0.0
  %1093 = vmatpush1.msra.mxu0 %v341
  %1094 = vmatprep.subr.mxu0 0.0
  %1095 = vmatpush1.msra.mxu0 %v342
  %1096 = vmatprep.subr.mxu0 0.0
  %1097 = vmatpush1.msra.mxu0 %v343
  %1098 = vmatprep.subr.mxu0 0.0
  %1099 = vmatpush1.msra.mxu0 %v344
  %1100 = vmatprep.subr.mxu0 0.0
  %1101 = vmatpush1.msra.mxu0 %v345
  %1102 = vmatprep.subr.mxu0 0.0
  %1103 = vmatpush1.msra.mxu0 %v346
  %1104 = vmatprep.subr.mxu0 0.0
  %1105 = vmatpush1.msra.mxu0 %v347
  %1106 = vmatprep.subr.mxu0 0.0
  %1107 = vmatpush1.msra.mxu0 %v348
  %1108 = vmatprep.subr.mxu0 0.0
  %1109 = vmatpush1.msra.mxu0 %v349
  %1110 = vmatprep.subr.mxu0 0.0
  %1111 = vmatpush1.msra.mxu0 %v350
  %1112 = vmatprep.subr.mxu0 0.0
  %1113 = vmatpush1.msra.mxu0 %v351
  %1114 = vmatprep.subr.mxu0 0.0
  %1115 = vmatpush1.msra.mxu0 %v352
  %1116 = vmatprep.subr.mxu0 0.0
  %1117 = vmatpush1.msra.mxu0 %v353
  %1118 = vmatprep.subr.mxu0 0.0
  %1119 = vmatpush1.msra.mxu0 %v354
  %1120 = vmatprep.subr.mxu0 0.0
  %1121 = vmatpush1.msra.mxu0 %v355
  %1122 = vmatprep.subr.mxu0 0.0
  %1123 = vmatpush1.msra.mxu0 %v356
  %1124 = vmatprep.subr.mxu0 0.0
  %1125 = vmatpush1.msra.mxu0 %v357
  %1126 = vmatprep.subr.mxu0 0.0
  %1127 = vmatpush1.msra.mxu0 %v358
  %1128 = vmatprep.subr.mxu0 0.0
  %1129 = vmatpush1.msra.mxu0 %v359
  %1130 = vmatprep.subr.mxu0 0.0
  %1131 = vmatpush1.msra.mxu0 %v360
  %1132 = vmatprep.subr.mxu0 0.0
  %1133 = vmatpush1.msra.mxu0 %v361
  %1134 = vmatprep.subr.mxu0 0.0
  %1135 = vmatpush1.msra.mxu0 %v362
  %1136 = vmatprep.subr.mxu0 0.0
  %1137 = vmatpush1.msra.mxu0 %v363
  %1138 = vmatprep.subr.mxu0 0.0
  %1139 = vmatpush1.msra.mxu0 %v364
  %1140 = vmatprep.subr.mxu0 0.0
  %1141 = vmatpush1.msra.mxu0 %v365
  %1142 = vmatprep.subr.mxu0 0.0
  %1143 = vmatpush1.msra.mxu0 %v366
  %1144 = vmatprep.subr.mxu0 0.0
  %1145 = vmatpush1.msra.mxu0 %v367
  %1146 = vmatprep.subr.mxu0 0.0
  %1147 = vmatpush1.msra.mxu0 %v368
  %1148 = vmatprep.subr.mxu0 0.0
  %1149 = vmatpush1.msra.mxu0 %v369
  %1150 = vmatprep.subr.mxu0 0.0
  %1151 = vmatpush1.msra.mxu0 %v370
  %1152 = vmatprep.mubr.f32.mxu0 %v45
  %1153 = vmatmul.mubr.f32.gmra.mrb[0].mxu0 %v44
  %v1154 = vpop.f32.mrb[0].mxu0
  %v1155 = vadd.f32 %v1085, %v1154
  %v1156 = vpop.f32.mrb[0].mxu0
  %1157 = vdwg.mxu0
  %1158 = vmatprep.subr.mxu0 0.0
  %1159 = vmatpush1.msra.mxu0 %v371
  %1160 = vmatprep.subr.mxu0 0.0
  %1161 = vmatpush1.msra.mxu0 %v372
  %1162 = vmatprep.subr.mxu0 0.0
  %1163 = vmatpush1.msra.mxu0 %v373
  %1164 = vmatprep.subr.mxu0 0.0
  %1165 = vmatpush1.msra.mxu0 %v374
  %1166 = vmatprep.subr.mxu0 0.0
  %1167 = vmatpush1.msra.mxu0 %v375
  %1168 = vmatprep.subr.mxu0 0.0
  %1169 = vmatpush1.msra.mxu0 %v376
  %1170 = vmatprep.subr.mxu0 0.0
  %1171 = vmatpush1.msra.mxu0 %v377
  %1172 = vmatprep.subr.mxu0 0.0
  %1173 = vmatpush1.msra.mxu0 %v378
  %1174 = vmatprep.subr.mxu0 0.0
  %1175 = vmatpush1.msra.mxu0 %v379
  %1176 = vmatprep.subr.mxu0 0.0
  %1177 = vmatpush1.msra.mxu0 %v380
  %1178 = vmatprep.subr.mxu0 0.0
  %1179 = vmatpush1.msra.mxu0 %v381
  %1180 = vmatprep.subr.mxu0 0.0
  %1181 = vmatpush1.msra.mxu0 %v382
  %1182 = vmatprep.subr.mxu0 0.0
  %1183 = vmatpush1.msra.mxu0 %v383
  %1184 = vmatprep.subr.mxu0 0.0
  %1185 = vmatpush1.msra.mxu0 %v384
  %1186 = vmatprep.subr.mxu0 0.0
  %1187 = vmatpush1.msra.mxu0 %v385
  %1188 = vmatprep.subr.mxu0 0.0
  %1189 = vmatpush1.msra.mxu0 %v386
  %1190 = vmatprep.subr.mxu0 0.0
  %1191 = vmatpush1.msra.mxu0 %v387
  %1192 = vmatprep.subr.mxu0 0.0
  %1193 = vmatpush1.msra.mxu0 %v388
  %1194 = vmatprep.subr.mxu0 0.0
  %1195 = vmatpush1.msra.mxu0 %v389
  %1196 = vmatprep.subr.mxu0 0.0
  %1197 = vmatpush1.msra.mxu0 %v390
  %1198 = vmatprep.subr.mxu0 0.0
  %1199 = vmatpush1.msra.mxu0 %v391
  %1200 = vmatprep.subr.mxu0 0.0
  %1201 = vmatpush1.msra.mxu0 %v392
  %1202 = vmatprep.subr.mxu0 0.0
  %1203 = vmatpush1.msra.mxu0 %v393
  %1204 = vmatprep.subr.mxu0 0.0
  %1205 = vmatpush1.msra.mxu0 %v394
  %1206 = vmatprep.subr.mxu0 0.0
  %1207 = vmatpush1.msra.mxu0 %v395
  %1208 = vmatprep.subr.mxu0 0.0
  %1209 = vmatpush1.msra.mxu0 %v396
  %1210 = vmatprep.subr.mxu0 0.0
  %1211 = vmatpush1.msra.mxu0 %v397
  %1212 = vmatprep.subr.mxu0 0.0
  %1213 = vmatpush1.msra.mxu0 %v398
  %1214 = vmatprep.subr.mxu0 0.0
  %1215 = vmatpush1.msra.mxu0 %v399
  %1216 = vmatprep.subr.mxu0 0.0
  %1217 = vmatpush1.msra.mxu0 %v400
  %1218 = vmatprep.subr.mxu0 0.0
  %1219 = vmatpush1.msra.mxu0 %v401
  %1220 = vmatprep.subr.mxu0 0.0
  %1221 = vmatpush1.msra.mxu0 %v402
  %1222 = vmatprep.mubr.f32.mxu0 %v47
  %1223 = vmatmul.mubr.f32.gmra.mrb[0].mxu0 %v46
  %v1224 = vpop.f32.mrb[0].mxu0
  %v1225 = vadd.f32 %v1155, %v1224
  %v1226 = vpop.f32.mrb[0].mxu0
  %1227 = vdwg.mxu0
  %1228 = vmatprep.subr.mxu0 0.0
  %1229 = vmatpush1.msra.mxu0 %v403
  %1230 = vmatprep.subr.mxu0 0.0
  %1231 = vmatpush1.msra.mxu0 %v404
  %1232 = vmatprep.subr.mxu0 0.0
  %1233 = vmatpush1.msra.mxu0 %v405
  %1234 = vmatprep.subr.mxu0 0.0
  %1235 = vmatpush1.msra.mxu0 %v406
  %1236 = vmatprep.subr.mxu0 0.0
  %1237 = vmatpush1.msra.mxu0 %v407
  %1238 = vmatprep.subr.mxu0 0.0
  %1239 = vmatpush1.msra.mxu0 %v408
  %1240 = vmatprep.subr.mxu0 0.0
  %1241 = vmatpush1.msra.mxu0 %v409
  %1242 = vmatprep.subr.mxu0 0.0
  %1243 = vmatpush1.msra.mxu0 %v410
  %1244 = vmatprep.subr.mxu0 0.0
  %1245 = vmatpush1.msra.mxu0 %v411
  %1246 = vmatprep.subr.mxu0 0.0
  %1247 = vmatpush1.msra.mxu0 %v412
  %1248 = vmatprep.subr.mxu0 0.0
  %1249 = vmatpush1.msra.mxu0 %v413
  %1250 = vmatprep.subr.mxu0 0.0
  %1251 = vmatpush1.msra.mxu0 %v414
  %1252 = vmatprep.subr.mxu0 0.0
  %1253 = vmatpush1.msra.mxu0 %v415
  %1254 = vmatprep.subr.mxu0 0.0
  %1255 = vmatpush1.msra.mxu0 %v416
  %1256 = vmatprep.subr.mxu0 0.0
  %1257 = vmatpush1.msra.mxu0 %v417
  %1258 = vmatprep.subr.mxu0 0.0
  %1259 = vmatpush1.msra.mxu0 %v418
  %1260 = vmatprep.subr.mxu0 0.0
  %1261 = vmatpush1.msra.mxu0 %v419
  %1262 = vmatprep.subr.mxu0 0.0
  %1263 = vmatpush1.msra.mxu0 %v420
  %1264 = vmatprep.subr.mxu0 0.0
  %1265 = vmatpush1.msra.mxu0 %v421
  %1266 = vmatprep.subr.mxu0 0.0
  %1267 = vmatpush1.msra.mxu0 %v422
  %1268 = vmatprep.subr.mxu0 0.0
  %1269 = vmatpush1.msra.mxu0 %v423
  %1270 = vmatprep.subr.mxu0 0.0
  %1271 = vmatpush1.msra.mxu0 %v424
  %1272 = vmatprep.subr.mxu0 0.0
  %1273 = vmatpush1.msra.mxu0 %v425
  %1274 = vmatprep.subr.mxu0 0.0
  %1275 = vmatpush1.msra.mxu0 %v426
  %1276 = vmatprep.subr.mxu0 0.0
  %1277 = vmatpush1.msra.mxu0 %v427
  %1278 = vmatprep.subr.mxu0 0.0
  %1279 = vmatpush1.msra.mxu0 %v428
  %1280 = vmatprep.subr.mxu0 0.0
  %1281 = vmatpush1.msra.mxu0 %v429
  %1282 = vmatprep.subr.mxu0 0.0
  %1283 = vmatpush1.msra.mxu0 %v430
  %1284 = vmatprep.subr.mxu0 0.0
  %1285 = vmatpush1.msra.mxu0 %v431
  %1286 = vmatprep.subr.mxu0 0.0
  %1287 = vmatpush1.msra.mxu0 %v432
  %1288 = vmatprep.subr.mxu0 0.0
  %1289 = vmatpush1.msra.mxu0 %v433
  %1290 = vmatprep.subr.mxu0 0.0
  %1291 = vmatpush1.msra.mxu0 %v434
  %1292 = vmatprep.mubr.f32.mxu0 %v49
  %1293 = vmatmul.mubr.f32.gmra.mrb[0].mxu0 %v48
  %v1294 = vpop.f32.mrb[0].mxu0
  %v1295 = vadd.f32 %v1225, %v1294
  %v1296 = vpop.f32.mrb[0].mxu0
  %1297 = vdwg.mxu0
  %1298 = vmatprep.subr.mxu0 0.0
  %1299 = vmatpush1.msra.mxu0 %v435
  %1300 = vmatprep.subr.mxu0 0.0
  %1301 = vmatpush1.msra.mxu0 %v436
  %1302 = vmatprep.subr.mxu0 0.0
  %1303 = vmatpush1.msra.mxu0 %v437
  %1304 = vmatprep.subr.mxu0 0.0
  %1305 = vmatpush1.msra.mxu0 %v438
  %1306 = vmatprep.subr.mxu0 0.0
  %1307 = vmatpush1.msra.mxu0 %v439
  %1308 = vmatprep.subr.mxu0 0.0
  %1309 = vmatpush1.msra.mxu0 %v440
  %1310 = vmatprep.subr.mxu0 0.0
  %1311 = vmatpush1.msra.mxu0 %v441
  %1312 = vmatprep.subr.mxu0 0.0
  %1313 = vmatpush1.msra.mxu0 %v442
  %1314 = vmatprep.subr.mxu0 0.0
  %1315 = vmatpush1.msra.mxu0 %v443
  %1316 = vmatprep.subr.mxu0 0.0
  %1317 = vmatpush1.msra.mxu0 %v444
  %1318 = vmatprep.subr.mxu0 0.0
  %1319 = vmatpush1.msra.mxu0 %v445
  %1320 = vmatprep.subr.mxu0 0.0
  %1321 = vmatpush1.msra.mxu0 %v446
  %1322 = vmatprep.subr.mxu0 0.0
  %1323 = vmatpush1.msra.mxu0 %v447
  %1324 = vmatprep.subr.mxu0 0.0
  %1325 = vmatpush1.msra.mxu0 %v448
  %1326 = vmatprep.subr.mxu0 0.0
  %1327 = vmatpush1.msra.mxu0 %v449
  %1328 = vmatprep.subr.mxu0 0.0
  %1329 = vmatpush1.msra.mxu0 %v450
  %1330 = vmatprep.subr.mxu0 0.0
  %1331 = vmatpush1.msra.mxu0 0.0
  %1332 = vmatprep.subr.mxu0 0.0
  %1333 = vmatpush1.msra.mxu0 0.0
  %1334 = vmatprep.subr.mxu0 0.0
  %1335 = vmatpush1.msra.mxu0 0.0
  %1336 = vmatprep.subr.mxu0 0.0
  %1337 = vmatpush1.msra.mxu0 0.0
  %1338 = vmatprep.subr.mxu0 0.0
  %1339 = vmatpush1.msra.mxu0 0.0
  %1340 = vmatprep.subr.mxu0 0.0
  %1341 = vmatpush1.msra.mxu0 0.0
  %1342 = vmatprep.subr.mxu0 0.0
  %1343 = vmatpush1.msra.mxu0 0.0
  %1344 = vmatprep.subr.mxu0 0.0
  %1345 = vmatpush1.msra.mxu0 0.0
  %1346 = vmatprep.subr.mxu0 0.0
  %1347 = vmatpush1.msra.mxu0 0.0
  %1348 = vmatprep.subr.mxu0 0.0
  %1349 = vmatpush1.msra.mxu0 0.0
  %1350 = vmatprep.subr.mxu0 0.0
  %1351 = vmatpush1.msra.mxu0 0.0
  %1352 = vmatprep.subr.mxu0 0.0
  %1353 = vmatpush1.msra.mxu0 0.0
  %1354 = vmatprep.subr.mxu0 0.0
  %1355 = vmatpush1.msra.mxu0 0.0
  %1356 = vmatprep.subr.mxu0 0.0
  %1357 = vmatpush1.msra.mxu0 0.0
  %1358 = vmatprep.subr.mxu0 0.0
  %1359 = vmatpush1.msra.mxu0 0.0
  %1360 = vmatprep.subr.mxu0 0.0
  %1361 = vmatpush1.msra.mxu0 0.0
  %1362 = vmatprep.mubr.f32.mxu0 0.0
  %1363 = vmatmul.mubr.f32.gmra.mrb[0].mxu0 %v50
  %v1364 = vpop.f32.mrb[0].mxu0
  %v1365 = vadd.f32 %v1295, %v1364
  %v1366 = vpop.f32.mrb[0].mxu0
  %1367 = vdwg.mxu0
  %v1368 = vmax.f32 %v1365, 0.0
  %v1369 = vld [vmem:[%s3] sm:$0xff]
  %v1370 = vld [vmem:[%s3 + $0x8] sm:$0xff]
  %v1371 = vld [vmem:[%s3 + $0x10] sm:$0xff]
  %v1372 = vld [vmem:[%s3 + $0x18] sm:$0xff]
  %v1373 = vld [vmem:[%s3 + $0x20] sm:$0xff]
  %v1374 = vld [vmem:[%s3 + $0x28] sm:$0xff]
  %v1375 = vld [vmem:[%s3 + $0x30] sm:$0xff]
  %v1376 = vld [vmem:[%s3 + $0x38] sm:$0xff]
  %v1377 = vld [vmem:[%s3 + $0x40] sm:$0xff]
  %v1378 = vld [vmem:[%s3 + $0x48] sm:$0xff]
  %v1379 = vld [vmem:[%s3 + $0x50] sm:$0xff]
  %v1380 = vld [vmem:[%s3 + $0x58] sm:$0xff]
  %v1381 = vld [vmem:[%s3 + $0x60] sm:$0xff]
  %v1382 = vld [vmem:[%s3 + $0x68] sm:$0xff]
  %v1383 = vld [vmem:[%s3 + $0x70] sm:$0xff]
  %v1384 = vld [vmem:[%s3 + $0x78] sm:$0xff]
  %v1385 = vld [vmem:[%s4] sm:$0x1]
  %v1387 = vlaneseq
  %v1388 = vshrl.u32 %v1387, 7
  %v1389 = vsub.s32 0, %v1388
  %v1390 = vrot.slane %v1385, %v1389
  %1392 = vmatprep.subr.mxu0 0.0
  %1393 = vmatpush1.msra.mxu0 %v1369
  %1394 = vmatprep.subr.mxu0 0.0
  %1395 = vmatpush1.msra.mxu0 %v1370
  %1396 = vmatprep.subr.mxu0 0.0
  %1397 = vmatpush1.msra.mxu0 %v1371
  %1398 = vmatprep.subr.mxu0 0.0
  %1399 = vmatpush1.msra.mxu0 %v1372
  %1400 = vmatprep.subr.mxu0 0.0
  %1401 = vmatpush1.msra.mxu0 %v1373
  %1402 = vmatprep.subr.mxu0 0.0
  %1403 = vmatpush1.msra.mxu0 %v1374
  %1404 = vmatprep.subr.mxu0 0.0
  %1405 = vmatpush1.msra.mxu0 %v1375
  %1406 = vmatprep.subr.mxu0 0.0
  %1407 = vmatpush1.msra.mxu0 %v1376
  %1408 = vmatprep.subr.mxu0 0.0
  %1409 = vmatpush1.msra.mxu0 %v1377
  %1410 = vmatprep.subr.mxu0 0.0
  %1411 = vmatpush1.msra.mxu0 %v1378
  %1412 = vmatprep.subr.mxu0 0.0
  %1413 = vmatpush1.msra.mxu0 %v1379
  %1414 = vmatprep.subr.mxu0 0.0
  %1415 = vmatpush1.msra.mxu0 %v1380
  %1416 = vmatprep.subr.mxu0 0.0
  %1417 = vmatpush1.msra.mxu0 %v1381
  %1418 = vmatprep.subr.mxu0 0.0
  %1419 = vmatpush1.msra.mxu0 %v1382
  %1420 = vmatprep.subr.mxu0 0.0
  %1421 = vmatpush1.msra.mxu0 %v1383
  %1422 = vmatprep.subr.mxu0 0.0
  %1423 = vmatpush1.msra.mxu0 %v1384
  %1424 = vmatprep.subr.mxu0 0.0
  %1425 = vmatpush1.msra.mxu0 0.0
  %1426 = vmatprep.subr.mxu0 0.0
  %1427 = vmatpush1.msra.mxu0 0.0
  %1428 = vmatprep.subr.mxu0 0.0
  %1429 = vmatpush1.msra.mxu0 0.0
  %1430 = vmatprep.subr.mxu0 0.0
  %1431 = vmatpush1.msra.mxu0 0.0
  %1432 = vmatprep.subr.mxu0 0.0
  %1433 = vmatpush1.msra.mxu0 0.0
  %1434 = vmatprep.subr.mxu0 0.0
  %1435 = vmatpush1.msra.mxu0 0.0
  %1436 = vmatprep.subr.mxu0 0.0
  %1437 = vmatpush1.msra.mxu0 0.0
  %1438 = vmatprep.subr.mxu0 0.0
  %1439 = vmatpush1.msra.mxu0 0.0
  %1440 = vmatprep.subr.mxu0 0.0
  %1441 = vmatpush1.msra.mxu0 0.0
  %1442 = vmatprep.subr.mxu0 0.0
  %1443 = vmatpush1.msra.mxu0 0.0
  %1444 = vmatprep.subr.mxu0 0.0
  %1445 = vmatpush1.msra.mxu0 0.0
  %1446 = vmatprep.subr.mxu0 0.0
  %1447 = vmatpush1.msra.mxu0 0.0
  %1448 = vmatprep.subr.mxu0 0.0
  %1449 = vmatpush1.msra.mxu0 0.0
  %1450 = vmatprep.subr.mxu0 0.0
  %1451 = vmatpush1.msra.mxu0 0.0
  %1452 = vmatprep.subr.mxu0 0.0
  %1453 = vmatpush1.msra.mxu0 0.0
  %1454 = vmatprep.subr.mxu0 0.0
  %1455 = vmatpush1.msra.mxu0 0.0
  %1456 = vmatprep.mubr.f32.mxu0 0.0
  %1457 = vmatmul.mubr.f32.gmra.mrb[0].mxu0 %v1368
  %v1458 = vpop.f32.mrb[0].mxu0
  %v1459 = vadd.f32 %v1390, %v1458
  %v1460 = vpop.f32.mrb[0].mxu0
  %1461 = vdwg.mxu0
  %v1462 = vmax.f32 %v1459, 0.0
  %v1463 = vld [vmem:[%s5] sm:$0xff]
  %v1464 = vld [vmem:[%s5 + $0x8] sm:$0xff]
  %v1465 = vld [vmem:[%s5 + $0x10] sm:$0xff]
  %v1466 = vld [vmem:[%s5 + $0x18] sm:$0xff]
  %v1467 = vld [vmem:[%s5 + $0x20] sm:$0xff]
  %v1468 = vld [vmem:[%s5 + $0x28] sm:$0xff]
  %v1469 = vld [vmem:[%s5 + $0x30] sm:$0xff]
  %v1470 = vld [vmem:[%s5 + $0x38] sm:$0xff]
  %v1471 = vld [vmem:[%s5 + $0x40] sm:$0xff]
  %v1472 = vld [vmem:[%s5 + $0x48] sm:$0xff]
  %v1473 = vld [vmem:[%s5 + $0x50] sm:$0xff]
  %v1474 = vld [vmem:[%s5 + $0x58] sm:$0xff]
  %v1475 = vld [vmem:[%s5 + $0x60] sm:$0xff]
  %v1476 = vld [vmem:[%s5 + $0x68] sm:$0xff]
  %v1477 = vld [vmem:[%s5 + $0x70] sm:$0xff]
  %v1478 = vld [vmem:[%s5 + $0x78] sm:$0xff]
  %v1479 = vld [vmem:[%s6] sm:$0x1]
  %v1481 = vlaneseq
  %v1482 = vshrl.u32 %v1481, 7
  %v1483 = vsub.s32 0, %v1482
  %v1484 = vrot.slane %v1479, %v1483
  %1486 = vmatprep.subr.mxu0 0.0
  %1487 = vmatpush1.msra.mxu0 %v1463
  %1488 = vmatprep.subr.mxu0 0.0
  %1489 = vmatpush1.msra.mxu0 %v1464
  %1490 = vmatprep.subr.mxu0 0.0
  %1491 = vmatpush1.msra.mxu0 %v1465
  %1492 = vmatprep.subr.mxu0 0.0
  %1493 = vmatpush1.msra.mxu0 %v1466
  %1494 = vmatprep.subr.mxu0 0.0
  %1495 = vmatpush1.msra.mxu0 %v1467
  %1496 = vmatprep.subr.mxu0 0.0
  %1497 = vmatpush1.msra.mxu0 %v1468
  %1498 = vmatprep.subr.mxu0 0.0
  %1499 = vmatpush1.msra.mxu0 %v1469
  %1500 = vmatprep.subr.mxu0 0.0
  %1501 = vmatpush1.msra.mxu0 %v1470
  %1502 = vmatprep.subr.mxu0 0.0
  %1503 = vmatpush1.msra.mxu0 %v1471
  %1504 = vmatprep.subr.mxu0 0.0
  %1505 = vmatpush1.msra.mxu0 %v1472
  %1506 = vmatprep.subr.mxu0 0.0
  %1507 = vmatpush1.msra.mxu0 %v1473
  %1508 = vmatprep.subr.mxu0 0.0
  %1509 = vmatpush1.msra.mxu0 %v1474
  %1510 = vmatprep.subr.mxu0 0.0
  %1511 = vmatpush1.msra.mxu0 %v1475
  %1512 = vmatprep.subr.mxu0 0.0
  %1513 = vmatpush1.msra.mxu0 %v1476
  %1514 = vmatprep.subr.mxu0 0.0
  %1515 = vmatpush1.msra.mxu0 %v1477
  %1516 = vmatprep.subr.mxu0 0.0
  %1517 = vmatpush1.msra.mxu0 %v1478
  %1518 = vmatprep.subr.mxu0 0.0
  %1519 = vmatpush1.msra.mxu0 0.0
  %1520 = vmatprep.subr.mxu0 0.0
  %1521 = vmatpush1.msra.mxu0 0.0
  %1522 = vmatprep.subr.mxu0 0.0
  %1523 = vmatpush1.msra.mxu0 0.0
  %1524 = vmatprep.subr.mxu0 0.0
  %1525 = vmatpush1.msra.mxu0 0.0
  %1526 = vmatprep.subr.mxu0 0.0
  %1527 = vmatpush1.msra.mxu0 0.0
  %1528 = vmatprep.subr.mxu0 0.0
  %1529 = vmatpush1.msra.mxu0 0.0
  %1530 = vmatprep.subr.mxu0 0.0
  %1531 = vmatpush1.msra.mxu0 0.0
  %1532 = vmatprep.subr.mxu0 0.0
  %1533 = vmatpush1.msra.mxu0 0.0
  %1534 = vmatprep.subr.mxu0 0.0
  %1535 = vmatpush1.msra.mxu0 0.0
  %1536 = vmatprep.subr.mxu0 0.0
  %1537 = vmatpush1.msra.mxu0 0.0
  %1538 = vmatprep.subr.mxu0 0.0
  %1539 = vmatpush1.msra.mxu0 0.0
  %1540 = vmatprep.subr.mxu0 0.0
  %1541 = vmatpush1.msra.mxu0 0.0
  %1542 = vmatprep.subr.mxu0 0.0
  %1543 = vmatpush1.msra.mxu0 0.0
  %1544 = vmatprep.subr.mxu0 0.0
  %1545 = vmatpush1.msra.mxu0 0.0
  %1546 = vmatprep.subr.mxu0 0.0
  %1547 = vmatpush1.msra.mxu0 0.0
  %1548 = vmatprep.subr.mxu0 0.0
  %1549 = vmatpush1.msra.mxu0 0.0
  %1550 = vmatprep.mubr.f32.mxu0 0.0
  %1551 = vmatmul.mubr.f32.gmra.mrb[0].mxu0 %v1462
  %v1552 = vpop.f32.mrb[0].mxu0
  %v1553 = vadd.f32 %v1484, %v1552
  %v1554 = vpop.f32.mrb[0].mxu0
  %1555 = vdwg.mxu0
  %1556 = vst [vmem:[%s7] sm:$0xff] %v1553
  // Predicated region
  $region30: #{net_forward.5} parent=0 // pred_check
    _
  $region31: #{net_forward.5} parent=0 // pred_check_branch
    %1558 = sbr.rel (0) target = $region33
  $region32: #{net_forward.5} parent=0 // pred_region
    _
  $region33: #{net_forward.5} parent=0 // pred_fallthru
    _
  // Predicated region
  $region34: #{net_forward.5} parent=0 // pred_check
    _
  $region35: #{net_forward.5} parent=0 // pred_check_branch
    %1560 = sbr.rel (0) target = $region37
  $region36: #{net_forward.5} parent=0 // pred_region
    _
  $region37: #{net_forward.5} parent=0 // pred_fallthru
    _

</llo_original>
